<compile_context>
chip_gen: v6e
topology: v6e:2x2x1
jax: 0.10.0
libtpu: 0.0.40
codegen_flags: <defaults>
</compile_context>

<pallas_src>
import functools
import math

import jax
import jax.numpy as jnp
from jax.experimental import pallas as pl
from jax.experimental.pallas import tpu as pltpu


def _ecod_score_kernel(wl_ref, wr_ref, xi_ref, xk_ref, score_ref,
                       le_acc, ge_acc, *, d, tile_i, tile_k, log_n):
    """One (i-tile, k-tile) step of the pairwise ECDF tail-score computation.

    xi_ref: (D, TILE_I) f32 -- samples being scored (samples on lanes).
    xk_ref: (D, TILE_K) f32 -- samples being compared against (on lanes).
    le_acc/ge_acc: (D*TILE_I, 128) f32 scratch -- per-(feature, sample) counts,
        redundant across the 128 lanes (MXU all-ones reduction output).
    score_ref: (1, TILE_I) f32 -- lane-dense per-sample ECOD score.
    """
    k = pl.program_id(1)

    @pl.when(k == 0)
    def _init():
        le_acc[...] = jnp.zeros_like(le_acc)
        ge_acc[...] = jnp.zeros_like(ge_acc)

    xi = xi_ref[...]                                   # (D, TI)
    xk = xk_ref[...]                                   # (D, TK)
    a = xk[:, None, :]                                 # (D, 1,  TK) sublane bcast
    b = xi[:, :, None]                                 # (D, TI, 1)  lane bcast
    # NaN-padded k samples compare False on both sides -> contribute 0 counts.
    # bf16 is exact for {0,1}; MXU is bf16-native; accumulate in f32 (exact
    # integer counts for N < 2^24).  Reshape (D,TI,TK)->(D*TI,TK) is layout-free
    # because TI is a multiple of the sublane packing.
    c_le = (a <= b).astype(jnp.bfloat16).reshape(d * tile_i, tile_k)
    c_ge = (a >= b).astype(jnp.bfloat16).reshape(d * tile_i, tile_k)
    ones = jnp.ones((tile_k, 128), jnp.bfloat16)
    le_acc[...] += jnp.dot(c_le, ones, preferred_element_type=jnp.float32)
    ge_acc[...] += jnp.dot(c_ge, ones, preferred_element_type=jnp.float32)

    @pl.when(k == pl.num_programs(1) - 1)
    def _finalize():
        # Accumulator lanes are redundant (every column of the all-ones matmul
        # holds the same count).  Transpose each (TI, 128) feature slice on the
        # XLU and keep a single sublane so the EUP logs and the skew/max math
        # run on D*TI elements instead of D*TI*128, already lane-dense in i.
        le = le_acc[...].reshape(d, tile_i, 128)
        ge = ge_acc[...].reshape(d, tile_i, 128)
        le_t = jnp.transpose(le, (0, 2, 1))[:, 0:1, :]   # (D, 1, TI)
        ge_t = jnp.transpose(ge, (0, 2, 1))[:, 0:1, :]
        u_l = log_n - jnp.log(le_t)                      # == -log(ECDF(x))
        u_r = log_n - jnp.log(ge_t)                      # == -log(ECDF(-x))
        wl = wl_ref[...].reshape(d, 1, 128)              # per-feature, lane-replicated
        wr = wr_ref[...].reshape(d, 1, 128)
        u_s = wl * u_l + wr * u_r                        # pyod ECOD skew selection
        o = jnp.maximum(jnp.maximum(u_l, u_r), u_s)      # (D, 1, TI)
        score_ref[...] = jnp.sum(o, axis=0)              # (1, TI) lane-dense store


def outlier_detector_forward(x):
    """x: (N, D) float32 tabular batch.  Returns (mask (N,) int32, score (N,) float32)."""
    x = jnp.asarray(x, jnp.float32)
    n, d = x.shape

    tile_i = 128
    n_pad_i = pl.cdiv(n, tile_i) * tile_i
    # Comparison-axis tiling is decoupled from the i-axis padding: pick a big
    # k-chunk (multiple of 128) and pad the comparison copy up to it.  NaN
    # padding contributes exactly zero counts, so extra k columns are harmless.
    tile_k = min(512, n_pad_i)
    n_pad_k = pl.cdiv(n, tile_k) * tile_k

    xt = x.T                                               # (d, n), samples on lanes
    xi = jnp.pad(xt, ((0, 0), (0, n_pad_i - n)), constant_values=jnp.nan)
    xk = jnp.pad(xt, ((0, 0), (0, n_pad_k - n)), constant_values=jnp.nan)

    # Per-feature skewness-sign weights (pyod ECOD): one-pass O(N*D) statistic,
    # computed once here instead of per k-chunk inside the O(N^2*D) kernel.
    mu = jnp.mean(x, axis=0)
    dlt = x - mu
    m2 = jnp.mean(dlt * dlt, axis=0)
    m3 = jnp.mean(dlt * dlt * dlt, axis=0)
    sgn = jnp.sign(m3 / (m2 * jnp.sqrt(m2) + 1e-30))
    w_l = -jnp.sign(sgn - 1.0)
    w_r = jnp.sign(sgn + 1.0)
    wl_b = jnp.broadcast_to(w_l[:, None], (d, 128)).astype(jnp.float32)
    wr_b = jnp.broadcast_to(w_r[:, None], (d, 128)).astype(jnp.float32)

    kernel = functools.partial(
        _ecod_score_kernel,
        d=d, tile_i=tile_i, tile_k=tile_k, log_n=float(math.log(n)))

    grid = (n_pad_i // tile_i, n_pad_k // tile_k)
    score_pad = pl.pallas_call(
        kernel,
        grid=grid,
        in_specs=[
            pl.BlockSpec((d, 128), lambda i, k: (0, 0)),        # w_l (per feature)
            pl.BlockSpec((d, 128), lambda i, k: (0, 0)),        # w_r (per feature)
            pl.BlockSpec((d, tile_i), lambda i, k: (0, i)),     # samples to score
            pl.BlockSpec((d, tile_k), lambda i, k: (0, k)),     # comparison chunk
        ],
        out_specs=pl.BlockSpec((1, tile_i), lambda i, k: (0, i)),
        out_shape=jax.ShapeDtypeStruct((1, n_pad_i), jnp.float32),
        scratch_shapes=[
            pltpu.VMEM((d * tile_i, 128), jnp.float32),         # le counts
            pltpu.VMEM((d * tile_i, 128), jnp.float32),         # ge counts
        ],
        compiler_params=pltpu.CompilerParams(
            dimension_semantics=("parallel", "arbitrary"),
            vmem_limit_bytes=32 * 1024 * 1024,   # few-MiB live; fits v5e/v6e/v7x
        ),
    )(wl_b, wr_b, xi, xk)

    score = score_pad[0, :n]
    # mean + 2*std threshold / mask: tiny O(N) epilogue in plain JAX.
    m = jnp.mean(score)
    s = jnp.sqrt(jnp.mean((score - m) ** 2))
    mask = (score > m + 2.0 * s).astype(jnp.int32)
    return mask, score


def _reference(x):
    """Plain-JAX reference for the ECOD-score / mask path (same math)."""
    x = jnp.asarray(x, jnp.float32)
    n = jnp.float32(x.shape[0])
    le = jnp.sum((x[None, :, :] <= x[:, None, :]).astype(jnp.float32), axis=1)
    ge = jnp.sum((x[None, :, :] >= x[:, None, :]).astype(jnp.float32), axis=1)
    u_l = -jnp.log(le / n)
    u_r = -jnp.log(ge / n)
    mu = jnp.mean(x, axis=0, keepdims=True)
    dlt = x - mu
    m2 = jnp.mean(dlt * dlt, axis=0, keepdims=True)
    m3 = jnp.mean(dlt * dlt * dlt, axis=0, keepdims=True)
    sgn = jnp.sign(m3 / (m2 * jnp.sqrt(m2) + 1e-30))
    u_skew = u_l * (-1.0) * jnp.sign(sgn - 1.0) + u_r * jnp.sign(sgn + 1.0)
    o = jnp.maximum(jnp.maximum(u_l, u_r), u_skew)
    score = jnp.sum(o, axis=1)
    t = jnp.mean(score) + 2.0 * jnp.sqrt(jnp.mean((score - jnp.mean(score)) ** 2))
    return jnp.where(score > t, 1, 0).astype(jnp.int32), score


if __name__ == "__main__":
    key = jax.random.PRNGKey(0)
    fwd = jax.jit(outlier_detector_forward)

    # (64, 8): single-tile path with sample padding (1 i-tile, 1 k-tile).
    # (600, 5): multi i-tile + multi k-tile accumulation, unpadded feature dim.
    for (N, D) in [(64, 8), (600, 5)]:
        X = jax.random.normal(key, (N, D), dtype=jnp.float32)
        mask, score = fwd(X)
        jax.block_until_ready((mask, score))

        ref_mask, ref_score = _reference(X)
        assert mask.shape == (N,) and score.shape == (N,)
        assert jnp.allclose(score, ref_score, rtol=1e-4, atol=1e-4), "score mismatch"
        assert jnp.array_equal(mask, ref_mask), "mask mismatch"

    print("KERNEL_OK")
</pallas_src>

<mosaic_0001>
module attributes {stable_mosaic.version = 11 : i64} {
  func.func @_ecod_score_kernel(%arg0: i32, %arg1: i32, %arg2: memref<8x128xf32, #tpu.memory_space<vmem>>, %arg3: memref<8x128xf32, #tpu.memory_space<vmem>>, %arg4: memref<8x128xf32, #tpu.memory_space<vmem>>, %arg5: memref<8x128xf32, #tpu.memory_space<vmem>>, %arg6: memref<1x128xf32, #tpu.memory_space<vmem>>, %arg7: memref<1024x128xf32, #tpu.memory_space<vmem>>, %arg8: memref<1024x128xf32, #tpu.memory_space<vmem>>) attributes {dimension_semantics = [#tpu.dimension_semantics<parallel>, #tpu.dimension_semantics<arbitrary>], iteration_bounds = array<i64: 1, 1>, scalar_prefetch = 0 : i64, scratch_operands = 2 : i64, tpu.core_type = #tpu.core_type<tc>, window_params = [{pipeline_mode = #tpu.pipeline_mode<synchronous>, transform_indices = @transform_0, window_bounds = array<i64: 8, 128>}, {pipeline_mode = #tpu.pipeline_mode<synchronous>, transform_indices = @transform_1, window_bounds = array<i64: 8, 128>}, {transform_indices = @transform_2, window_bounds = array<i64: 8, 128>}, {transform_indices = @transform_3, window_bounds = array<i64: 8, 128>}, {transform_indices = @transform_4, window_bounds = array<i64: 1, 128>}]} {
    %c0_i32 = arith.constant 0 : i32
    %0 = arith.cmpi eq, %arg1, %c0_i32 : i32
    %1 = arith.extui %0 : i1 to i32
    %c0_i32_0 = arith.constant 0 : i32
    %2 = arith.cmpi ne, %1, %c0_i32_0 : i32
    scf.if %2 {
      %cst_16 = arith.constant 0.000000e+00 : f32
      %33 = vector.broadcast %cst_16 : f32 to vector<1024x128xf32>
      %c0_17 = arith.constant 0 : index
      %c0_18 = arith.constant 0 : index
      %34 = vector.load %arg7[%c0_17, %c0_18] : memref<1024x128xf32, #tpu.memory_space<vmem>>, vector<1024x128xf32>
      tpu.vector_store %arg7[%c0_17, %c0_18], %33 {strides = array<i32>} : memref<1024x128xf32, #tpu.memory_space<vmem>>, vector<1024x128xf32>,
      %cst_19 = arith.constant 0.000000e+00 : f32
      %35 = vector.broadcast %cst_19 : f32 to vector<1024x128xf32>
      %c0_20 = arith.constant 0 : index
      %c0_21 = arith.constant 0 : index
      %36 = vector.load %arg8[%c0_20, %c0_21] : memref<1024x128xf32, #tpu.memory_space<vmem>>, vector<1024x128xf32>
      tpu.vector_store %arg8[%c0_20, %c0_21], %35 {strides = array<i32>} : memref<1024x128xf32, #tpu.memory_space<vmem>>, vector<1024x128xf32>,
    } else {
    }
    %c0 = arith.constant 0 : index
    %c0_1 = arith.constant 0 : index
    %3 = vector.load %arg4[%c0, %c0_1] : memref<8x128xf32, #tpu.memory_space<vmem>>, vector<8x128xf32>
    %c0_2 = arith.constant 0 : index
    %c0_3 = arith.constant 0 : index
    %4 = vector.load %arg5[%c0_2, %c0_3] : memref<8x128xf32, #tpu.memory_space<vmem>>, vector<8x128xf32>
    %5 = vector.shape_cast %4 : vector<8x128xf32> to vector<8x1x128xf32>
    %6 = vector.shape_cast %3 : vector<8x128xf32> to vector<8x128x1xf32>
    %7 = vector.broadcast %5 : vector<8x1x128xf32> to vector<8x128x128xf32>
    %8 = vector.broadcast %6 : vector<8x128x1xf32> to vector<8x128x128xf32>
    %9 = arith.cmpf ole, %7, %8 : vector<8x128x128xf32>
    %10 = arith.extui %9 : vector<8x128x128xi1> to vector<8x128x128xi32>
    %11 = arith.sitofp %10 : vector<8x128x128xi32> to vector<8x128x128xf32>
    %12 = arith.truncf %11 : vector<8x128x128xf32> to vector<8x128x128xbf16>
    %13 = vector.shape_cast %12 : vector<8x128x128xbf16> to vector<1024x128xbf16>
    %14 = vector.broadcast %5 : vector<8x1x128xf32> to vector<8x128x128xf32>
    %15 = vector.broadcast %6 : vector<8x128x1xf32> to vector<8x128x128xf32>
    %16 = arith.cmpf oge, %14, %15 : vector<8x128x128xf32>
    %17 = arith.extui %16 : vector<8x128x128xi1> to vector<8x128x128xi32>
    %18 = arith.sitofp %17 : vector<8x128x128xi32> to vector<8x128x128xf32>
    %19 = arith.truncf %18 : vector<8x128x128xf32> to vector<8x128x128xbf16>
    %20 = vector.shape_cast %19 : vector<8x128x128xbf16> to vector<1024x128xbf16>
    %cst = arith.constant 1.000000e+00 : bf16
    %21 = vector.broadcast %cst : bf16 to vector<128x128xbf16>
    %c0_4 = arith.constant 0 : index
    %c0_5 = arith.constant 0 : index
    %22 = vector.load %arg7[%c0_4, %c0_5] : memref<1024x128xf32, #tpu.memory_space<vmem>>, vector<1024x128xf32>
    %cst_6 = arith.constant dense<0.000000e+00> : vector<1024x128xf32>
    %23 = tpu.matmul %13, %21, %cst_6 {dimension_numbers = #tpu.dot_dimension_numbers<[1], [0], [0], [1], [0, 0, 1, 1], [], []>} : vector<1024x128xbf16>, vector<128x128xbf16>, vector<1024x128xf32> -> vector<1024x128xf32>
    %24 = arith.addf %22, %23 : vector<1024x128xf32>
    %c0_7 = arith.constant 0 : index
    %c0_8 = arith.constant 0 : index
    %25 = vector.load %arg7[%c0_7, %c0_8] : memref<1024x128xf32, #tpu.memory_space<vmem>>, vector<1024x128xf32>
    tpu.vector_store %arg7[%c0_7, %c0_8], %24 {strides = array<i32>} : memref<1024x128xf32, #tpu.memory_space<vmem>>, vector<1024x128xf32>,
    %c0_9 = arith.constant 0 : index
    %c0_10 = arith.constant 0 : index
    %26 = vector.load %arg8[%c0_9, %c0_10] : memref<1024x128xf32, #tpu.memory_space<vmem>>, vector<1024x128xf32>
    %cst_11 = arith.constant dense<0.000000e+00> : vector<1024x128xf32>
    %27 = tpu.matmul %20, %21, %cst_11 {dimension_numbers = #tpu.dot_dimension_numbers<[1], [0], [0], [1], [0, 0, 1, 1], [], []>} : vector<1024x128xbf16>, vector<128x128xbf16>, vector<1024x128xf32> -> vector<1024x128xf32>
    %28 = arith.addf %26, %27 : vector<1024x128xf32>
    %c0_12 = arith.constant 0 : index
    %c0_13 = arith.constant 0 : index
    %29 = vector.load %arg8[%c0_12, %c0_13] : memref<1024x128xf32, #tpu.memory_space<vmem>>, vector<1024x128xf32>
    tpu.vector_store %arg8[%c0_12, %c0_13], %28 {strides = array<i32>} : memref<1024x128xf32, #tpu.memory_space<vmem>>, vector<1024x128xf32>,
    %c0_i32_14 = arith.constant 0 : i32
    %30 = arith.cmpi eq, %arg1, %c0_i32_14 : i32
    %31 = arith.extui %30 : i1 to i32
    %c0_i32_15 = arith.constant 0 : i32
    %32 = arith.cmpi ne, %31, %c0_i32_15 : i32
    scf.if %32 {
      %c0_16 = arith.constant 0 : index
      %c0_17 = arith.constant 0 : index
      %33 = vector.load %arg7[%c0_16, %c0_17] : memref<1024x128xf32, #tpu.memory_space<vmem>>, vector<1024x128xf32>
      %34 = vector.shape_cast %33 : vector<1024x128xf32> to vector<8x128x128xf32>
      %c0_18 = arith.constant 0 : index
      %c0_19 = arith.constant 0 : index
      %35 = vector.load %arg8[%c0_18, %c0_19] : memref<1024x128xf32, #tpu.memory_space<vmem>>, vector<1024x128xf32>
      %36 = vector.shape_cast %35 : vector<1024x128xf32> to vector<8x128x128xf32>
      %37 = tpu.transpose %34, [0, 2, 1] : vector<8x128x128xf32> -> vector<8x128x128xf32>
      %38 = vector.extract_strided_slice %37 {offsets = [0, 0, 0], sizes = [8, 1, 128], strides = [1, 1, 1]} : vector<8x128x128xf32> to vector<8x1x128xf32>
      %39 = tpu.transpose %36, [0, 2, 1] : vector<8x128x128xf32> -> vector<8x128x128xf32>
      %40 = vector.extract_strided_slice %39 {offsets = [0, 0, 0], sizes = [8, 1, 128], strides = [1, 1, 1]} : vector<8x128x128xf32> to vector<8x1x128xf32>
      %41 = math.log %38 : vector<8x1x128xf32>
      %cst_20 = arith.constant 4.15888309 : f32
      %42 = vector.broadcast %cst_20 : f32 to vector<8x1x128xf32>
      %43 = arith.subf %42, %41 : vector<8x1x128xf32>
      %44 = math.log %40 : vector<8x1x128xf32>
      %cst_21 = arith.constant 4.15888309 : f32
      %45 = vector.broadcast %cst_21 : f32 to vector<8x1x128xf32>
      %46 = arith.subf %45, %44 : vector<8x1x128xf32>
      %c0_22 = arith.constant 0 : index
      %c0_23 = arith.constant 0 : index
      %47 = vector.load %arg2[%c0_22, %c0_23] : memref<8x128xf32, #tpu.memory_space<vmem>>, vector<8x128xf32>
      %48 = vector.shape_cast %47 : vector<8x128xf32> to vector<8x1x128xf32>
      %c0_24 = arith.constant 0 : index
      %c0_25 = arith.constant 0 : index
      %49 = vector.load %arg3[%c0_24, %c0_25] : memref<8x128xf32, #tpu.memory_space<vmem>>, vector<8x128xf32>
      %50 = vector.shape_cast %49 : vector<8x128xf32> to vector<8x1x128xf32>
      %51 = arith.mulf %48, %43 : vector<8x1x128xf32>
      %52 = arith.mulf %50, %46 : vector<8x1x128xf32>
      %53 = arith.addf %51, %52 : vector<8x1x128xf32>
      %54 = arith.maximumf %43, %46 : vector<8x1x128xf32>
      %55 = arith.maximumf %54, %53 : vector<8x1x128xf32>
      %cst_26 = arith.constant dense<0.000000e+00> : vector<1x128xf32>
      %56 = vector.multi_reduction <add>, %55, %cst_26 [0] : vector<8x1x128xf32> to vector<1x128xf32>
      %c0_27 = arith.constant 0 : index
      %c0_28 = arith.constant 0 : index
      %57 = vector.load %arg6[%c0_27, %c0_28] : memref<1x128xf32, #tpu.memory_space<vmem>>, vector<1x128xf32>
      tpu.vector_store %arg6[%c0_27, %c0_28], %56 {strides = array<i32>} : memref<1x128xf32, #tpu.memory_space<vmem>>, vector<1x128xf32>,
    } else {
    }
    return
  }
  func.func @transform_0(%arg0: i32, %arg1: i32) -> (i32, i32) {
    %c0_i32 = arith.constant 0 : i32
    %c0_i32_0 = arith.constant 0 : i32
    %c0_i32_1 = arith.constant 0 : i32
    return %c0_i32, %c0_i32_0 : i32, i32
  }
  func.func @transform_1(%arg0: i32, %arg1: i32) -> (i32, i32) {
    %c0_i32 = arith.constant 0 : i32
    %c0_i32_0 = arith.constant 0 : i32
    %c0_i32_1 = arith.constant 0 : i32
    return %c0_i32, %c0_i32_0 : i32, i32
  }
  func.func @transform_2(%arg0: i32, %arg1: i32) -> (i32, i32) {
    %c0_i32 = arith.constant 0 : i32
    %c0_i32_0 = arith.constant 0 : i32
    return %c0_i32, %arg0 : i32, i32
  }
  func.func @transform_3(%arg0: i32, %arg1: i32) -> (i32, i32) {
    %c0_i32 = arith.constant 0 : i32
    %c0_i32_0 = arith.constant 0 : i32
    return %c0_i32, %arg1 : i32, i32
  }
  func.func @transform_4(%arg0: i32, %arg1: i32) -> (i32, i32) {
    %c0_i32 = arith.constant 0 : i32
    %c0_i32_0 = arith.constant 0 : i32
    return %c0_i32, %arg0 : i32, i32
  }
}

</mosaic_0001>

<llo_original>
// kernel: outlier_detector_forward.1
$region0: #{outlier_detector_forward.1}
  #allocation0 [shape = 'u32[]', space=smem, size = 0x4, offset = 0x4, fixed_abs, tag = 'smem constant byte address 0x4 - core index']
  #allocation1 [shape = 'u32[144,128]{1,0:T(1,128)}', space=vmem, size = 0x12000, scoped, tag = 'internal scratch']
  #allocation2 [shape = 'f32[1024,128]{1,0:T(8,128)}', space=vmem, size = 0x80000, scoped, tag = 'scratch operand']
  #allocation3 [shape = 'f32[1024,128]{1,0:T(8,128)}', space=vmem, size = 0x80000, scoped, tag = 'scratch operand']
  %s0 = inlined_call_operand.vmem [shape: f32[8,128], index: 0, kind: input, shape index: {}]
  %s1 = inlined_call_operand.vmem [shape: f32[8,128], index: 1, kind: input, shape index: {}]
  %s2 = inlined_call_operand.vmem [shape: f32[8,128], index: 2, kind: input, shape index: {}, may-alias: {2,3}]
  %s3 = inlined_call_operand.vmem [shape: f32[8,128], index: 3, kind: input, shape index: {}, may-alias: {2,3}]
  %s4 = inlined_call_operand.vmem [shape: f32[1,128], index: 4, kind: output, shape index: {}]
  %s5 = sld [smem:[#allocation0]]
  $region34: #{outlier_detector_forward.1} parent=0
    _
  %s7 = ssub.s32 1, %s5
  %s8 = scalar_select 0, %s7, %s5
  // Predicated region
  $region2: #{outlier_detector_forward.1} parent=0 // pred_check
    _
  $region3: #{outlier_detector_forward.1} parent=0 // pred_check_branch
    %10 = sbr.rel (0) target = $region5
  $region4: #{outlier_detector_forward.1} parent=0 // pred_region
    _
  $region5: #{outlier_detector_forward.1} parent=0 // pred_fallthru
    _
  // Predicated region
  $region6: #{outlier_detector_forward.1} parent=0 // pred_check
    _
  $region7: #{outlier_detector_forward.1} parent=0 // pred_check_branch
    %12 = sbr.rel (0) target = $region9
  $region8: #{outlier_detector_forward.1} parent=0 // pred_region
    _
  $region9: #{outlier_detector_forward.1} parent=0 // pred_fallthru
    _
  // Predicated region
  $region10: #{outlier_detector_forward.1} parent=0 // pred_check
    _
  $region11: #{outlier_detector_forward.1} parent=0 // pred_check_branch
    %14 = sbr.rel (0) target = $region13
  $region12: #{outlier_detector_forward.1} parent=0 // pred_region
    _
  $region13: #{outlier_detector_forward.1} parent=0 // pred_fallthru
    _
  // Predicated region
  $region14: #{outlier_detector_forward.1} parent=0 // pred_check
    _
  $region15: #{outlier_detector_forward.1} parent=0 // pred_check_branch
    %16 = sbr.rel (0) target = $region17
  $region16: #{outlier_detector_forward.1} parent=0 // pred_region
    _
  $region17: #{outlier_detector_forward.1} parent=0 // pred_fallthru
    _
  %p19 = scmp.eq.s32.totalorder 0, 0
  // Predicated region
  $region18: #{outlier_detector_forward.1} parent=0 // pred_check
    %p20 = pneg %p19
  $region19: #{outlier_detector_forward.1} parent=0 // pred_check_branch
    %22 = sbr.rel (%p20) target = $region21
  $region20: #{outlier_detector_forward.1} parent=0 // pred_region
    %23 = vst [vmem:[#allocation2] sm:$0xff] 0.0
    %24 = vst [vmem:[#allocation2 + $0x8] sm:$0xff] 0.0
    %25 = vst [vmem:[#allocation2 + $0x10] sm:$0xff] 0.0
    %26 = vst [vmem:[#allocation2 + $0x18] sm:$0xff] 0.0
    %27 = vst [vmem:[#allocation2 + $0x20] sm:$0xff] 0.0
    %28 = vst [vmem:[#allocation2 + $0x28] sm:$0xff] 0.0
    %29 = vst [vmem:[#allocation2 + $0x30] sm:$0xff] 0.0
    %30 = vst [vmem:[#allocation2 + $0x38] sm:$0xff] 0.0
    %31 = vst [vmem:[#allocation2 + $0x40] sm:$0xff] 0.0
    %32 = vst [vmem:[#allocation2 + $0x48] sm:$0xff] 0.0
    %33 = vst [vmem:[#allocation2 + $0x50] sm:$0xff] 0.0
    %34 = vst [vmem:[#allocation2 + $0x58] sm:$0xff] 0.0
    %35 = vst [vmem:[#allocation2 + $0x60] sm:$0xff] 0.0
    %36 = vst [vmem:[#allocation2 + $0x68] sm:$0xff] 0.0
    %37 = vst [vmem:[#allocation2 + $0x70] sm:$0xff] 0.0
    %38 = vst [vmem:[#allocation2 + $0x78] sm:$0xff] 0.0
    %39 = vst [vmem:[#allocation2 + $0x80] sm:$0xff] 0.0
    %40 = vst [vmem:[#allocation2 + $0x88] sm:$0xff] 0.0
    %41 = vst [vmem:[#allocation2 + $0x90] sm:$0xff] 0.0
    %42 = vst [vmem:[#allocation2 + $0x98] sm:$0xff] 0.0
    %43 = vst [vmem:[#allocation2 + $0xa0] sm:$0xff] 0.0
    %44 = vst [vmem:[#allocation2 + $0xa8] sm:$0xff] 0.0
    %45 = vst [vmem:[#allocation2 + $0xb0] sm:$0xff] 0.0
    %46 = vst [vmem:[#allocation2 + $0xb8] sm:$0xff] 0.0
    %47 = vst [vmem:[#allocation2 + $0xc0] sm:$0xff] 0.0
    %48 = vst [vmem:[#allocation2 + $0xc8] sm:$0xff] 0.0
    %49 = vst [vmem:[#allocation2 + $0xd0] sm:$0xff] 0.0
    %50 = vst [vmem:[#allocation2 + $0xd8] sm:$0xff] 0.0
    %51 = vst [vmem:[#allocation2 + $0xe0] sm:$0xff] 0.0
    %52 = vst [vmem:[#allocation2 + $0xe8] sm:$0xff] 0.0
    %53 = vst [vmem:[#allocation2 + $0xf0] sm:$0xff] 0.0
    %54 = vst [vmem:[#allocation2 + $0xf8] sm:$0xff] 0.0
    %55 = vst [vmem:[#allocation2 + $0x100] sm:$0xff] 0.0
    %56 = vst [vmem:[#allocation2 + $0x108] sm:$0xff] 0.0
    %57 = vst [vmem:[#allocation2 + $0x110] sm:$0xff] 0.0
    %58 = vst [vmem:[#allocation2 + $0x118] sm:$0xff] 0.0
    %59 = vst [vmem:[#allocation2 + $0x120] sm:$0xff] 0.0
    %60 = vst [vmem:[#allocation2 + $0x128] sm:$0xff] 0.0
    %61 = vst [vmem:[#allocation2 + $0x130] sm:$0xff] 0.0
    %62 = vst [vmem:[#allocation2 + $0x138] sm:$0xff] 0.0
    %63 = vst [vmem:[#allocation2 + $0x140] sm:$0xff] 0.0
    %64 = vst [vmem:[#allocation2 + $0x148] sm:$0xff] 0.0
    %65 = vst [vmem:[#allocation2 + $0x150] sm:$0xff] 0.0
    %66 = vst [vmem:[#allocation2 + $0x158] sm:$0xff] 0.0
    %67 = vst [vmem:[#allocation2 + $0x160] sm:$0xff] 0.0
    %68 = vst [vmem:[#allocation2 + $0x168] sm:$0xff] 0.0
    %69 = vst [vmem:[#allocation2 + $0x170] sm:$0xff] 0.0
    %70 = vst [vmem:[#allocation2 + $0x178] sm:$0xff] 0.0
    %71 = vst [vmem:[#allocation2 + $0x180] sm:$0xff] 0.0
    %72 = vst [vmem:[#allocation2 + $0x188] sm:$0xff] 0.0
    %73 = vst [vmem:[#allocation2 + $0x190] sm:$0xff] 0.0
    %74 = vst [vmem:[#allocation2 + $0x198] sm:$0xff] 0.0
    %75 = vst [vmem:[#allocation2 + $0x1a0] sm:$0xff] 0.0
    %76 = vst [vmem:[#allocation2 + $0x1a8] sm:$0xff] 0.0
    %77 = vst [vmem:[#allocation2 + $0x1b0] sm:$0xff] 0.0
    %78 = vst [vmem:[#allocation2 + $0x1b8] sm:$0xff] 0.0
    %79 = vst [vmem:[#allocation2 + $0x1c0] sm:$0xff] 0.0
    %80 = vst [vmem:[#allocation2 + $0x1c8] sm:$0xff] 0.0
    %81 = vst [vmem:[#allocation2 + $0x1d0] sm:$0xff] 0.0
    %82 = vst [vmem:[#allocation2 + $0x1d8] sm:$0xff] 0.0
    %83 = vst [vmem:[#allocation2 + $0x1e0] sm:$0xff] 0.0
    %84 = vst [vmem:[#allocation2 + $0x1e8] sm:$0xff] 0.0
    %85 = vst [vmem:[#allocation2 + $0x1f0] sm:$0xff] 0.0
    %86 = vst [vmem:[#allocation2 + $0x1f8] sm:$0xff] 0.0
    %87 = vst [vmem:[#allocation2 + $0x200] sm:$0xff] 0.0
    %88 = vst [vmem:[#allocation2 + $0x208] sm:$0xff] 0.0
    %89 = vst [vmem:[#allocation2 + $0x210] sm:$0xff] 0.0
    %90 = vst [vmem:[#allocation2 + $0x218] sm:$0xff] 0.0
    %91 = vst [vmem:[#allocation2 + $0x220] sm:$0xff] 0.0
    %92 = vst [vmem:[#allocation2 + $0x228] sm:$0xff] 0.0
    %93 = vst [vmem:[#allocation2 + $0x230] sm:$0xff] 0.0
    %94 = vst [vmem:[#allocation2 + $0x238] sm:$0xff] 0.0
    %95 = vst [vmem:[#allocation2 + $0x240] sm:$0xff] 0.0
    %96 = vst [vmem:[#allocation2 + $0x248] sm:$0xff] 0.0
    %97 = vst [vmem:[#allocation2 + $0x250] sm:$0xff] 0.0
    %98 = vst [vmem:[#allocation2 + $0x258] sm:$0xff] 0.0
    %99 = vst [vmem:[#allocation2 + $0x260] sm:$0xff] 0.0
    %100 = vst [vmem:[#allocation2 + $0x268] sm:$0xff] 0.0
    %101 = vst [vmem:[#allocation2 + $0x270] sm:$0xff] 0.0
    %102 = vst [vmem:[#allocation2 + $0x278] sm:$0xff] 0.0
    %103 = vst [vmem:[#allocation2 + $0x280] sm:$0xff] 0.0
    %104 = vst [vmem:[#allocation2 + $0x288] sm:$0xff] 0.0
    %105 = vst [vmem:[#allocation2 + $0x290] sm:$0xff] 0.0
    %106 = vst [vmem:[#allocation2 + $0x298] sm:$0xff] 0.0
    %107 = vst [vmem:[#allocation2 + $0x2a0] sm:$0xff] 0.0
    %108 = vst [vmem:[#allocation2 + $0x2a8] sm:$0xff] 0.0
    %109 = vst [vmem:[#allocation2 + $0x2b0] sm:$0xff] 0.0
    %110 = vst [vmem:[#allocation2 + $0x2b8] sm:$0xff] 0.0
    %111 = vst [vmem:[#allocation2 + $0x2c0] sm:$0xff] 0.0
    %112 = vst [vmem:[#allocation2 + $0x2c8] sm:$0xff] 0.0
    %113 = vst [vmem:[#allocation2 + $0x2d0] sm:$0xff] 0.0
    %114 = vst [vmem:[#allocation2 + $0x2d8] sm:$0xff] 0.0
    %115 = vst [vmem:[#allocation2 + $0x2e0] sm:$0xff] 0.0
    %116 = vst [vmem:[#allocation2 + $0x2e8] sm:$0xff] 0.0
    %117 = vst [vmem:[#allocation2 + $0x2f0] sm:$0xff] 0.0
    %118 = vst [vmem:[#allocation2 + $0x2f8] sm:$0xff] 0.0
    %119 = vst [vmem:[#allocation2 + $0x300] sm:$0xff] 0.0
    %120 = vst [vmem:[#allocation2 + $0x308] sm:$0xff] 0.0
    %121 = vst [vmem:[#allocation2 + $0x310] sm:$0xff] 0.0
    %122 = vst [vmem:[#allocation2 + $0x318] sm:$0xff] 0.0
    %123 = vst [vmem:[#allocation2 + $0x320] sm:$0xff] 0.0
    %124 = vst [vmem:[#allocation2 + $0x328] sm:$0xff] 0.0
    %125 = vst [vmem:[#allocation2 + $0x330] sm:$0xff] 0.0
    %126 = vst [vmem:[#allocation2 + $0x338] sm:$0xff] 0.0
    %127 = vst [vmem:[#allocation2 + $0x340] sm:$0xff] 0.0
    %128 = vst [vmem:[#allocation2 + $0x348] sm:$0xff] 0.0
    %129 = vst [vmem:[#allocation2 + $0x350] sm:$0xff] 0.0
    %130 = vst [vmem:[#allocation2 + $0x358] sm:$0xff] 0.0
    %131 = vst [vmem:[#allocation2 + $0x360] sm:$0xff] 0.0
    %132 = vst [vmem:[#allocation2 + $0x368] sm:$0xff] 0.0
    %133 = vst [vmem:[#allocation2 + $0x370] sm:$0xff] 0.0
    %134 = vst [vmem:[#allocation2 + $0x378] sm:$0xff] 0.0
    %135 = vst [vmem:[#allocation2 + $0x380] sm:$0xff] 0.0
    %136 = vst [vmem:[#allocation2 + $0x388] sm:$0xff] 0.0
    %137 = vst [vmem:[#allocation2 + $0x390] sm:$0xff] 0.0
    %138 = vst [vmem:[#allocation2 + $0x398] sm:$0xff] 0.0
    %139 = vst [vmem:[#allocation2 + $0x3a0] sm:$0xff] 0.0
    %140 = vst [vmem:[#allocation2 + $0x3a8] sm:$0xff] 0.0
    %141 = vst [vmem:[#allocation2 + $0x3b0] sm:$0xff] 0.0
    %142 = vst [vmem:[#allocation2 + $0x3b8] sm:$0xff] 0.0
    %143 = vst [vmem:[#allocation2 + $0x3c0] sm:$0xff] 0.0
    %144 = vst [vmem:[#allocation2 + $0x3c8] sm:$0xff] 0.0
    %145 = vst [vmem:[#allocation2 + $0x3d0] sm:$0xff] 0.0
    %146 = vst [vmem:[#allocation2 + $0x3d8] sm:$0xff] 0.0
    %147 = vst [vmem:[#allocation2 + $0x3e0] sm:$0xff] 0.0
    %148 = vst [vmem:[#allocation2 + $0x3e8] sm:$0xff] 0.0
    %149 = vst [vmem:[#allocation2 + $0x3f0] sm:$0xff] 0.0
    %150 = vst [vmem:[#allocation2 + $0x3f8] sm:$0xff] 0.0
    %151 = vst [vmem:[#allocation3] sm:$0xff] 0.0
    %152 = vst [vmem:[#allocation3 + $0x8] sm:$0xff] 0.0
    %153 = vst [vmem:[#allocation3 + $0x10] sm:$0xff] 0.0
    %154 = vst [vmem:[#allocation3 + $0x18] sm:$0xff] 0.0
    %155 = vst [vmem:[#allocation3 + $0x20] sm:$0xff] 0.0
    %156 = vst [vmem:[#allocation3 + $0x28] sm:$0xff] 0.0
    %157 = vst [vmem:[#allocation3 + $0x30] sm:$0xff] 0.0
    %158 = vst [vmem:[#allocation3 + $0x38] sm:$0xff] 0.0
    %159 = vst [vmem:[#allocation3 + $0x40] sm:$0xff] 0.0
    %160 = vst [vmem:[#allocation3 + $0x48] sm:$0xff] 0.0
    %161 = vst [vmem:[#allocation3 + $0x50] sm:$0xff] 0.0
    %162 = vst [vmem:[#allocation3 + $0x58] sm:$0xff] 0.0
    %163 = vst [vmem:[#allocation3 + $0x60] sm:$0xff] 0.0
    %164 = vst [vmem:[#allocation3 + $0x68] sm:$0xff] 0.0
    %165 = vst [vmem:[#allocation3 + $0x70] sm:$0xff] 0.0
    %166 = vst [vmem:[#allocation3 + $0x78] sm:$0xff] 0.0
    %167 = vst [vmem:[#allocation3 + $0x80] sm:$0xff] 0.0
    %168 = vst [vmem:[#allocation3 + $0x88] sm:$0xff] 0.0
    %169 = vst [vmem:[#allocation3 + $0x90] sm:$0xff] 0.0
    %170 = vst [vmem:[#allocation3 + $0x98] sm:$0xff] 0.0
    %171 = vst [vmem:[#allocation3 + $0xa0] sm:$0xff] 0.0
    %172 = vst [vmem:[#allocation3 + $0xa8] sm:$0xff] 0.0
    %173 = vst [vmem:[#allocation3 + $0xb0] sm:$0xff] 0.0
    %174 = vst [vmem:[#allocation3 + $0xb8] sm:$0xff] 0.0
    %175 = vst [vmem:[#allocation3 + $0xc0] sm:$0xff] 0.0
    %176 = vst [vmem:[#allocation3 + $0xc8] sm:$0xff] 0.0
    %177 = vst [vmem:[#allocation3 + $0xd0] sm:$0xff] 0.0
    %178 = vst [vmem:[#allocation3 + $0xd8] sm:$0xff] 0.0
    %179 = vst [vmem:[#allocation3 + $0xe0] sm:$0xff] 0.0
    %180 = vst [vmem:[#allocation3 + $0xe8] sm:$0xff] 0.0
    %181 = vst [vmem:[#allocation3 + $0xf0] sm:$0xff] 0.0
    %182 = vst [vmem:[#allocation3 + $0xf8] sm:$0xff] 0.0
    %183 = vst [vmem:[#allocation3 + $0x100] sm:$0xff] 0.0
    %184 = vst [vmem:[#allocation3 + $0x108] sm:$0xff] 0.0
    %185 = vst [vmem:[#allocation3 + $0x110] sm:$0xff] 0.0
    %186 = vst [vmem:[#allocation3 + $0x118] sm:$0xff] 0.0
    %187 = vst [vmem:[#allocation3 + $0x120] sm:$0xff] 0.0
    %188 = vst [vmem:[#allocation3 + $0x128] sm:$0xff] 0.0
    %189 = vst [vmem:[#allocation3 + $0x130] sm:$0xff] 0.0
    %190 = vst [vmem:[#allocation3 + $0x138] sm:$0xff] 0.0
    %191 = vst [vmem:[#allocation3 + $0x140] sm:$0xff] 0.0
    %192 = vst [vmem:[#allocation3 + $0x148] sm:$0xff] 0.0
    %193 = vst [vmem:[#allocation3 + $0x150] sm:$0xff] 0.0
    %194 = vst [vmem:[#allocation3 + $0x158] sm:$0xff] 0.0
    %195 = vst [vmem:[#allocation3 + $0x160] sm:$0xff] 0.0
    %196 = vst [vmem:[#allocation3 + $0x168] sm:$0xff] 0.0
    %197 = vst [vmem:[#allocation3 + $0x170] sm:$0xff] 0.0
    %198 = vst [vmem:[#allocation3 + $0x178] sm:$0xff] 0.0
    %199 = vst [vmem:[#allocation3 + $0x180] sm:$0xff] 0.0
    %200 = vst [vmem:[#allocation3 + $0x188] sm:$0xff] 0.0
    %201 = vst [vmem:[#allocation3 + $0x190] sm:$0xff] 0.0
    %202 = vst [vmem:[#allocation3 + $0x198] sm:$0xff] 0.0
    %203 = vst [vmem:[#allocation3 + $0x1a0] sm:$0xff] 0.0
    %204 = vst [vmem:[#allocation3 + $0x1a8] sm:$0xff] 0.0
    %205 = vst [vmem:[#allocation3 + $0x1b0] sm:$0xff] 0.0
    %206 = vst [vmem:[#allocation3 + $0x1b8] sm:$0xff] 0.0
    %207 = vst [vmem:[#allocation3 + $0x1c0] sm:$0xff] 0.0
    %208 = vst [vmem:[#allocation3 + $0x1c8] sm:$0xff] 0.0
    %209 = vst [vmem:[#allocation3 + $0x1d0] sm:$0xff] 0.0
    %210 = vst [vmem:[#allocation3 + $0x1d8] sm:$0xff] 0.0
    %211 = vst [vmem:[#allocation3 + $0x1e0] sm:$0xff] 0.0
    %212 = vst [vmem:[#allocation3 + $0x1e8] sm:$0xff] 0.0
    %213 = vst [vmem:[#allocation3 + $0x1f0] sm:$0xff] 0.0
    %214 = vst [vmem:[#allocation3 + $0x1f8] sm:$0xff] 0.0
    %215 = vst [vmem:[#allocation3 + $0x200] sm:$0xff] 0.0
    %216 = vst [vmem:[#allocation3 + $0x208] sm:$0xff] 0.0
    %217 = vst [vmem:[#allocation3 + $0x210] sm:$0xff] 0.0
    %218 = vst [vmem:[#allocation3 + $0x218] sm:$0xff] 0.0
    %219 = vst [vmem:[#allocation3 + $0x220] sm:$0xff] 0.0
    %220 = vst [vmem:[#allocation3 + $0x228] sm:$0xff] 0.0
    %221 = vst [vmem:[#allocation3 + $0x230] sm:$0xff] 0.0
    %222 = vst [vmem:[#allocation3 + $0x238] sm:$0xff] 0.0
    %223 = vst [vmem:[#allocation3 + $0x240] sm:$0xff] 0.0
    %224 = vst [vmem:[#allocation3 + $0x248] sm:$0xff] 0.0
    %225 = vst [vmem:[#allocation3 + $0x250] sm:$0xff] 0.0
    %226 = vst [vmem:[#allocation3 + $0x258] sm:$0xff] 0.0
    %227 = vst [vmem:[#allocation3 + $0x260] sm:$0xff] 0.0
    %228 = vst [vmem:[#allocation3 + $0x268] sm:$0xff] 0.0
    %229 = vst [vmem:[#allocation3 + $0x270] sm:$0xff] 0.0
    %230 = vst [vmem:[#allocation3 + $0x278] sm:$0xff] 0.0
    %231 = vst [vmem:[#allocation3 + $0x280] sm:$0xff] 0.0
    %232 = vst [vmem:[#allocation3 + $0x288] sm:$0xff] 0.0
    %233 = vst [vmem:[#allocation3 + $0x290] sm:$0xff] 0.0
    %234 = vst [vmem:[#allocation3 + $0x298] sm:$0xff] 0.0
    %235 = vst [vmem:[#allocation3 + $0x2a0] sm:$0xff] 0.0
    %236 = vst [vmem:[#allocation3 + $0x2a8] sm:$0xff] 0.0
    %237 = vst [vmem:[#allocation3 + $0x2b0] sm:$0xff] 0.0
    %238 = vst [vmem:[#allocation3 + $0x2b8] sm:$0xff] 0.0
    %239 = vst [vmem:[#allocation3 + $0x2c0] sm:$0xff] 0.0
    %240 = vst [vmem:[#allocation3 + $0x2c8] sm:$0xff] 0.0
    %241 = vst [vmem:[#allocation3 + $0x2d0] sm:$0xff] 0.0
    %242 = vst [vmem:[#allocation3 + $0x2d8] sm:$0xff] 0.0
    %243 = vst [vmem:[#allocation3 + $0x2e0] sm:$0xff] 0.0
    %244 = vst [vmem:[#allocation3 + $0x2e8] sm:$0xff] 0.0
    %245 = vst [vmem:[#allocation3 + $0x2f0] sm:$0xff] 0.0
    %246 = vst [vmem:[#allocation3 + $0x2f8] sm:$0xff] 0.0
    %247 = vst [vmem:[#allocation3 + $0x300] sm:$0xff] 0.0
    %248 = vst [vmem:[#allocation3 + $0x308] sm:$0xff] 0.0
    %249 = vst [vmem:[#allocation3 + $0x310] sm:$0xff] 0.0
    %250 = vst [vmem:[#allocation3 + $0x318] sm:$0xff] 0.0
    %251 = vst [vmem:[#allocation3 + $0x320] sm:$0xff] 0.0
    %252 = vst [vmem:[#allocation3 + $0x328] sm:$0xff] 0.0
    %253 = vst [vmem:[#allocation3 + $0x330] sm:$0xff] 0.0
    %254 = vst [vmem:[#allocation3 + $0x338] sm:$0xff] 0.0
    %255 = vst [vmem:[#allocation3 + $0x340] sm:$0xff] 0.0
    %256 = vst [vmem:[#allocation3 + $0x348] sm:$0xff] 0.0
    %257 = vst [vmem:[#allocation3 + $0x350] sm:$0xff] 0.0
    %258 = vst [vmem:[#allocation3 + $0x358] sm:$0xff] 0.0
    %259 = vst [vmem:[#allocation3 + $0x360] sm:$0xff] 0.0
    %260 = vst [vmem:[#allocation3 + $0x368] sm:$0xff] 0.0
    %261 = vst [vmem:[#allocation3 + $0x370] sm:$0xff] 0.0
    %262 = vst [vmem:[#allocation3 + $0x378] sm:$0xff] 0.0
    %263 = vst [vmem:[#allocation3 + $0x380] sm:$0xff] 0.0
    %264 = vst [vmem:[#allocation3 + $0x388] sm:$0xff] 0.0
    %265 = vst [vmem:[#allocation3 + $0x390] sm:$0xff] 0.0
    %266 = vst [vmem:[#allocation3 + $0x398] sm:$0xff] 0.0
    %267 = vst [vmem:[#allocation3 + $0x3a0] sm:$0xff] 0.0
    %268 = vst [vmem:[#allocation3 + $0x3a8] sm:$0xff] 0.0
    %269 = vst [vmem:[#allocation3 + $0x3b0] sm:$0xff] 0.0
    %270 = vst [vmem:[#allocation3 + $0x3b8] sm:$0xff] 0.0
    %271 = vst [vmem:[#allocation3 + $0x3c0] sm:$0xff] 0.0
    %272 = vst [vmem:[#allocation3 + $0x3c8] sm:$0xff] 0.0
    %273 = vst [vmem:[#allocation3 + $0x3d0] sm:$0xff] 0.0
    %274 = vst [vmem:[#allocation3 + $0x3d8] sm:$0xff] 0.0
    %275 = vst [vmem:[#allocation3 + $0x3e0] sm:$0xff] 0.0
    %276 = vst [vmem:[#allocation3 + $0x3e8] sm:$0xff] 0.0
    %277 = vst [vmem:[#allocation3 + $0x3f0] sm:$0xff] 0.0
    %278 = vst [vmem:[#allocation3 + $0x3f8] sm:$0xff] 0.0
  $region21: #{outlier_detector_forward.1} parent=0 // pred_fallthru
    _
  %v279 = vld [vmem:[%s2] sm:$0xff]
  %v280 = vld [vmem:[%s3] sm:$0xff]
  %v282 = vcombine.high %v280, %v280
  %v284 = vunpack.c.l.s4 1966171168
  %v285 = vunpack.c.0.s8 %v284
  %v286 = vlaneseq
  %v287 = vshrl.u32 %v286, 7
  %v288 = vsub.s32 %v285, %v287
  %v289 = vrot.slane %v280, %v288
  %v291 = vunpack.c.l.s4 1966171168
  %v292 = vunpack.c.0.s8 %v291
  %v293 = vlaneseq
  %v294 = vshrl.u32 %v293, 7
  %v295 = vsub.s32 %v292, %v294
  %v296 = vrot.slane %v282, %v295
  %v297 = vcombine.high %v289, %v289
  %v298 = vcombine.high %v296, %v296
  %v300 = vunpack.c.l.s4 1966171168
  %v301 = vunpack.c.0.s8 %v300
  %v302 = vlaneseq
  %v303 = vshrl.u32 %v302, 7
  %v304 = vsub.s32 %v301, %v303
  %v305 = vrot.slane %v289, %v304
  %v307 = vunpack.c.l.s4 1966171168
  %v308 = vunpack.c.0.s8 %v307
  %v309 = vlaneseq
  %v310 = vshrl.u32 %v309, 7
  %v311 = vsub.s32 %v308, %v310
  %v312 = vrot.slane %v296, %v311
  %v314 = vunpack.c.l.s4 1966171168
  %v315 = vunpack.c.0.s8 %v314
  %v316 = vlaneseq
  %v317 = vshrl.u32 %v316, 7
  %v318 = vsub.s32 %v315, %v317
  %v319 = vrot.slane %v297, %v318
  %v321 = vunpack.c.l.s4 1966171168
  %v322 = vunpack.c.0.s8 %v321
  %v323 = vlaneseq
  %v324 = vshrl.u32 %v323, 7
  %v325 = vsub.s32 %v322, %v324
  %v326 = vrot.slane %v298, %v325
  %v327 = vcombine.high %v305, %v305
  %v328 = vcombine.high %v312, %v312
  %v329 = vcombine.high %v319, %v319
  %v330 = vcombine.high %v326, %v326
  %v331 = vlaneseq
  %v332 = vshrl.u32 %v331, 7
  %v333 = vsub.s32 0, %v332
  %v334 = vrot.slane %v279, %v333
  %336 = vbcast.lane.b32.xlu0 %v334, 256
  %v337 = vpop.permute.xlu0 %336
  %s339 = sor.u32 256, 8
  %340 = vbcast.lane.b32.xlu0 %v334, %s339
  %v341 = vpop.permute.xlu0 %340
  %s343 = sor.u32 256, 16
  %344 = vbcast.lane.b32.xlu0 %v334, %s343
  %v345 = vpop.permute.xlu0 %344
  %s347 = sor.u32 256, 24
  %348 = vbcast.lane.b32.xlu0 %v334, %s347
  %v349 = vpop.permute.xlu0 %348
  %s351 = sor.u32 256, 32
  %352 = vbcast.lane.b32.xlu0 %v334, %s351
  %v353 = vpop.permute.xlu0 %352
  %s355 = sor.u32 256, 40
  %356 = vbcast.lane.b32.xlu0 %v334, %s355
  %v357 = vpop.permute.xlu0 %356
  %s359 = sor.u32 256, 48
  %360 = vbcast.lane.b32.xlu0 %v334, %s359
  %v361 = vpop.permute.xlu0 %360
  %s363 = sor.u32 256, 56
  %364 = vbcast.lane.b32.xlu0 %v334, %s363
  %v365 = vpop.permute.xlu0 %364
  %s367 = sor.u32 256, 64
  %368 = vbcast.lane.b32.xlu0 %v334, %s367
  %v369 = vpop.permute.xlu0 %368
  %s371 = sor.u32 256, 72
  %372 = vbcast.lane.b32.xlu0 %v334, %s371
  %v373 = vpop.permute.xlu0 %372
  %s375 = sor.u32 256, 80
  %376 = vbcast.lane.b32.xlu0 %v334, %s375
  %v377 = vpop.permute.xlu0 %376
  %s379 = sor.u32 256, 88
  %380 = vbcast.lane.b32.xlu0 %v334, %s379
  %v381 = vpop.permute.xlu0 %380
  %s383 = sor.u32 256, 96
  %384 = vbcast.lane.b32.xlu0 %v334, %s383
  %v385 = vpop.permute.xlu0 %384
  %s387 = sor.u32 256, 104
  %388 = vbcast.lane.b32.xlu0 %v334, %s387
  %v389 = vpop.permute.xlu0 %388
  %s391 = sor.u32 256, 112
  %392 = vbcast.lane.b32.xlu0 %v334, %s391
  %v393 = vpop.permute.xlu0 %392
  %s395 = sor.u32 256, 120
  %396 = vbcast.lane.b32.xlu0 %v334, %s395
  %v397 = vpop.permute.xlu0 %396
  %v398 = vlaneseq
  %v399 = vshrl.u32 %v398, 7
  %v400 = vsub.s32 1, %v399
  %v401 = vrot.slane %v279, %v400
  %403 = vbcast.lane.b32.xlu0 %v401, 256
  %v404 = vpop.permute.xlu0 %403
  %s406 = sor.u32 256, 8
  %407 = vbcast.lane.b32.xlu0 %v401, %s406
  %v408 = vpop.permute.xlu0 %407
  %s410 = sor.u32 256, 16
  %411 = vbcast.lane.b32.xlu0 %v401, %s410
  %v412 = vpop.permute.xlu0 %411
  %s414 = sor.u32 256, 24
  %415 = vbcast.lane.b32.xlu0 %v401, %s414
  %v416 = vpop.permute.xlu0 %415
  %s418 = sor.u32 256, 32
  %419 = vbcast.lane.b32.xlu0 %v401, %s418
  %v420 = vpop.permute.xlu0 %419
  %s422 = sor.u32 256, 40
  %423 = vbcast.lane.b32.xlu0 %v401, %s422
  %v424 = vpop.permute.xlu0 %423
  %s426 = sor.u32 256, 48
  %427 = vbcast.lane.b32.xlu0 %v401, %s426
  %v428 = vpop.permute.xlu0 %427
  %s430 = sor.u32 256, 56
  %431 = vbcast.lane.b32.xlu0 %v401, %s430
  %v432 = vpop.permute.xlu0 %431
  %s434 = sor.u32 256, 64
  %435 = vbcast.lane.b32.xlu0 %v401, %s434
  %v436 = vpop.permute.xlu0 %435
  %s438 = sor.u32 256, 72
  %439 = vbcast.lane.b32.xlu0 %v401, %s438
  %v440 = vpop.permute.xlu0 %439
  %s442 = sor.u32 256, 80
  %443 = vbcast.lane.b32.xlu0 %v401, %s442
  %v444 = vpop.permute.xlu0 %443
  %s446 = sor.u32 256, 88
  %447 = vbcast.lane.b32.xlu0 %v401, %s446
  %v448 = vpop.permute.xlu0 %447
  %s450 = sor.u32 256, 96
  %451 = vbcast.lane.b32.xlu0 %v401, %s450
  %v452 = vpop.permute.xlu0 %451
  %s454 = sor.u32 256, 104
  %455 = vbcast.lane.b32.xlu0 %v401, %s454
  %v456 = vpop.permute.xlu0 %455
  %s458 = sor.u32 256, 112
  %459 = vbcast.lane.b32.xlu0 %v401, %s458
  %v460 = vpop.permute.xlu0 %459
  %s462 = sor.u32 256, 120
  %463 = vbcast.lane.b32.xlu0 %v401, %s462
  %v464 = vpop.permute.xlu0 %463
  %v465 = vlaneseq
  %v466 = vshrl.u32 %v465, 7
  %v467 = vsub.s32 2, %v466
  %v468 = vrot.slane %v279, %v467
  %470 = vbcast.lane.b32.xlu0 %v468, 256
  %v471 = vpop.permute.xlu0 %470
  %s473 = sor.u32 256, 8
  %474 = vbcast.lane.b32.xlu0 %v468, %s473
  %v475 = vpop.permute.xlu0 %474
  %s477 = sor.u32 256, 16
  %478 = vbcast.lane.b32.xlu0 %v468, %s477
  %v479 = vpop.permute.xlu0 %478
  %s481 = sor.u32 256, 24
  %482 = vbcast.lane.b32.xlu0 %v468, %s481
  %v483 = vpop.permute.xlu0 %482
  %s485 = sor.u32 256, 32
  %486 = vbcast.lane.b32.xlu0 %v468, %s485
  %v487 = vpop.permute.xlu0 %486
  %s489 = sor.u32 256, 40
  %490 = vbcast.lane.b32.xlu0 %v468, %s489
  %v491 = vpop.permute.xlu0 %490
  %s493 = sor.u32 256, 48
  %494 = vbcast.lane.b32.xlu0 %v468, %s493
  %v495 = vpop.permute.xlu0 %494
  %s497 = sor.u32 256, 56
  %498 = vbcast.lane.b32.xlu0 %v468, %s497
  %v499 = vpop.permute.xlu0 %498
  %s501 = sor.u32 256, 64
  %502 = vbcast.lane.b32.xlu0 %v468, %s501
  %v503 = vpop.permute.xlu0 %502
  %s505 = sor.u32 256, 72
  %506 = vbcast.lane.b32.xlu0 %v468, %s505
  %v507 = vpop.permute.xlu0 %506
  %s509 = sor.u32 256, 80
  %510 = vbcast.lane.b32.xlu0 %v468, %s509
  %v511 = vpop.permute.xlu0 %510
  %s513 = sor.u32 256, 88
  %514 = vbcast.lane.b32.xlu0 %v468, %s513
  %v515 = vpop.permute.xlu0 %514
  %s517 = sor.u32 256, 96
  %518 = vbcast.lane.b32.xlu0 %v468, %s517
  %v519 = vpop.permute.xlu0 %518
  %s521 = sor.u32 256, 104
  %522 = vbcast.lane.b32.xlu0 %v468, %s521
  %v523 = vpop.permute.xlu0 %522
  %s525 = sor.u32 256, 112
  %526 = vbcast.lane.b32.xlu0 %v468, %s525
  %v527 = vpop.permute.xlu0 %526
  %s529 = sor.u32 256, 120
  %530 = vbcast.lane.b32.xlu0 %v468, %s529
  %v531 = vpop.permute.xlu0 %530
  %v532 = vlaneseq
  %v533 = vshrl.u32 %v532, 7
  %v534 = vsub.s32 3, %v533
  %v535 = vrot.slane %v279, %v534
  %537 = vbcast.lane.b32.xlu0 %v535, 256
  %v538 = vpop.permute.xlu0 %537
  %s540 = sor.u32 256, 8
  %541 = vbcast.lane.b32.xlu0 %v535, %s540
  %v542 = vpop.permute.xlu0 %541
  %s544 = sor.u32 256, 16
  %545 = vbcast.lane.b32.xlu0 %v535, %s544
  %v546 = vpop.permute.xlu0 %545
  %s548 = sor.u32 256, 24
  %549 = vbcast.lane.b32.xlu0 %v535, %s548
  %v550 = vpop.permute.xlu0 %549
  %s552 = sor.u32 256, 32
  %553 = vbcast.lane.b32.xlu0 %v535, %s552
  %v554 = vpop.permute.xlu0 %553
  %s556 = sor.u32 256, 40
  %557 = vbcast.lane.b32.xlu0 %v535, %s556
  %v558 = vpop.permute.xlu0 %557
  %s560 = sor.u32 256, 48
  %561 = vbcast.lane.b32.xlu0 %v535, %s560
  %v562 = vpop.permute.xlu0 %561
  %s564 = sor.u32 256, 56
  %565 = vbcast.lane.b32.xlu0 %v535, %s564
  %v566 = vpop.permute.xlu0 %565
  %s568 = sor.u32 256, 64
  %569 = vbcast.lane.b32.xlu0 %v535, %s568
  %v570 = vpop.permute.xlu0 %569
  %s572 = sor.u32 256, 72
  %573 = vbcast.lane.b32.xlu0 %v535, %s572
  %v574 = vpop.permute.xlu0 %573
  %s576 = sor.u32 256, 80
  %577 = vbcast.lane.b32.xlu0 %v535, %s576
  %v578 = vpop.permute.xlu0 %577
  %s580 = sor.u32 256, 88
  %581 = vbcast.lane.b32.xlu0 %v535, %s580
  %v582 = vpop.permute.xlu0 %581
  %s584 = sor.u32 256, 96
  %585 = vbcast.lane.b32.xlu0 %v535, %s584
  %v586 = vpop.permute.xlu0 %585
  %s588 = sor.u32 256, 104
  %589 = vbcast.lane.b32.xlu0 %v535, %s588
  %v590 = vpop.permute.xlu0 %589
  %s592 = sor.u32 256, 112
  %593 = vbcast.lane.b32.xlu0 %v535, %s592
  %v594 = vpop.permute.xlu0 %593
  %s596 = sor.u32 256, 120
  %597 = vbcast.lane.b32.xlu0 %v535, %s596
  %v598 = vpop.permute.xlu0 %597
  %v599 = vlaneseq
  %v600 = vshrl.u32 %v599, 7
  %v601 = vsub.s32 4, %v600
  %v602 = vrot.slane %v279, %v601
  %604 = vbcast.lane.b32.xlu0 %v602, 256
  %v605 = vpop.permute.xlu0 %604
  %s607 = sor.u32 256, 8
  %608 = vbcast.lane.b32.xlu0 %v602, %s607
  %v609 = vpop.permute.xlu0 %608
  %s611 = sor.u32 256, 16
  %612 = vbcast.lane.b32.xlu0 %v602, %s611
  %v613 = vpop.permute.xlu0 %612
  %s615 = sor.u32 256, 24
  %616 = vbcast.lane.b32.xlu0 %v602, %s615
  %v617 = vpop.permute.xlu0 %616
  %s619 = sor.u32 256, 32
  %620 = vbcast.lane.b32.xlu0 %v602, %s619
  %v621 = vpop.permute.xlu0 %620
  %s623 = sor.u32 256, 40
  %624 = vbcast.lane.b32.xlu0 %v602, %s623
  %v625 = vpop.permute.xlu0 %624
  %s627 = sor.u32 256, 48
  %628 = vbcast.lane.b32.xlu0 %v602, %s627
  %v629 = vpop.permute.xlu0 %628
  %s631 = sor.u32 256, 56
  %632 = vbcast.lane.b32.xlu0 %v602, %s631
  %v633 = vpop.permute.xlu0 %632
  %s635 = sor.u32 256, 64
  %636 = vbcast.lane.b32.xlu0 %v602, %s635
  %v637 = vpop.permute.xlu0 %636
  %s639 = sor.u32 256, 72
  %640 = vbcast.lane.b32.xlu0 %v602, %s639
  %v641 = vpop.permute.xlu0 %640
  %s643 = sor.u32 256, 80
  %644 = vbcast.lane.b32.xlu0 %v602, %s643
  %v645 = vpop.permute.xlu0 %644
  %s647 = sor.u32 256, 88
  %648 = vbcast.lane.b32.xlu0 %v602, %s647
  %v649 = vpop.permute.xlu0 %648
  %s651 = sor.u32 256, 96
  %652 = vbcast.lane.b32.xlu0 %v602, %s651
  %v653 = vpop.permute.xlu0 %652
  %s655 = sor.u32 256, 104
  %656 = vbcast.lane.b32.xlu0 %v602, %s655
  %v657 = vpop.permute.xlu0 %656
  %s659 = sor.u32 256, 112
  %660 = vbcast.lane.b32.xlu0 %v602, %s659
  %v661 = vpop.permute.xlu0 %660
  %s663 = sor.u32 256, 120
  %664 = vbcast.lane.b32.xlu0 %v602, %s663
  %v665 = vpop.permute.xlu0 %664
  %v666 = vlaneseq
  %v667 = vshrl.u32 %v666, 7
  %v668 = vsub.s32 5, %v667
  %v669 = vrot.slane %v279, %v668
  %671 = vbcast.lane.b32.xlu0 %v669, 256
  %v672 = vpop.permute.xlu0 %671
  %s674 = sor.u32 256, 8
  %675 = vbcast.lane.b32.xlu0 %v669, %s674
  %v676 = vpop.permute.xlu0 %675
  %s678 = sor.u32 256, 16
  %679 = vbcast.lane.b32.xlu0 %v669, %s678
  %v680 = vpop.permute.xlu0 %679
  %s682 = sor.u32 256, 24
  %683 = vbcast.lane.b32.xlu0 %v669, %s682
  %v684 = vpop.permute.xlu0 %683
  %s686 = sor.u32 256, 32
  %687 = vbcast.lane.b32.xlu0 %v669, %s686
  %v688 = vpop.permute.xlu0 %687
  %s690 = sor.u32 256, 40
  %691 = vbcast.lane.b32.xlu0 %v669, %s690
  %v692 = vpop.permute.xlu0 %691
  %s694 = sor.u32 256, 48
  %695 = vbcast.lane.b32.xlu0 %v669, %s694
  %v696 = vpop.permute.xlu0 %695
  %s698 = sor.u32 256, 56
  %699 = vbcast.lane.b32.xlu0 %v669, %s698
  %v700 = vpop.permute.xlu0 %699
  %s702 = sor.u32 256, 64
  %703 = vbcast.lane.b32.xlu0 %v669, %s702
  %v704 = vpop.permute.xlu0 %703
  %s706 = sor.u32 256, 72
  %707 = vbcast.lane.b32.xlu0 %v669, %s706
  %v708 = vpop.permute.xlu0 %707
  %s710 = sor.u32 256, 80
  %711 = vbcast.lane.b32.xlu0 %v669, %s710
  %v712 = vpop.permute.xlu0 %711
  %s714 = sor.u32 256, 88
  %715 = vbcast.lane.b32.xlu0 %v669, %s714
  %v716 = vpop.permute.xlu0 %715
  %s718 = sor.u32 256, 96
  %719 = vbcast.lane.b32.xlu0 %v669, %s718
  %v720 = vpop.permute.xlu0 %719
  %s722 = sor.u32 256, 104
  %723 = vbcast.lane.b32.xlu0 %v669, %s722
  %v724 = vpop.permute.xlu0 %723
  %s726 = sor.u32 256, 112
  %727 = vbcast.lane.b32.xlu0 %v669, %s726
  %v728 = vpop.permute.xlu0 %727
  %s730 = sor.u32 256, 120
  %731 = vbcast.lane.b32.xlu0 %v669, %s730
  %v732 = vpop.permute.xlu0 %731
  %v733 = vlaneseq
  %v734 = vshrl.u32 %v733, 7
  %v735 = vsub.s32 6, %v734
  %v736 = vrot.slane %v279, %v735
  %738 = vbcast.lane.b32.xlu0 %v736, 256
  %v739 = vpop.permute.xlu0 %738
  %s741 = sor.u32 256, 8
  %742 = vbcast.lane.b32.xlu0 %v736, %s741
  %v743 = vpop.permute.xlu0 %742
  %s745 = sor.u32 256, 16
  %746 = vbcast.lane.b32.xlu0 %v736, %s745
  %v747 = vpop.permute.xlu0 %746
  %s749 = sor.u32 256, 24
  %750 = vbcast.lane.b32.xlu0 %v736, %s749
  %v751 = vpop.permute.xlu0 %750
  %s753 = sor.u32 256, 32
  %754 = vbcast.lane.b32.xlu0 %v736, %s753
  %v755 = vpop.permute.xlu0 %754
  %s757 = sor.u32 256, 40
  %758 = vbcast.lane.b32.xlu0 %v736, %s757
  %v759 = vpop.permute.xlu0 %758
  %s761 = sor.u32 256, 48
  %762 = vbcast.lane.b32.xlu0 %v736, %s761
  %v763 = vpop.permute.xlu0 %762
  %s765 = sor.u32 256, 56
  %766 = vbcast.lane.b32.xlu0 %v736, %s765
  %v767 = vpop.permute.xlu0 %766
  %s769 = sor.u32 256, 64
  %770 = vbcast.lane.b32.xlu0 %v736, %s769
  %v771 = vpop.permute.xlu0 %770
  %s773 = sor.u32 256, 72
  %774 = vbcast.lane.b32.xlu0 %v736, %s773
  %v775 = vpop.permute.xlu0 %774
  %s777 = sor.u32 256, 80
  %778 = vbcast.lane.b32.xlu0 %v736, %s777
  %v779 = vpop.permute.xlu0 %778
  %s781 = sor.u32 256, 88
  %782 = vbcast.lane.b32.xlu0 %v736, %s781
  %v783 = vpop.permute.xlu0 %782
  %s785 = sor.u32 256, 96
  %786 = vbcast.lane.b32.xlu0 %v736, %s785
  %v787 = vpop.permute.xlu0 %786
  %s789 = sor.u32 256, 104
  %790 = vbcast.lane.b32.xlu0 %v736, %s789
  %v791 = vpop.permute.xlu0 %790
  %s793 = sor.u32 256, 112
  %794 = vbcast.lane.b32.xlu0 %v736, %s793
  %v795 = vpop.permute.xlu0 %794
  %s797 = sor.u32 256, 120
  %798 = vbcast.lane.b32.xlu0 %v736, %s797
  %v799 = vpop.permute.xlu0 %798
  %v800 = vlaneseq
  %v801 = vshrl.u32 %v800, 7
  %v802 = vsub.s32 7, %v801
  %v803 = vrot.slane %v279, %v802
  %805 = vbcast.lane.b32.xlu0 %v803, 256
  %v806 = vpop.permute.xlu0 %805
  %s808 = sor.u32 256, 8
  %809 = vbcast.lane.b32.xlu0 %v803, %s808
  %v810 = vpop.permute.xlu0 %809
  %s812 = sor.u32 256, 16
  %813 = vbcast.lane.b32.xlu0 %v803, %s812
  %v814 = vpop.permute.xlu0 %813
  %s816 = sor.u32 256, 24
  %817 = vbcast.lane.b32.xlu0 %v803, %s816
  %v818 = vpop.permute.xlu0 %817
  %s820 = sor.u32 256, 32
  %821 = vbcast.lane.b32.xlu0 %v803, %s820
  %v822 = vpop.permute.xlu0 %821
  %s824 = sor.u32 256, 40
  %825 = vbcast.lane.b32.xlu0 %v803, %s824
  %v826 = vpop.permute.xlu0 %825
  %s828 = sor.u32 256, 48
  %829 = vbcast.lane.b32.xlu0 %v803, %s828
  %v830 = vpop.permute.xlu0 %829
  %s832 = sor.u32 256, 56
  %833 = vbcast.lane.b32.xlu0 %v803, %s832
  %v834 = vpop.permute.xlu0 %833
  %s836 = sor.u32 256, 64
  %837 = vbcast.lane.b32.xlu0 %v803, %s836
  %v838 = vpop.permute.xlu0 %837
  %s840 = sor.u32 256, 72
  %841 = vbcast.lane.b32.xlu0 %v803, %s840
  %v842 = vpop.permute.xlu0 %841
  %s844 = sor.u32 256, 80
  %845 = vbcast.lane.b32.xlu0 %v803, %s844
  %v846 = vpop.permute.xlu0 %845
  %s848 = sor.u32 256, 88
  %849 = vbcast.lane.b32.xlu0 %v803, %s848
  %v850 = vpop.permute.xlu0 %849
  %s852 = sor.u32 256, 96
  %853 = vbcast.lane.b32.xlu0 %v803, %s852
  %v854 = vpop.permute.xlu0 %853
  %s856 = sor.u32 256, 104
  %857 = vbcast.lane.b32.xlu0 %v803, %s856
  %v858 = vpop.permute.xlu0 %857
  %s860 = sor.u32 256, 112
  %861 = vbcast.lane.b32.xlu0 %v803, %s860
  %v862 = vpop.permute.xlu0 %861
  %s864 = sor.u32 256, 120
  %865 = vbcast.lane.b32.xlu0 %v803, %s864
  %v866 = vpop.permute.xlu0 %865
  %v867 = vlaneseq
  %v868 = vshrl.u32 %v867, 7
  %v869 = vsub.s32 0, %v868
  %v870 = vrot.slane %v305, %v869
  %v871 = vlaneseq
  %v872 = vshrl.u32 %v871, 7
  %v873 = vsub.s32 0, %v872
  %v874 = vrot.slane %v319, %v873
  %v875 = vlaneseq
  %v876 = vshrl.u32 %v875, 7
  %v877 = vsub.s32 0, %v876
  %v878 = vrot.slane %v327, %v877
  %v879 = vlaneseq
  %v880 = vshrl.u32 %v879, 7
  %v881 = vsub.s32 0, %v880
  %v882 = vrot.slane %v329, %v881
  %v883 = vlaneseq
  %v884 = vshrl.u32 %v883, 7
  %v885 = vsub.s32 0, %v884
  %v886 = vrot.slane %v312, %v885
  %v887 = vlaneseq
  %v888 = vshrl.u32 %v887, 7
  %v889 = vsub.s32 0, %v888
  %v890 = vrot.slane %v326, %v889
  %v891 = vlaneseq
  %v892 = vshrl.u32 %v891, 7
  %v893 = vsub.s32 0, %v892
  %v894 = vrot.slane %v328, %v893
  %v895 = vlaneseq
  %v896 = vshrl.u32 %v895, 7
  %v897 = vsub.s32 0, %v896
  %v898 = vrot.slane %v330, %v897
  %vm907 = vcmp.le.f32.partialorder %v870, %v337
  %vm908 = vcmp.le.f32.partialorder %v870, %v341
  %vm909 = vcmp.le.f32.partialorder %v870, %v345
  %vm910 = vcmp.le.f32.partialorder %v870, %v349
  %vm911 = vcmp.le.f32.partialorder %v870, %v353
  %vm912 = vcmp.le.f32.partialorder %v870, %v357
  %vm913 = vcmp.le.f32.partialorder %v870, %v361
  %vm914 = vcmp.le.f32.partialorder %v870, %v365
  %vm915 = vcmp.le.f32.partialorder %v870, %v369
  %vm916 = vcmp.le.f32.partialorder %v870, %v373
  %vm917 = vcmp.le.f32.partialorder %v870, %v377
  %vm918 = vcmp.le.f32.partialorder %v870, %v381
  %vm919 = vcmp.le.f32.partialorder %v870, %v385
  %vm920 = vcmp.le.f32.partialorder %v870, %v389
  %vm921 = vcmp.le.f32.partialorder %v870, %v393
  %vm922 = vcmp.le.f32.partialorder %v870, %v397
  %vm923 = vcmp.le.f32.partialorder %v874, %v404
  %vm924 = vcmp.le.f32.partialorder %v874, %v408
  %vm925 = vcmp.le.f32.partialorder %v874, %v412
  %vm926 = vcmp.le.f32.partialorder %v874, %v416
  %vm927 = vcmp.le.f32.partialorder %v874, %v420
  %vm928 = vcmp.le.f32.partialorder %v874, %v424
  %vm929 = vcmp.le.f32.partialorder %v874, %v428
  %vm930 = vcmp.le.f32.partialorder %v874, %v432
  %vm931 = vcmp.le.f32.partialorder %v874, %v436
  %vm932 = vcmp.le.f32.partialorder %v874, %v440
  %vm933 = vcmp.le.f32.partialorder %v874, %v444
  %vm934 = vcmp.le.f32.partialorder %v874, %v448
  %vm935 = vcmp.le.f32.partialorder %v874, %v452
  %vm936 = vcmp.le.f32.partialorder %v874, %v456
  %vm937 = vcmp.le.f32.partialorder %v874, %v460
  %vm938 = vcmp.le.f32.partialorder %v874, %v464
  %vm939 = vcmp.le.f32.partialorder %v878, %v471
  %vm940 = vcmp.le.f32.partialorder %v878, %v475
  %vm941 = vcmp.le.f32.partialorder %v878, %v479
  %vm942 = vcmp.le.f32.partialorder %v878, %v483
  %vm943 = vcmp.le.f32.partialorder %v878, %v487
  %vm944 = vcmp.le.f32.partialorder %v878, %v491
  %vm945 = vcmp.le.f32.partialorder %v878, %v495
  %vm946 = vcmp.le.f32.partialorder %v878, %v499
  %vm947 = vcmp.le.f32.partialorder %v878, %v503
  %vm948 = vcmp.le.f32.partialorder %v878, %v507
  %vm949 = vcmp.le.f32.partialorder %v878, %v511
  %vm950 = vcmp.le.f32.partialorder %v878, %v515
  %vm951 = vcmp.le.f32.partialorder %v878, %v519
  %vm952 = vcmp.le.f32.partialorder %v878, %v523
  %vm953 = vcmp.le.f32.partialorder %v878, %v527
  %vm954 = vcmp.le.f32.partialorder %v878, %v531
  %vm955 = vcmp.le.f32.partialorder %v882, %v538
  %vm956 = vcmp.le.f32.partialorder %v882, %v542
  %vm957 = vcmp.le.f32.partialorder %v882, %v546
  %vm958 = vcmp.le.f32.partialorder %v882, %v550
  %vm959 = vcmp.le.f32.partialorder %v882, %v554
  %vm960 = vcmp.le.f32.partialorder %v882, %v558
  %vm961 = vcmp.le.f32.partialorder %v882, %v562
  %vm962 = vcmp.le.f32.partialorder %v882, %v566
  %vm963 = vcmp.le.f32.partialorder %v882, %v570
  %vm964 = vcmp.le.f32.partialorder %v882, %v574
  %vm965 = vcmp.le.f32.partialorder %v882, %v578
  %vm966 = vcmp.le.f32.partialorder %v882, %v582
  %vm967 = vcmp.le.f32.partialorder %v882, %v586
  %vm968 = vcmp.le.f32.partialorder %v882, %v590
  %vm969 = vcmp.le.f32.partialorder %v882, %v594
  %vm970 = vcmp.le.f32.partialorder %v882, %v598
  %vm971 = vcmp.le.f32.partialorder %v886, %v605
  %vm972 = vcmp.le.f32.partialorder %v886, %v609
  %vm973 = vcmp.le.f32.partialorder %v886, %v613
  %vm974 = vcmp.le.f32.partialorder %v886, %v617
  %vm975 = vcmp.le.f32.partialorder %v886, %v621
  %vm976 = vcmp.le.f32.partialorder %v886, %v625
  %vm977 = vcmp.le.f32.partialorder %v886, %v629
  %vm978 = vcmp.le.f32.partialorder %v886, %v633
  %vm979 = vcmp.le.f32.partialorder %v886, %v637
  %vm980 = vcmp.le.f32.partialorder %v886, %v641
  %vm981 = vcmp.le.f32.partialorder %v886, %v645
  %vm982 = vcmp.le.f32.partialorder %v886, %v649
  %vm983 = vcmp.le.f32.partialorder %v886, %v653
  %vm984 = vcmp.le.f32.partialorder %v886, %v657
  %vm985 = vcmp.le.f32.partialorder %v886, %v661
  %vm986 = vcmp.le.f32.partialorder %v886, %v665
  %vm987 = vcmp.le.f32.partialorder %v890, %v672
  %vm988 = vcmp.le.f32.partialorder %v890, %v676
  %vm989 = vcmp.le.f32.partialorder %v890, %v680
  %vm990 = vcmp.le.f32.partialorder %v890, %v684
  %vm991 = vcmp.le.f32.partialorder %v890, %v688
  %vm992 = vcmp.le.f32.partialorder %v890, %v692
  %vm993 = vcmp.le.f32.partialorder %v890, %v696
  %vm994 = vcmp.le.f32.partialorder %v890, %v700
  %vm995 = vcmp.le.f32.partialorder %v890, %v704
  %vm996 = vcmp.le.f32.partialorder %v890, %v708
  %vm997 = vcmp.le.f32.partialorder %v890, %v712
  %vm998 = vcmp.le.f32.partialorder %v890, %v716
  %vm999 = vcmp.le.f32.partialorder %v890, %v720
  %vm1000 = vcmp.le.f32.partialorder %v890, %v724
  %vm1001 = vcmp.le.f32.partialorder %v890, %v728
  %vm1002 = vcmp.le.f32.partialorder %v890, %v732
  %vm1003 = vcmp.le.f32.partialorder %v894, %v739
  %vm1004 = vcmp.le.f32.partialorder %v894, %v743
  %vm1005 = vcmp.le.f32.partialorder %v894, %v747
  %vm1006 = vcmp.le.f32.partialorder %v894, %v751
  %vm1007 = vcmp.le.f32.partialorder %v894, %v755
  %vm1008 = vcmp.le.f32.partialorder %v894, %v759
  %vm1009 = vcmp.le.f32.partialorder %v894, %v763
  %vm1010 = vcmp.le.f32.partialorder %v894, %v767
  %vm1011 = vcmp.le.f32.partialorder %v894, %v771
  %vm1012 = vcmp.le.f32.partialorder %v894, %v775
  %vm1013 = vcmp.le.f32.partialorder %v894, %v779
  %vm1014 = vcmp.le.f32.partialorder %v894, %v783
  %vm1015 = vcmp.le.f32.partialorder %v894, %v787
  %vm1016 = vcmp.le.f32.partialorder %v894, %v791
  %vm1017 = vcmp.le.f32.partialorder %v894, %v795
  %vm1018 = vcmp.le.f32.partialorder %v894, %v799
  %vm1019 = vcmp.le.f32.partialorder %v898, %v806
  %vm1020 = vcmp.le.f32.partialorder %v898, %v810
  %vm1021 = vcmp.le.f32.partialorder %v898, %v814
  %vm1022 = vcmp.le.f32.partialorder %v898, %v818
  %vm1023 = vcmp.le.f32.partialorder %v898, %v822
  %vm1024 = vcmp.le.f32.partialorder %v898, %v826
  %vm1025 = vcmp.le.f32.partialorder %v898, %v830
  %vm1026 = vcmp.le.f32.partialorder %v898, %v834
  %vm1027 = vcmp.le.f32.partialorder %v898, %v838
  %vm1028 = vcmp.le.f32.partialorder %v898, %v842
  %vm1029 = vcmp.le.f32.partialorder %v898, %v846
  %vm1030 = vcmp.le.f32.partialorder %v898, %v850
  %vm1031 = vcmp.le.f32.partialorder %v898, %v854
  %vm1032 = vcmp.le.f32.partialorder %v898, %v858
  %vm1033 = vcmp.le.f32.partialorder %v898, %v862
  %vm1034 = vcmp.le.f32.partialorder %v898, %v866
  %v1035 = vsel %vm907, 1, 0
  %v1036 = vsel %vm908, 1, 0
  %v1037 = vsel %vm909, 1, 0
  %v1038 = vsel %vm910, 1, 0
  %v1039 = vsel %vm911, 1, 0
  %v1040 = vsel %vm912, 1, 0
  %v1041 = vsel %vm913, 1, 0
  %v1042 = vsel %vm914, 1, 0
  %v1043 = vsel %vm915, 1, 0
  %v1044 = vsel %vm916, 1, 0
  %v1045 = vsel %vm917, 1, 0
  %v1046 = vsel %vm918, 1, 0
  %v1047 = vsel %vm919, 1, 0
  %v1048 = vsel %vm920, 1, 0
  %v1049 = vsel %vm921, 1, 0
  %v1050 = vsel %vm922, 1, 0
  %v1051 = vsel %vm923, 1, 0
  %v1052 = vsel %vm924, 1, 0
  %v1053 = vsel %vm925, 1, 0
  %v1054 = vsel %vm926, 1, 0
  %v1055 = vsel %vm927, 1, 0
  %v1056 = vsel %vm928, 1, 0
  %v1057 = vsel %vm929, 1, 0
  %v1058 = vsel %vm930, 1, 0
  %v1059 = vsel %vm931, 1, 0
  %v1060 = vsel %vm932, 1, 0
  %v1061 = vsel %vm933, 1, 0
  %v1062 = vsel %vm934, 1, 0
  %v1063 = vsel %vm935, 1, 0
  %v1064 = vsel %vm936, 1, 0
  %v1065 = vsel %vm937, 1, 0
  %v1066 = vsel %vm938, 1, 0
  %v1067 = vsel %vm939, 1, 0
  %v1068 = vsel %vm940, 1, 0
  %v1069 = vsel %vm941, 1, 0
  %v1070 = vsel %vm942, 1, 0
  %v1071 = vsel %vm943, 1, 0
  %v1072 = vsel %vm944, 1, 0
  %v1073 = vsel %vm945, 1, 0
  %v1074 = vsel %vm946, 1, 0
  %v1075 = vsel %vm947, 1, 0
  %v1076 = vsel %vm948, 1, 0
  %v1077 = vsel %vm949, 1, 0
  %v1078 = vsel %vm950, 1, 0
  %v1079 = vsel %vm951, 1, 0
  %v1080 = vsel %vm952, 1, 0
  %v1081 = vsel %vm953, 1, 0
  %v1082 = vsel %vm954, 1, 0
  %v1083 = vsel %vm955, 1, 0
  %v1084 = vsel %vm956, 1, 0
  %v1085 = vsel %vm957, 1, 0
  %v1086 = vsel %vm958, 1, 0
  %v1087 = vsel %vm959, 1, 0
  %v1088 = vsel %vm960, 1, 0
  %v1089 = vsel %vm961, 1, 0
  %v1090 = vsel %vm962, 1, 0
  %v1091 = vsel %vm963, 1, 0
  %v1092 = vsel %vm964, 1, 0
  %v1093 = vsel %vm965, 1, 0
  %v1094 = vsel %vm966, 1, 0
  %v1095 = vsel %vm967, 1, 0
  %v1096 = vsel %vm968, 1, 0
  %v1097 = vsel %vm969, 1, 0
  %v1098 = vsel %vm970, 1, 0
  %v1099 = vsel %vm971, 1, 0
  %v1100 = vsel %vm972, 1, 0
  %v1101 = vsel %vm973, 1, 0
  %v1102 = vsel %vm974, 1, 0
  %v1103 = vsel %vm975, 1, 0
  %v1104 = vsel %vm976, 1, 0
  %v1105 = vsel %vm977, 1, 0
  %v1106 = vsel %vm978, 1, 0
  %v1107 = vsel %vm979, 1, 0
  %v1108 = vsel %vm980, 1, 0
  %v1109 = vsel %vm981, 1, 0
  %v1110 = vsel %vm982, 1, 0
  %v1111 = vsel %vm983, 1, 0
  %v1112 = vsel %vm984, 1, 0
  %v1113 = vsel %vm985, 1, 0
  %v1114 = vsel %vm986, 1, 0
  %v1115 = vsel %vm987, 1, 0
  %v1116 = vsel %vm988, 1, 0
  %v1117 = vsel %vm989, 1, 0
  %v1118 = vsel %vm990, 1, 0
  %v1119 = vsel %vm991, 1, 0
  %v1120 = vsel %vm992, 1, 0
  %v1121 = vsel %vm993, 1, 0
  %v1122 = vsel %vm994, 1, 0
  %v1123 = vsel %vm995, 1, 0
  %v1124 = vsel %vm996, 1, 0
  %v1125 = vsel %vm997, 1, 0
  %v1126 = vsel %vm998, 1, 0
  %v1127 = vsel %vm999, 1, 0
  %v1128 = vsel %vm1000, 1, 0
  %v1129 = vsel %vm1001, 1, 0
  %v1130 = vsel %vm1002, 1, 0
  %v1131 = vsel %vm1003, 1, 0
  %v1132 = vsel %vm1004, 1, 0
  %v1133 = vsel %vm1005, 1, 0
  %v1134 = vsel %vm1006, 1, 0
  %v1135 = vsel %vm1007, 1, 0
  %v1136 = vsel %vm1008, 1, 0
  %v1137 = vsel %vm1009, 1, 0
  %v1138 = vsel %vm1010, 1, 0
  %v1139 = vsel %vm1011, 1, 0
  %v1140 = vsel %vm1012, 1, 0
  %v1141 = vsel %vm1013, 1, 0
  %v1142 = vsel %vm1014, 1, 0
  %v1143 = vsel %vm1015, 1, 0
  %v1144 = vsel %vm1016, 1, 0
  %v1145 = vsel %vm1017, 1, 0
  %v1146 = vsel %vm1018, 1, 0
  %v1147 = vsel %vm1019, 1, 0
  %v1148 = vsel %vm1020, 1, 0
  %v1149 = vsel %vm1021, 1, 0
  %v1150 = vsel %vm1022, 1, 0
  %v1151 = vsel %vm1023, 1, 0
  %v1152 = vsel %vm1024, 1, 0
  %v1153 = vsel %vm1025, 1, 0
  %v1154 = vsel %vm1026, 1, 0
  %v1155 = vsel %vm1027, 1, 0
  %v1156 = vsel %vm1028, 1, 0
  %v1157 = vsel %vm1029, 1, 0
  %v1158 = vsel %vm1030, 1, 0
  %v1159 = vsel %vm1031, 1, 0
  %v1160 = vsel %vm1032, 1, 0
  %v1161 = vsel %vm1033, 1, 0
  %v1162 = vsel %vm1034, 1, 0
  %v1163 = vcvt.s32.f32 %v1035
  %v1164 = vcvt.s32.f32 %v1036
  %v1165 = vcvt.s32.f32 %v1037
  %v1166 = vcvt.s32.f32 %v1038
  %v1167 = vcvt.s32.f32 %v1039
  %v1168 = vcvt.s32.f32 %v1040
  %v1169 = vcvt.s32.f32 %v1041
  %v1170 = vcvt.s32.f32 %v1042
  %v1171 = vcvt.s32.f32 %v1043
  %v1172 = vcvt.s32.f32 %v1044
  %v1173 = vcvt.s32.f32 %v1045
  %v1174 = vcvt.s32.f32 %v1046
  %v1175 = vcvt.s32.f32 %v1047
  %v1176 = vcvt.s32.f32 %v1048
  %v1177 = vcvt.s32.f32 %v1049
  %v1178 = vcvt.s32.f32 %v1050
  %v1179 = vcvt.s32.f32 %v1051
  %v1180 = vcvt.s32.f32 %v1052
  %v1181 = vcvt.s32.f32 %v1053
  %v1182 = vcvt.s32.f32 %v1054
  %v1183 = vcvt.s32.f32 %v1055
  %v1184 = vcvt.s32.f32 %v1056
  %v1185 = vcvt.s32.f32 %v1057
  %v1186 = vcvt.s32.f32 %v1058
  %v1187 = vcvt.s32.f32 %v1059
  %v1188 = vcvt.s32.f32 %v1060
  %v1189 = vcvt.s32.f32 %v1061
  %v1190 = vcvt.s32.f32 %v1062
  %v1191 = vcvt.s32.f32 %v1063
  %v1192 = vcvt.s32.f32 %v1064
  %v1193 = vcvt.s32.f32 %v1065
  %v1194 = vcvt.s32.f32 %v1066
  %v1195 = vcvt.s32.f32 %v1067
  %v1196 = vcvt.s32.f32 %v1068
  %v1197 = vcvt.s32.f32 %v1069
  %v1198 = vcvt.s32.f32 %v1070
  %v1199 = vcvt.s32.f32 %v1071
  %v1200 = vcvt.s32.f32 %v1072
  %v1201 = vcvt.s32.f32 %v1073
  %v1202 = vcvt.s32.f32 %v1074
  %v1203 = vcvt.s32.f32 %v1075
  %v1204 = vcvt.s32.f32 %v1076
  %v1205 = vcvt.s32.f32 %v1077
  %v1206 = vcvt.s32.f32 %v1078
  %v1207 = vcvt.s32.f32 %v1079
  %v1208 = vcvt.s32.f32 %v1080
  %v1209 = vcvt.s32.f32 %v1081
  %v1210 = vcvt.s32.f32 %v1082
  %v1211 = vcvt.s32.f32 %v1083
  %v1212 = vcvt.s32.f32 %v1084
  %v1213 = vcvt.s32.f32 %v1085
  %v1214 = vcvt.s32.f32 %v1086
  %v1215 = vcvt.s32.f32 %v1087
  %v1216 = vcvt.s32.f32 %v1088
  %v1217 = vcvt.s32.f32 %v1089
  %v1218 = vcvt.s32.f32 %v1090
  %v1219 = vcvt.s32.f32 %v1091
  %v1220 = vcvt.s32.f32 %v1092
  %v1221 = vcvt.s32.f32 %v1093
  %v1222 = vcvt.s32.f32 %v1094
  %v1223 = vcvt.s32.f32 %v1095
  %v1224 = vcvt.s32.f32 %v1096
  %v1225 = vcvt.s32.f32 %v1097
  %v1226 = vcvt.s32.f32 %v1098
  %v1227 = vcvt.s32.f32 %v1099
  %v1228 = vcvt.s32.f32 %v1100
  %v1229 = vcvt.s32.f32 %v1101
  %v1230 = vcvt.s32.f32 %v1102
  %v1231 = vcvt.s32.f32 %v1103
  %v1232 = vcvt.s32.f32 %v1104
  %v1233 = vcvt.s32.f32 %v1105
  %v1234 = vcvt.s32.f32 %v1106
  %v1235 = vcvt.s32.f32 %v1107
  %v1236 = vcvt.s32.f32 %v1108
  %v1237 = vcvt.s32.f32 %v1109
  %v1238 = vcvt.s32.f32 %v1110
  %v1239 = vcvt.s32.f32 %v1111
  %v1240 = vcvt.s32.f32 %v1112
  %v1241 = vcvt.s32.f32 %v1113
  %v1242 = vcvt.s32.f32 %v1114
  %v1243 = vcvt.s32.f32 %v1115
  %v1244 = vcvt.s32.f32 %v1116
  %v1245 = vcvt.s32.f32 %v1117
  %v1246 = vcvt.s32.f32 %v1118
  %v1247 = vcvt.s32.f32 %v1119
  %v1248 = vcvt.s32.f32 %v1120
  %v1249 = vcvt.s32.f32 %v1121
  %v1250 = vcvt.s32.f32 %v1122
  %v1251 = vcvt.s32.f32 %v1123
  %v1252 = vcvt.s32.f32 %v1124
  %v1253 = vcvt.s32.f32 %v1125
  %v1254 = vcvt.s32.f32 %v1126
  %v1255 = vcvt.s32.f32 %v1127
  %v1256 = vcvt.s32.f32 %v1128
  %v1257 = vcvt.s32.f32 %v1129
  %v1258 = vcvt.s32.f32 %v1130
  %v1259 = vcvt.s32.f32 %v1131
  %v1260 = vcvt.s32.f32 %v1132
  %v1261 = vcvt.s32.f32 %v1133
  %v1262 = vcvt.s32.f32 %v1134
  %v1263 = vcvt.s32.f32 %v1135
  %v1264 = vcvt.s32.f32 %v1136
  %v1265 = vcvt.s32.f32 %v1137
  %v1266 = vcvt.s32.f32 %v1138
  %v1267 = vcvt.s32.f32 %v1139
  %v1268 = vcvt.s32.f32 %v1140
  %v1269 = vcvt.s32.f32 %v1141
  %v1270 = vcvt.s32.f32 %v1142
  %v1271 = vcvt.s32.f32 %v1143
  %v1272 = vcvt.s32.f32 %v1144
  %v1273 = vcvt.s32.f32 %v1145
  %v1274 = vcvt.s32.f32 %v1146
  %v1275 = vcvt.s32.f32 %v1147
  %v1276 = vcvt.s32.f32 %v1148
  %v1277 = vcvt.s32.f32 %v1149
  %v1278 = vcvt.s32.f32 %v1150
  %v1279 = vcvt.s32.f32 %v1151
  %v1280 = vcvt.s32.f32 %v1152
  %v1281 = vcvt.s32.f32 %v1153
  %v1282 = vcvt.s32.f32 %v1154
  %v1283 = vcvt.s32.f32 %v1155
  %v1284 = vcvt.s32.f32 %v1156
  %v1285 = vcvt.s32.f32 %v1157
  %v1286 = vcvt.s32.f32 %v1158
  %v1287 = vcvt.s32.f32 %v1159
  %v1288 = vcvt.s32.f32 %v1160
  %v1289 = vcvt.s32.f32 %v1161
  %v1290 = vcvt.s32.f32 %v1162
  %v1291 = vpack.c.bf16 %v1164, %v1163
  %v1292 = vpack.c.bf16 %v1166, %v1165
  %v1293 = vpack.c.bf16 %v1168, %v1167
  %v1294 = vpack.c.bf16 %v1170, %v1169
  %v1295 = vpack.c.bf16 %v1172, %v1171
  %v1296 = vpack.c.bf16 %v1174, %v1173
  %v1297 = vpack.c.bf16 %v1176, %v1175
  %v1298 = vpack.c.bf16 %v1178, %v1177
  %v1299 = vpack.c.bf16 %v1180, %v1179
  %v1300 = vpack.c.bf16 %v1182, %v1181
  %v1301 = vpack.c.bf16 %v1184, %v1183
  %v1302 = vpack.c.bf16 %v1186, %v1185
  %v1303 = vpack.c.bf16 %v1188, %v1187
  %v1304 = vpack.c.bf16 %v1190, %v1189
  %v1305 = vpack.c.bf16 %v1192, %v1191
  %v1306 = vpack.c.bf16 %v1194, %v1193
  %v1307 = vpack.c.bf16 %v1196, %v1195
  %v1308 = vpack.c.bf16 %v1198, %v1197
  %v1309 = vpack.c.bf16 %v1200, %v1199
  %v1310 = vpack.c.bf16 %v1202, %v1201
  %v1311 = vpack.c.bf16 %v1204, %v1203
  %v1312 = vpack.c.bf16 %v1206, %v1205
  %v1313 = vpack.c.bf16 %v1208, %v1207
  %v1314 = vpack.c.bf16 %v1210, %v1209
  %v1315 = vpack.c.bf16 %v1212, %v1211
  %v1316 = vpack.c.bf16 %v1214, %v1213
  %v1317 = vpack.c.bf16 %v1216, %v1215
  %v1318 = vpack.c.bf16 %v1218, %v1217
  %v1319 = vpack.c.bf16 %v1220, %v1219
  %v1320 = vpack.c.bf16 %v1222, %v1221
  %v1321 = vpack.c.bf16 %v1224, %v1223
  %v1322 = vpack.c.bf16 %v1226, %v1225
  %v1323 = vpack.c.bf16 %v1228, %v1227
  %v1324 = vpack.c.bf16 %v1230, %v1229
  %v1325 = vpack.c.bf16 %v1232, %v1231
  %v1326 = vpack.c.bf16 %v1234, %v1233
  %v1327 = vpack.c.bf16 %v1236, %v1235
  %v1328 = vpack.c.bf16 %v1238, %v1237
  %v1329 = vpack.c.bf16 %v1240, %v1239
  %v1330 = vpack.c.bf16 %v1242, %v1241
  %v1331 = vpack.c.bf16 %v1244, %v1243
  %v1332 = vpack.c.bf16 %v1246, %v1245
  %v1333 = vpack.c.bf16 %v1248, %v1247
  %v1334 = vpack.c.bf16 %v1250, %v1249
  %v1335 = vpack.c.bf16 %v1252, %v1251
  %v1336 = vpack.c.bf16 %v1254, %v1253
  %v1337 = vpack.c.bf16 %v1256, %v1255
  %v1338 = vpack.c.bf16 %v1258, %v1257
  %v1339 = vpack.c.bf16 %v1260, %v1259
  %v1340 = vpack.c.bf16 %v1262, %v1261
  %v1341 = vpack.c.bf16 %v1264, %v1263
  %v1342 = vpack.c.bf16 %v1266, %v1265
  %v1343 = vpack.c.bf16 %v1268, %v1267
  %v1344 = vpack.c.bf16 %v1270, %v1269
  %v1345 = vpack.c.bf16 %v1272, %v1271
  %v1346 = vpack.c.bf16 %v1274, %v1273
  %v1347 = vpack.c.bf16 %v1276, %v1275
  %v1348 = vpack.c.bf16 %v1278, %v1277
  %v1349 = vpack.c.bf16 %v1280, %v1279
  %v1350 = vpack.c.bf16 %v1282, %v1281
  %v1351 = vpack.c.bf16 %v1284, %v1283
  %v1352 = vpack.c.bf16 %v1286, %v1285
  %v1353 = vpack.c.bf16 %v1288, %v1287
  %v1354 = vpack.c.bf16 %v1290, %v1289
  %vm1355 = vcmp.ge.f32.partialorder %v870, %v337
  %vm1356 = vcmp.ge.f32.partialorder %v870, %v341
  %vm1357 = vcmp.ge.f32.partialorder %v870, %v345
  %vm1358 = vcmp.ge.f32.partialorder %v870, %v349
  %vm1359 = vcmp.ge.f32.partialorder %v870, %v353
  %vm1360 = vcmp.ge.f32.partialorder %v870, %v357
  %vm1361 = vcmp.ge.f32.partialorder %v870, %v361
  %vm1362 = vcmp.ge.f32.partialorder %v870, %v365
  %vm1363 = vcmp.ge.f32.partialorder %v870, %v369
  %vm1364 = vcmp.ge.f32.partialorder %v870, %v373
  %vm1365 = vcmp.ge.f32.partialorder %v870, %v377
  %vm1366 = vcmp.ge.f32.partialorder %v870, %v381
  %vm1367 = vcmp.ge.f32.partialorder %v870, %v385
  %vm1368 = vcmp.ge.f32.partialorder %v870, %v389
  %vm1369 = vcmp.ge.f32.partialorder %v870, %v393
  %vm1370 = vcmp.ge.f32.partialorder %v870, %v397
  %vm1371 = vcmp.ge.f32.partialorder %v874, %v404
  %vm1372 = vcmp.ge.f32.partialorder %v874, %v408
  %vm1373 = vcmp.ge.f32.partialorder %v874, %v412
  %vm1374 = vcmp.ge.f32.partialorder %v874, %v416
  %vm1375 = vcmp.ge.f32.partialorder %v874, %v420
  %vm1376 = vcmp.ge.f32.partialorder %v874, %v424
  %vm1377 = vcmp.ge.f32.partialorder %v874, %v428
  %vm1378 = vcmp.ge.f32.partialorder %v874, %v432
  %vm1379 = vcmp.ge.f32.partialorder %v874, %v436
  %vm1380 = vcmp.ge.f32.partialorder %v874, %v440
  %vm1381 = vcmp.ge.f32.partialorder %v874, %v444
  %vm1382 = vcmp.ge.f32.partialorder %v874, %v448
  %vm1383 = vcmp.ge.f32.partialorder %v874, %v452
  %vm1384 = vcmp.ge.f32.partialorder %v874, %v456
  %vm1385 = vcmp.ge.f32.partialorder %v874, %v460
  %vm1386 = vcmp.ge.f32.partialorder %v874, %v464
  %vm1387 = vcmp.ge.f32.partialorder %v878, %v471
  %vm1388 = vcmp.ge.f32.partialorder %v878, %v475
  %vm1389 = vcmp.ge.f32.partialorder %v878, %v479
  %vm1390 = vcmp.ge.f32.partialorder %v878, %v483
  %vm1391 = vcmp.ge.f32.partialorder %v878, %v487
  %vm1392 = vcmp.ge.f32.partialorder %v878, %v491
  %vm1393 = vcmp.ge.f32.partialorder %v878, %v495
  %vm1394 = vcmp.ge.f32.partialorder %v878, %v499
  %vm1395 = vcmp.ge.f32.partialorder %v878, %v503
  %vm1396 = vcmp.ge.f32.partialorder %v878, %v507
  %vm1397 = vcmp.ge.f32.partialorder %v878, %v511
  %vm1398 = vcmp.ge.f32.partialorder %v878, %v515
  %vm1399 = vcmp.ge.f32.partialorder %v878, %v519
  %vm1400 = vcmp.ge.f32.partialorder %v878, %v523
  %vm1401 = vcmp.ge.f32.partialorder %v878, %v527
  %vm1402 = vcmp.ge.f32.partialorder %v878, %v531
  %vm1403 = vcmp.ge.f32.partialorder %v882, %v538
  %vm1404 = vcmp.ge.f32.partialorder %v882, %v542
  %vm1405 = vcmp.ge.f32.partialorder %v882, %v546
  %vm1406 = vcmp.ge.f32.partialorder %v882, %v550
  %vm1407 = vcmp.ge.f32.partialorder %v882, %v554
  %vm1408 = vcmp.ge.f32.partialorder %v882, %v558
  %vm1409 = vcmp.ge.f32.partialorder %v882, %v562
  %vm1410 = vcmp.ge.f32.partialorder %v882, %v566
  %vm1411 = vcmp.ge.f32.partialorder %v882, %v570
  %vm1412 = vcmp.ge.f32.partialorder %v882, %v574
  %vm1413 = vcmp.ge.f32.partialorder %v882, %v578
  %vm1414 = vcmp.ge.f32.partialorder %v882, %v582
  %vm1415 = vcmp.ge.f32.partialorder %v882, %v586
  %vm1416 = vcmp.ge.f32.partialorder %v882, %v590
  %vm1417 = vcmp.ge.f32.partialorder %v882, %v594
  %vm1418 = vcmp.ge.f32.partialorder %v882, %v598
  %vm1419 = vcmp.ge.f32.partialorder %v886, %v605
  %vm1420 = vcmp.ge.f32.partialorder %v886, %v609
  %vm1421 = vcmp.ge.f32.partialorder %v886, %v613
  %vm1422 = vcmp.ge.f32.partialorder %v886, %v617
  %vm1423 = vcmp.ge.f32.partialorder %v886, %v621
  %vm1424 = vcmp.ge.f32.partialorder %v886, %v625
  %vm1425 = vcmp.ge.f32.partialorder %v886, %v629
  %vm1426 = vcmp.ge.f32.partialorder %v886, %v633
  %vm1427 = vcmp.ge.f32.partialorder %v886, %v637
  %vm1428 = vcmp.ge.f32.partialorder %v886, %v641
  %vm1429 = vcmp.ge.f32.partialorder %v886, %v645
  %vm1430 = vcmp.ge.f32.partialorder %v886, %v649
  %vm1431 = vcmp.ge.f32.partialorder %v886, %v653
  %vm1432 = vcmp.ge.f32.partialorder %v886, %v657
  %vm1433 = vcmp.ge.f32.partialorder %v886, %v661
  %vm1434 = vcmp.ge.f32.partialorder %v886, %v665
  %vm1435 = vcmp.ge.f32.partialorder %v890, %v672
  %vm1436 = vcmp.ge.f32.partialorder %v890, %v676
  %vm1437 = vcmp.ge.f32.partialorder %v890, %v680
  %vm1438 = vcmp.ge.f32.partialorder %v890, %v684
  %vm1439 = vcmp.ge.f32.partialorder %v890, %v688
  %vm1440 = vcmp.ge.f32.partialorder %v890, %v692
  %vm1441 = vcmp.ge.f32.partialorder %v890, %v696
  %vm1442 = vcmp.ge.f32.partialorder %v890, %v700
  %vm1443 = vcmp.ge.f32.partialorder %v890, %v704
  %vm1444 = vcmp.ge.f32.partialorder %v890, %v708
  %vm1445 = vcmp.ge.f32.partialorder %v890, %v712
  %vm1446 = vcmp.ge.f32.partialorder %v890, %v716
  %vm1447 = vcmp.ge.f32.partialorder %v890, %v720
  %vm1448 = vcmp.ge.f32.partialorder %v890, %v724
  %vm1449 = vcmp.ge.f32.partialorder %v890, %v728
  %vm1450 = vcmp.ge.f32.partialorder %v890, %v732
  %vm1451 = vcmp.ge.f32.partialorder %v894, %v739
  %vm1452 = vcmp.ge.f32.partialorder %v894, %v743
  %vm1453 = vcmp.ge.f32.partialorder %v894, %v747
  %vm1454 = vcmp.ge.f32.partialorder %v894, %v751
  %vm1455 = vcmp.ge.f32.partialorder %v894, %v755
  %vm1456 = vcmp.ge.f32.partialorder %v894, %v759
  %vm1457 = vcmp.ge.f32.partialorder %v894, %v763
  %vm1458 = vcmp.ge.f32.partialorder %v894, %v767
  %vm1459 = vcmp.ge.f32.partialorder %v894, %v771
  %vm1460 = vcmp.ge.f32.partialorder %v894, %v775
  %vm1461 = vcmp.ge.f32.partialorder %v894, %v779
  %vm1462 = vcmp.ge.f32.partialorder %v894, %v783
  %vm1463 = vcmp.ge.f32.partialorder %v894, %v787
  %vm1464 = vcmp.ge.f32.partialorder %v894, %v791
  %vm1465 = vcmp.ge.f32.partialorder %v894, %v795
  %vm1466 = vcmp.ge.f32.partialorder %v894, %v799
  %vm1467 = vcmp.ge.f32.partialorder %v898, %v806
  %vm1468 = vcmp.ge.f32.partialorder %v898, %v810
  %vm1469 = vcmp.ge.f32.partialorder %v898, %v814
  %vm1470 = vcmp.ge.f32.partialorder %v898, %v818
  %vm1471 = vcmp.ge.f32.partialorder %v898, %v822
  %vm1472 = vcmp.ge.f32.partialorder %v898, %v826
  %vm1473 = vcmp.ge.f32.partialorder %v898, %v830
  %vm1474 = vcmp.ge.f32.partialorder %v898, %v834
  %vm1475 = vcmp.ge.f32.partialorder %v898, %v838
  %vm1476 = vcmp.ge.f32.partialorder %v898, %v842
  %vm1477 = vcmp.ge.f32.partialorder %v898, %v846
  %vm1478 = vcmp.ge.f32.partialorder %v898, %v850
  %vm1479 = vcmp.ge.f32.partialorder %v898, %v854
  %vm1480 = vcmp.ge.f32.partialorder %v898, %v858
  %vm1481 = vcmp.ge.f32.partialorder %v898, %v862
  %vm1482 = vcmp.ge.f32.partialorder %v898, %v866
  %v1483 = vsel %vm1355, 1, 0
  %v1484 = vsel %vm1356, 1, 0
  %v1485 = vsel %vm1357, 1, 0
  %v1486 = vsel %vm1358, 1, 0
  %v1487 = vsel %vm1359, 1, 0
  %v1488 = vsel %vm1360, 1, 0
  %v1489 = vsel %vm1361, 1, 0
  %v1490 = vsel %vm1362, 1, 0
  %v1491 = vsel %vm1363, 1, 0
  %v1492 = vsel %vm1364, 1, 0
  %v1493 = vsel %vm1365, 1, 0
  %v1494 = vsel %vm1366, 1, 0
  %v1495 = vsel %vm1367, 1, 0
  %v1496 = vsel %vm1368, 1, 0
  %v1497 = vsel %vm1369, 1, 0
  %v1498 = vsel %vm1370, 1, 0
  %v1499 = vsel %vm1371, 1, 0
  %v1500 = vsel %vm1372, 1, 0
  %v1501 = vsel %vm1373, 1, 0
  %v1502 = vsel %vm1374, 1, 0
  %v1503 = vsel %vm1375, 1, 0
  %v1504 = vsel %vm1376, 1, 0
  %v1505 = vsel %vm1377, 1, 0
  %v1506 = vsel %vm1378, 1, 0
  %v1507 = vsel %vm1379, 1, 0
  %v1508 = vsel %vm1380, 1, 0
  %v1509 = vsel %vm1381, 1, 0
  %v1510 = vsel %vm1382, 1, 0
  %v1511 = vsel %vm1383, 1, 0
  %v1512 = vsel %vm1384, 1, 0
  %v1513 = vsel %vm1385, 1, 0
  %v1514 = vsel %vm1386, 1, 0
  %v1515 = vsel %vm1387, 1, 0
  %v1516 = vsel %vm1388, 1, 0
  %v1517 = vsel %vm1389, 1, 0
  %v1518 = vsel %vm1390, 1, 0
  %v1519 = vsel %vm1391, 1, 0
  %v1520 = vsel %vm1392, 1, 0
  %v1521 = vsel %vm1393, 1, 0
  %v1522 = vsel %vm1394, 1, 0
  %v1523 = vsel %vm1395, 1, 0
  %v1524 = vsel %vm1396, 1, 0
  %v1525 = vsel %vm1397, 1, 0
  %v1526 = vsel %vm1398, 1, 0
  %v1527 = vsel %vm1399, 1, 0
  %v1528 = vsel %vm1400, 1, 0
  %v1529 = vsel %vm1401, 1, 0
  %v1530 = vsel %vm1402, 1, 0
  %v1531 = vsel %vm1403, 1, 0
  %v1532 = vsel %vm1404, 1, 0
  %v1533 = vsel %vm1405, 1, 0
  %v1534 = vsel %vm1406, 1, 0
  %v1535 = vsel %vm1407, 1, 0
  %v1536 = vsel %vm1408, 1, 0
  %v1537 = vsel %vm1409, 1, 0
  %v1538 = vsel %vm1410, 1, 0
  %v1539 = vsel %vm1411, 1, 0
  %v1540 = vsel %vm1412, 1, 0
  %v1541 = vsel %vm1413, 1, 0
  %v1542 = vsel %vm1414, 1, 0
  %v1543 = vsel %vm1415, 1, 0
  %v1544 = vsel %vm1416, 1, 0
  %v1545 = vsel %vm1417, 1, 0
  %v1546 = vsel %vm1418, 1, 0
  %v1547 = vsel %vm1419, 1, 0
  %v1548 = vsel %vm1420, 1, 0
  %v1549 = vsel %vm1421, 1, 0
  %v1550 = vsel %vm1422, 1, 0
  %v1551 = vsel %vm1423, 1, 0
  %v1552 = vsel %vm1424, 1, 0
  %v1553 = vsel %vm1425, 1, 0
  %v1554 = vsel %vm1426, 1, 0
  %v1555 = vsel %vm1427, 1, 0
  %v1556 = vsel %vm1428, 1, 0
  %v1557 = vsel %vm1429, 1, 0
  %v1558 = vsel %vm1430, 1, 0
  %v1559 = vsel %vm1431, 1, 0
  %v1560 = vsel %vm1432, 1, 0
  %v1561 = vsel %vm1433, 1, 0
  %v1562 = vsel %vm1434, 1, 0
  %v1563 = vsel %vm1435, 1, 0
  %v1564 = vsel %vm1436, 1, 0
  %v1565 = vsel %vm1437, 1, 0
  %v1566 = vsel %vm1438, 1, 0
  %v1567 = vsel %vm1439, 1, 0
  %v1568 = vsel %vm1440, 1, 0
  %v1569 = vsel %vm1441, 1, 0
  %v1570 = vsel %vm1442, 1, 0
  %v1571 = vsel %vm1443, 1, 0
  %v1572 = vsel %vm1444, 1, 0
  %v1573 = vsel %vm1445, 1, 0
  %v1574 = vsel %vm1446, 1, 0
  %v1575 = vsel %vm1447, 1, 0
  %v1576 = vsel %vm1448, 1, 0
  %v1577 = vsel %vm1449, 1, 0
  %v1578 = vsel %vm1450, 1, 0
  %v1579 = vsel %vm1451, 1, 0
  %v1580 = vsel %vm1452, 1, 0
  %v1581 = vsel %vm1453, 1, 0
  %v1582 = vsel %vm1454, 1, 0
  %v1583 = vsel %vm1455, 1, 0
  %v1584 = vsel %vm1456, 1, 0
  %v1585 = vsel %vm1457, 1, 0
  %v1586 = vsel %vm1458, 1, 0
  %v1587 = vsel %vm1459, 1, 0
  %v1588 = vsel %vm1460, 1, 0
  %v1589 = vsel %vm1461, 1, 0
  %v1590 = vsel %vm1462, 1, 0
  %v1591 = vsel %vm1463, 1, 0
  %v1592 = vsel %vm1464, 1, 0
  %v1593 = vsel %vm1465, 1, 0
  %v1594 = vsel %vm1466, 1, 0
  %v1595 = vsel %vm1467, 1, 0
  %v1596 = vsel %vm1468, 1, 0
  %v1597 = vsel %vm1469, 1, 0
  %v1598 = vsel %vm1470, 1, 0
  %v1599 = vsel %vm1471, 1, 0
  %v1600 = vsel %vm1472, 1, 0
  %v1601 = vsel %vm1473, 1, 0
  %v1602 = vsel %vm1474, 1, 0
  %v1603 = vsel %vm1475, 1, 0
  %v1604 = vsel %vm1476, 1, 0
  %v1605 = vsel %vm1477, 1, 0
  %v1606 = vsel %vm1478, 1, 0
  %v1607 = vsel %vm1479, 1, 0
  %v1608 = vsel %vm1480, 1, 0
  %v1609 = vsel %vm1481, 1, 0
  %v1610 = vsel %vm1482, 1, 0
  %v1611 = vcvt.s32.f32 %v1483
  %v1612 = vcvt.s32.f32 %v1484
  %v1613 = vcvt.s32.f32 %v1485
  %v1614 = vcvt.s32.f32 %v1486
  %v1615 = vcvt.s32.f32 %v1487
  %v1616 = vcvt.s32.f32 %v1488
  %v1617 = vcvt.s32.f32 %v1489
  %v1618 = vcvt.s32.f32 %v1490
  %v1619 = vcvt.s32.f32 %v1491
  %v1620 = vcvt.s32.f32 %v1492
  %v1621 = vcvt.s32.f32 %v1493
  %v1622 = vcvt.s32.f32 %v1494
  %v1623 = vcvt.s32.f32 %v1495
  %v1624 = vcvt.s32.f32 %v1496
  %v1625 = vcvt.s32.f32 %v1497
  %v1626 = vcvt.s32.f32 %v1498
  %v1627 = vcvt.s32.f32 %v1499
  %v1628 = vcvt.s32.f32 %v1500
  %v1629 = vcvt.s32.f32 %v1501
  %v1630 = vcvt.s32.f32 %v1502
  %v1631 = vcvt.s32.f32 %v1503
  %v1632 = vcvt.s32.f32 %v1504
  %v1633 = vcvt.s32.f32 %v1505
  %v1634 = vcvt.s32.f32 %v1506
  %v1635 = vcvt.s32.f32 %v1507
  %v1636 = vcvt.s32.f32 %v1508
  %v1637 = vcvt.s32.f32 %v1509
  %v1638 = vcvt.s32.f32 %v1510
  %v1639 = vcvt.s32.f32 %v1511
  %v1640 = vcvt.s32.f32 %v1512
  %v1641 = vcvt.s32.f32 %v1513
  %v1642 = vcvt.s32.f32 %v1514
  %v1643 = vcvt.s32.f32 %v1515
  %v1644 = vcvt.s32.f32 %v1516
  %v1645 = vcvt.s32.f32 %v1517
  %v1646 = vcvt.s32.f32 %v1518
  %v1647 = vcvt.s32.f32 %v1519
  %v1648 = vcvt.s32.f32 %v1520
  %v1649 = vcvt.s32.f32 %v1521
  %v1650 = vcvt.s32.f32 %v1522
  %v1651 = vcvt.s32.f32 %v1523
  %v1652 = vcvt.s32.f32 %v1524
  %v1653 = vcvt.s32.f32 %v1525
  %v1654 = vcvt.s32.f32 %v1526
  %v1655 = vcvt.s32.f32 %v1527
  %v1656 = vcvt.s32.f32 %v1528
  %v1657 = vcvt.s32.f32 %v1529
  %v1658 = vcvt.s32.f32 %v1530
  %v1659 = vcvt.s32.f32 %v1531
  %v1660 = vcvt.s32.f32 %v1532
  %v1661 = vcvt.s32.f32 %v1533
  %v1662 = vcvt.s32.f32 %v1534
  %v1663 = vcvt.s32.f32 %v1535
  %v1664 = vcvt.s32.f32 %v1536
  %v1665 = vcvt.s32.f32 %v1537
  %v1666 = vcvt.s32.f32 %v1538
  %v1667 = vcvt.s32.f32 %v1539
  %v1668 = vcvt.s32.f32 %v1540
  %v1669 = vcvt.s32.f32 %v1541
  %v1670 = vcvt.s32.f32 %v1542
  %v1671 = vcvt.s32.f32 %v1543
  %v1672 = vcvt.s32.f32 %v1544
  %v1673 = vcvt.s32.f32 %v1545
  %v1674 = vcvt.s32.f32 %v1546
  %v1675 = vcvt.s32.f32 %v1547
  %v1676 = vcvt.s32.f32 %v1548
  %v1677 = vcvt.s32.f32 %v1549
  %v1678 = vcvt.s32.f32 %v1550
  %v1679 = vcvt.s32.f32 %v1551
  %v1680 = vcvt.s32.f32 %v1552
  %v1681 = vcvt.s32.f32 %v1553
  %v1682 = vcvt.s32.f32 %v1554
  %v1683 = vcvt.s32.f32 %v1555
  %v1684 = vcvt.s32.f32 %v1556
  %v1685 = vcvt.s32.f32 %v1557
  %v1686 = vcvt.s32.f32 %v1558
  %v1687 = vcvt.s32.f32 %v1559
  %v1688 = vcvt.s32.f32 %v1560
  %v1689 = vcvt.s32.f32 %v1561
  %v1690 = vcvt.s32.f32 %v1562
  %v1691 = vcvt.s32.f32 %v1563
  %v1692 = vcvt.s32.f32 %v1564
  %v1693 = vcvt.s32.f32 %v1565
  %v1694 = vcvt.s32.f32 %v1566
  %v1695 = vcvt.s32.f32 %v1567
  %v1696 = vcvt.s32.f32 %v1568
  %v1697 = vcvt.s32.f32 %v1569
  %v1698 = vcvt.s32.f32 %v1570
  %v1699 = vcvt.s32.f32 %v1571
  %v1700 = vcvt.s32.f32 %v1572
  %v1701 = vcvt.s32.f32 %v1573
  %v1702 = vcvt.s32.f32 %v1574
  %v1703 = vcvt.s32.f32 %v1575
  %v1704 = vcvt.s32.f32 %v1576
  %v1705 = vcvt.s32.f32 %v1577
  %v1706 = vcvt.s32.f32 %v1578
  %v1707 = vcvt.s32.f32 %v1579
  %v1708 = vcvt.s32.f32 %v1580
  %v1709 = vcvt.s32.f32 %v1581
  %v1710 = vcvt.s32.f32 %v1582
  %v1711 = vcvt.s32.f32 %v1583
  %v1712 = vcvt.s32.f32 %v1584
  %v1713 = vcvt.s32.f32 %v1585
  %v1714 = vcvt.s32.f32 %v1586
  %v1715 = vcvt.s32.f32 %v1587
  %v1716 = vcvt.s32.f32 %v1588
  %v1717 = vcvt.s32.f32 %v1589
  %v1718 = vcvt.s32.f32 %v1590
  %v1719 = vcvt.s32.f32 %v1591
  %v1720 = vcvt.s32.f32 %v1592
  %v1721 = vcvt.s32.f32 %v1593
  %v1722 = vcvt.s32.f32 %v1594
  %v1723 = vcvt.s32.f32 %v1595
  %v1724 = vcvt.s32.f32 %v1596
  %v1725 = vcvt.s32.f32 %v1597
  %v1726 = vcvt.s32.f32 %v1598
  %v1727 = vcvt.s32.f32 %v1599
  %v1728 = vcvt.s32.f32 %v1600
  %v1729 = vcvt.s32.f32 %v1601
  %v1730 = vcvt.s32.f32 %v1602
  %v1731 = vcvt.s32.f32 %v1603
  %v1732 = vcvt.s32.f32 %v1604
  %v1733 = vcvt.s32.f32 %v1605
  %v1734 = vcvt.s32.f32 %v1606
  %v1735 = vcvt.s32.f32 %v1607
  %v1736 = vcvt.s32.f32 %v1608
  %v1737 = vcvt.s32.f32 %v1609
  %v1738 = vcvt.s32.f32 %v1610
  %v1739 = vpack.c.bf16 %v1612, %v1611
  %v1740 = vpack.c.bf16 %v1614, %v1613
  %v1741 = vpack.c.bf16 %v1616, %v1615
  %v1742 = vpack.c.bf16 %v1618, %v1617
  %v1743 = vpack.c.bf16 %v1620, %v1619
  %v1744 = vpack.c.bf16 %v1622, %v1621
  %v1745 = vpack.c.bf16 %v1624, %v1623
  %v1746 = vpack.c.bf16 %v1626, %v1625
  %v1747 = vpack.c.bf16 %v1628, %v1627
  %v1748 = vpack.c.bf16 %v1630, %v1629
  %v1749 = vpack.c.bf16 %v1632, %v1631
  %v1750 = vpack.c.bf16 %v1634, %v1633
  %v1751 = vpack.c.bf16 %v1636, %v1635
  %v1752 = vpack.c.bf16 %v1638, %v1637
  %v1753 = vpack.c.bf16 %v1640, %v1639
  %v1754 = vpack.c.bf16 %v1642, %v1641
  %v1755 = vpack.c.bf16 %v1644, %v1643
  %v1756 = vpack.c.bf16 %v1646, %v1645
  %v1757 = vpack.c.bf16 %v1648, %v1647
  %v1758 = vpack.c.bf16 %v1650, %v1649
  %v1759 = vpack.c.bf16 %v1652, %v1651
  %v1760 = vpack.c.bf16 %v1654, %v1653
  %v1761 = vpack.c.bf16 %v1656, %v1655
  %v1762 = vpack.c.bf16 %v1658, %v1657
  %v1763 = vpack.c.bf16 %v1660, %v1659
  %v1764 = vpack.c.bf16 %v1662, %v1661
  %v1765 = vpack.c.bf16 %v1664, %v1663
  %v1766 = vpack.c.bf16 %v1666, %v1665
  %v1767 = vpack.c.bf16 %v1668, %v1667
  %v1768 = vpack.c.bf16 %v1670, %v1669
  %v1769 = vpack.c.bf16 %v1672, %v1671
  %v1770 = vpack.c.bf16 %v1674, %v1673
  %v1771 = vpack.c.bf16 %v1676, %v1675
  %v1772 = vpack.c.bf16 %v1678, %v1677
  %v1773 = vpack.c.bf16 %v1680, %v1679
  %v1774 = vpack.c.bf16 %v1682, %v1681
  %v1775 = vpack.c.bf16 %v1684, %v1683
  %v1776 = vpack.c.bf16 %v1686, %v1685
  %v1777 = vpack.c.bf16 %v1688, %v1687
  %v1778 = vpack.c.bf16 %v1690, %v1689
  %v1779 = vpack.c.bf16 %v1692, %v1691
  %v1780 = vpack.c.bf16 %v1694, %v1693
  %v1781 = vpack.c.bf16 %v1696, %v1695
  %v1782 = vpack.c.bf16 %v1698, %v1697
  %v1783 = vpack.c.bf16 %v1700, %v1699
  %v1784 = vpack.c.bf16 %v1702, %v1701
  %v1785 = vpack.c.bf16 %v1704, %v1703
  %v1786 = vpack.c.bf16 %v1706, %v1705
  %v1787 = vpack.c.bf16 %v1708, %v1707
  %v1788 = vpack.c.bf16 %v1710, %v1709
  %v1789 = vpack.c.bf16 %v1712, %v1711
  %v1790 = vpack.c.bf16 %v1714, %v1713
  %v1791 = vpack.c.bf16 %v1716, %v1715
  %v1792 = vpack.c.bf16 %v1718, %v1717
  %v1793 = vpack.c.bf16 %v1720, %v1719
  %v1794 = vpack.c.bf16 %v1722, %v1721
  %v1795 = vpack.c.bf16 %v1724, %v1723
  %v1796 = vpack.c.bf16 %v1726, %v1725
  %v1797 = vpack.c.bf16 %v1728, %v1727
  %v1798 = vpack.c.bf16 %v1730, %v1729
  %v1799 = vpack.c.bf16 %v1732, %v1731
  %v1800 = vpack.c.bf16 %v1734, %v1733
  %v1801 = vpack.c.bf16 %v1736, %v1735
  %v1802 = vpack.c.bf16 %v1738, %v1737
  %v1803 = vld [vmem:[#allocation2] sm:$0xff]
  %v1804 = vld [vmem:[#allocation2 + $0x8] sm:$0xff]
  %v1805 = vld [vmem:[#allocation2 + $0x10] sm:$0xff]
  %v1806 = vld [vmem:[#allocation2 + $0x18] sm:$0xff]
  %v1807 = vld [vmem:[#allocation2 + $0x20] sm:$0xff]
  %v1808 = vld [vmem:[#allocation2 + $0x28] sm:$0xff]
  %v1809 = vld [vmem:[#allocation2 + $0x30] sm:$0xff]
  %v1810 = vld [vmem:[#allocation2 + $0x38] sm:$0xff]
  %v1811 = vld [vmem:[#allocation2 + $0x40] sm:$0xff]
  %v1812 = vld [vmem:[#allocation2 + $0x48] sm:$0xff]
  %v1813 = vld [vmem:[#allocation2 + $0x50] sm:$0xff]
  %v1814 = vld [vmem:[#allocation2 + $0x58] sm:$0xff]
  %v1815 = vld [vmem:[#allocation2 + $0x60] sm:$0xff]
  %v1816 = vld [vmem:[#allocation2 + $0x68] sm:$0xff]
  %v1817 = vld [vmem:[#allocation2 + $0x70] sm:$0xff]
  %v1818 = vld [vmem:[#allocation2 + $0x78] sm:$0xff]
  %v1819 = vld [vmem:[#allocation2 + $0x80] sm:$0xff]
  %v1820 = vld [vmem:[#allocation2 + $0x88] sm:$0xff]
  %v1821 = vld [vmem:[#allocation2 + $0x90] sm:$0xff]
  %v1822 = vld [vmem:[#allocation2 + $0x98] sm:$0xff]
  %v1823 = vld [vmem:[#allocation2 + $0xa0] sm:$0xff]
  %v1824 = vld [vmem:[#allocation2 + $0xa8] sm:$0xff]
  %v1825 = vld [vmem:[#allocation2 + $0xb0] sm:$0xff]
  %v1826 = vld [vmem:[#allocation2 + $0xb8] sm:$0xff]
  %v1827 = vld [vmem:[#allocation2 + $0xc0] sm:$0xff]
  %v1828 = vld [vmem:[#allocation2 + $0xc8] sm:$0xff]
  %v1829 = vld [vmem:[#allocation2 + $0xd0] sm:$0xff]
  %v1830 = vld [vmem:[#allocation2 + $0xd8] sm:$0xff]
  %v1831 = vld [vmem:[#allocation2 + $0xe0] sm:$0xff]
  %v1832 = vld [vmem:[#allocation2 + $0xe8] sm:$0xff]
  %v1833 = vld [vmem:[#allocation2 + $0xf0] sm:$0xff]
  %v1834 = vld [vmem:[#allocation2 + $0xf8] sm:$0xff]
  %v1835 = vld [vmem:[#allocation2 + $0x100] sm:$0xff]
  %v1836 = vld [vmem:[#allocation2 + $0x108] sm:$0xff]
  %v1837 = vld [vmem:[#allocation2 + $0x110] sm:$0xff]
  %v1838 = vld [vmem:[#allocation2 + $0x118] sm:$0xff]
  %v1839 = vld [vmem:[#allocation2 + $0x120] sm:$0xff]
  %v1840 = vld [vmem:[#allocation2 + $0x128] sm:$0xff]
  %v1841 = vld [vmem:[#allocation2 + $0x130] sm:$0xff]
  %v1842 = vld [vmem:[#allocation2 + $0x138] sm:$0xff]
  %v1843 = vld [vmem:[#allocation2 + $0x140] sm:$0xff]
  %v1844 = vld [vmem:[#allocation2 + $0x148] sm:$0xff]
  %v1845 = vld [vmem:[#allocation2 + $0x150] sm:$0xff]
  %v1846 = vld [vmem:[#allocation2 + $0x158] sm:$0xff]
  %v1847 = vld [vmem:[#allocation2 + $0x160] sm:$0xff]
  %v1848 = vld [vmem:[#allocation2 + $0x168] sm:$0xff]
  %v1849 = vld [vmem:[#allocation2 + $0x170] sm:$0xff]
  %v1850 = vld [vmem:[#allocation2 + $0x178] sm:$0xff]
  %v1851 = vld [vmem:[#allocation2 + $0x180] sm:$0xff]
  %v1852 = vld [vmem:[#allocation2 + $0x188] sm:$0xff]
  %v1853 = vld [vmem:[#allocation2 + $0x190] sm:$0xff]
  %v1854 = vld [vmem:[#allocation2 + $0x198] sm:$0xff]
  %v1855 = vld [vmem:[#allocation2 + $0x1a0] sm:$0xff]
  %v1856 = vld [vmem:[#allocation2 + $0x1a8] sm:$0xff]
  %v1857 = vld [vmem:[#allocation2 + $0x1b0] sm:$0xff]
  %v1858 = vld [vmem:[#allocation2 + $0x1b8] sm:$0xff]
  %v1859 = vld [vmem:[#allocation2 + $0x1c0] sm:$0xff]
  %v1860 = vld [vmem:[#allocation2 + $0x1c8] sm:$0xff]
  %v1861 = vld [vmem:[#allocation2 + $0x1d0] sm:$0xff]
  %v1862 = vld [vmem:[#allocation2 + $0x1d8] sm:$0xff]
  %v1863 = vld [vmem:[#allocation2 + $0x1e0] sm:$0xff]
  %v1864 = vld [vmem:[#allocation2 + $0x1e8] sm:$0xff]
  %v1865 = vld [vmem:[#allocation2 + $0x1f0] sm:$0xff]
  %v1866 = vld [vmem:[#allocation2 + $0x1f8] sm:$0xff]
  %v1867 = vld [vmem:[#allocation2 + $0x200] sm:$0xff]
  %v1868 = vld [vmem:[#allocation2 + $0x208] sm:$0xff]
  %v1869 = vld [vmem:[#allocation2 + $0x210] sm:$0xff]
  %v1870 = vld [vmem:[#allocation2 + $0x218] sm:$0xff]
  %v1871 = vld [vmem:[#allocation2 + $0x220] sm:$0xff]
  %v1872 = vld [vmem:[#allocation2 + $0x228] sm:$0xff]
  %v1873 = vld [vmem:[#allocation2 + $0x230] sm:$0xff]
  %v1874 = vld [vmem:[#allocation2 + $0x238] sm:$0xff]
  %v1875 = vld [vmem:[#allocation2 + $0x240] sm:$0xff]
  %v1876 = vld [vmem:[#allocation2 + $0x248] sm:$0xff]
  %v1877 = vld [vmem:[#allocation2 + $0x250] sm:$0xff]
  %v1878 = vld [vmem:[#allocation2 + $0x258] sm:$0xff]
  %v1879 = vld [vmem:[#allocation2 + $0x260] sm:$0xff]
  %v1880 = vld [vmem:[#allocation2 + $0x268] sm:$0xff]
  %v1881 = vld [vmem:[#allocation2 + $0x270] sm:$0xff]
  %v1882 = vld [vmem:[#allocation2 + $0x278] sm:$0xff]
  %v1883 = vld [vmem:[#allocation2 + $0x280] sm:$0xff]
  %v1884 = vld [vmem:[#allocation2 + $0x288] sm:$0xff]
  %v1885 = vld [vmem:[#allocation2 + $0x290] sm:$0xff]
  %v1886 = vld [vmem:[#allocation2 + $0x298] sm:$0xff]
  %v1887 = vld [vmem:[#allocation2 + $0x2a0] sm:$0xff]
  %v1888 = vld [vmem:[#allocation2 + $0x2a8] sm:$0xff]
  %v1889 = vld [vmem:[#allocation2 + $0x2b0] sm:$0xff]
  %v1890 = vld [vmem:[#allocation2 + $0x2b8] sm:$0xff]
  %v1891 = vld [vmem:[#allocation2 + $0x2c0] sm:$0xff]
  %v1892 = vld [vmem:[#allocation2 + $0x2c8] sm:$0xff]
  %v1893 = vld [vmem:[#allocation2 + $0x2d0] sm:$0xff]
  %v1894 = vld [vmem:[#allocation2 + $0x2d8] sm:$0xff]
  %v1895 = vld [vmem:[#allocation2 + $0x2e0] sm:$0xff]
  %v1896 = vld [vmem:[#allocation2 + $0x2e8] sm:$0xff]
  %v1897 = vld [vmem:[#allocation2 + $0x2f0] sm:$0xff]
  %v1898 = vld [vmem:[#allocation2 + $0x2f8] sm:$0xff]
  %v1899 = vld [vmem:[#allocation2 + $0x300] sm:$0xff]
  %v1900 = vld [vmem:[#allocation2 + $0x308] sm:$0xff]
  %v1901 = vld [vmem:[#allocation2 + $0x310] sm:$0xff]
  %v1902 = vld [vmem:[#allocation2 + $0x318] sm:$0xff]
  %v1903 = vld [vmem:[#allocation2 + $0x320] sm:$0xff]
  %v1904 = vld [vmem:[#allocation2 + $0x328] sm:$0xff]
  %v1905 = vld [vmem:[#allocation2 + $0x330] sm:$0xff]
  %v1906 = vld [vmem:[#allocation2 + $0x338] sm:$0xff]
  %v1907 = vld [vmem:[#allocation2 + $0x340] sm:$0xff]
  %v1908 = vld [vmem:[#allocation2 + $0x348] sm:$0xff]
  %v1909 = vld [vmem:[#allocation2 + $0x350] sm:$0xff]
  %v1910 = vld [vmem:[#allocation2 + $0x358] sm:$0xff]
  %v1911 = vld [vmem:[#allocation2 + $0x360] sm:$0xff]
  %v1912 = vld [vmem:[#allocation2 + $0x368] sm:$0xff]
  %v1913 = vld [vmem:[#allocation2 + $0x370] sm:$0xff]
  %v1914 = vld [vmem:[#allocation2 + $0x378] sm:$0xff]
  %v1915 = vld [vmem:[#allocation2 + $0x380] sm:$0xff]
  %v1916 = vld [vmem:[#allocation2 + $0x388] sm:$0xff]
  %v1917 = vld [vmem:[#allocation2 + $0x390] sm:$0xff]
  %v1918 = vld [vmem:[#allocation2 + $0x398] sm:$0xff]
  %v1919 = vld [vmem:[#allocation2 + $0x3a0] sm:$0xff]
  %v1920 = vld [vmem:[#allocation2 + $0x3a8] sm:$0xff]
  %v1921 = vld [vmem:[#allocation2 + $0x3b0] sm:$0xff]
  %v1922 = vld [vmem:[#allocation2 + $0x3b8] sm:$0xff]
  %v1923 = vld [vmem:[#allocation2 + $0x3c0] sm:$0xff]
  %v1924 = vld [vmem:[#allocation2 + $0x3c8] sm:$0xff]
  %v1925 = vld [vmem:[#allocation2 + $0x3d0] sm:$0xff]
  %v1926 = vld [vmem:[#allocation2 + $0x3d8] sm:$0xff]
  %v1927 = vld [vmem:[#allocation2 + $0x3e0] sm:$0xff]
  %v1928 = vld [vmem:[#allocation2 + $0x3e8] sm:$0xff]
  %v1929 = vld [vmem:[#allocation2 + $0x3f0] sm:$0xff]
  %v1930 = vld [vmem:[#allocation2 + $0x3f8] sm:$0xff]
  %1931 = vmatprep.subr.bf16.mxu0 0
  %1932 = vmatpush1.bf16.msra.mxu0 1065369472
  %1933 = vmatprep.subr.bf16.mxu0 0
  %1934 = vmatpush1.bf16.msra.mxu0 1065369472
  %1935 = vmatprep.subr.bf16.mxu0 0
  %1936 = vmatpush1.bf16.msra.mxu0 1065369472
  %1937 = vmatprep.subr.bf16.mxu0 0
  %1938 = vmatpush1.bf16.msra.mxu0 1065369472
  %1939 = vmatprep.subr.bf16.mxu0 0
  %1940 = vmatpush1.bf16.msra.mxu0 1065369472
  %1941 = vmatprep.subr.bf16.mxu0 0
  %1942 = vmatpush1.bf16.msra.mxu0 1065369472
  %1943 = vmatprep.subr.bf16.mxu0 0
  %1944 = vmatpush1.bf16.msra.mxu0 1065369472
  %1945 = vmatprep.subr.bf16.mxu0 0
  %1946 = vmatpush1.bf16.msra.mxu0 1065369472
  %1947 = vmatprep.subr.bf16.mxu0 0
  %1948 = vmatpush2.bf16.msra.mxu0 0
  %1949 = vmatprep.subr.bf16.mxu0 0
  %1950 = vmatpush2.bf16.msra.mxu0 0
  %1951 = vmatprep.subr.bf16.mxu0 0
  %1952 = vmatpush2.bf16.msra.mxu0 0
  %1953 = vmatprep.subr.bf16.mxu0 0
  %1954 = vmatpush2.bf16.msra.mxu0 0
  %1955 = vmatprep.subr.bf16.mxu0 0
  %1956 = vmatpush2.bf16.msra.mxu0 0
  %1957 = vmatprep.subr.bf16.mxu0 0
  %1958 = vmatpush2.bf16.msra.mxu0 0
  %1959 = vmatprep.subr.bf16.mxu0 0
  %1960 = vmatpush2.bf16.msra.mxu0 0
  %1961 = vmatprep.subr.bf16.mxu0 0
  %1962 = vmatpush2.bf16.msra.mxu0 0
  %1963 = vmatprep.mubr.bf16.mxu0 0
  %1964 = vmatmul.mubr.bf16.gmra.mxu0 %v1291
  %v1965 = vpop.f32.mrf.mxu0
  %v1966 = vadd.f32 0.0, %v1965
  %v1967 = vpop.f32.mrf.mxu0
  %v1968 = vpop.f32.mrf.mxu0
  %v1969 = vadd.f32 0.0, %v1968
  %v1970 = vpop.f32.mrf.mxu0
  %1971 = vmatprep.mubr.bf16.mxu0 0
  %1972 = vmatmul.mubr.bf16.gmra.mxu0 %v1292
  %v1973 = vpop.f32.mrf.mxu0
  %v1974 = vadd.f32 0.0, %v1973
  %v1975 = vpop.f32.mrf.mxu0
  %v1976 = vpop.f32.mrf.mxu0
  %v1977 = vadd.f32 0.0, %v1976
  %v1978 = vpop.f32.mrf.mxu0
  %1979 = vmatprep.mubr.bf16.mxu0 0
  %1980 = vmatmul.mubr.bf16.gmra.mxu0 %v1293
  %v1981 = vpop.f32.mrf.mxu0
  %v1982 = vadd.f32 0.0, %v1981
  %v1983 = vpop.f32.mrf.mxu0
  %v1984 = vpop.f32.mrf.mxu0
  %v1985 = vadd.f32 0.0, %v1984
  %v1986 = vpop.f32.mrf.mxu0
  %1987 = vmatprep.mubr.bf16.mxu0 0
  %1988 = vmatmul.mubr.bf16.gmra.mxu0 %v1294
  %v1989 = vpop.f32.mrf.mxu0
  %v1990 = vadd.f32 0.0, %v1989
  %v1991 = vpop.f32.mrf.mxu0
  %v1992 = vpop.f32.mrf.mxu0
  %v1993 = vadd.f32 0.0, %v1992
  %v1994 = vpop.f32.mrf.mxu0
  %1995 = vmatprep.mubr.bf16.mxu0 0
  %1996 = vmatmul.mubr.bf16.gmra.mxu0 %v1295
  %v1997 = vpop.f32.mrf.mxu0
  %v1998 = vadd.f32 0.0, %v1997
  %v1999 = vpop.f32.mrf.mxu0
  %v2000 = vpop.f32.mrf.mxu0
  %v2001 = vadd.f32 0.0, %v2000
  %v2002 = vpop.f32.mrf.mxu0
  %2003 = vmatprep.mubr.bf16.mxu0 0
  %2004 = vmatmul.mubr.bf16.gmra.mxu0 %v1296
  %v2005 = vpop.f32.mrf.mxu0
  %v2006 = vadd.f32 0.0, %v2005
  %v2007 = vpop.f32.mrf.mxu0
  %v2008 = vpop.f32.mrf.mxu0
  %v2009 = vadd.f32 0.0, %v2008
  %v2010 = vpop.f32.mrf.mxu0
  %2011 = vmatprep.mubr.bf16.mxu0 0
  %2012 = vmatmul.mubr.bf16.gmra.mxu0 %v1297
  %v2013 = vpop.f32.mrf.mxu0
  %v2014 = vadd.f32 0.0, %v2013
  %v2015 = vpop.f32.mrf.mxu0
  %v2016 = vpop.f32.mrf.mxu0
  %v2017 = vadd.f32 0.0, %v2016
  %v2018 = vpop.f32.mrf.mxu0
  %2019 = vmatprep.mubr.bf16.mxu0 0
  %2020 = vmatmul.mubr.bf16.gmra.mxu0 %v1298
  %v2021 = vpop.f32.mrf.mxu0
  %v2022 = vadd.f32 0.0, %v2021
  %v2023 = vpop.f32.mrf.mxu0
  %v2024 = vpop.f32.mrf.mxu0
  %v2025 = vadd.f32 0.0, %v2024
  %v2026 = vpop.f32.mrf.mxu0
  %2027 = vmatprep.mubr.bf16.mxu0 0
  %2028 = vmatmul.mubr.bf16.gmra.mxu0 %v1299
  %v2029 = vpop.f32.mrf.mxu0
  %v2030 = vadd.f32 0.0, %v2029
  %v2031 = vpop.f32.mrf.mxu0
  %v2032 = vpop.f32.mrf.mxu0
  %v2033 = vadd.f32 0.0, %v2032
  %v2034 = vpop.f32.mrf.mxu0
  %2035 = vmatprep.mubr.bf16.mxu0 0
  %2036 = vmatmul.mubr.bf16.gmra.mxu0 %v1300
  %v2037 = vpop.f32.mrf.mxu0
  %v2038 = vadd.f32 0.0, %v2037
  %v2039 = vpop.f32.mrf.mxu0
  %v2040 = vpop.f32.mrf.mxu0
  %v2041 = vadd.f32 0.0, %v2040
  %v2042 = vpop.f32.mrf.mxu0
  %2043 = vmatprep.mubr.bf16.mxu0 0
  %2044 = vmatmul.mubr.bf16.gmra.mxu0 %v1301
  %v2045 = vpop.f32.mrf.mxu0
  %v2046 = vadd.f32 0.0, %v2045
  %v2047 = vpop.f32.mrf.mxu0
  %v2048 = vpop.f32.mrf.mxu0
  %v2049 = vadd.f32 0.0, %v2048
  %v2050 = vpop.f32.mrf.mxu0
  %2051 = vmatprep.mubr.bf16.mxu0 0
  %2052 = vmatmul.mubr.bf16.gmra.mxu0 %v1302
  %v2053 = vpop.f32.mrf.mxu0
  %v2054 = vadd.f32 0.0, %v2053
  %v2055 = vpop.f32.mrf.mxu0
  %v2056 = vpop.f32.mrf.mxu0
  %v2057 = vadd.f32 0.0, %v2056
  %v2058 = vpop.f32.mrf.mxu0
  %2059 = vmatprep.mubr.bf16.mxu0 0
  %2060 = vmatmul.mubr.bf16.gmra.mxu0 %v1303
  %v2061 = vpop.f32.mrf.mxu0
  %v2062 = vadd.f32 0.0, %v2061
  %v2063 = vpop.f32.mrf.mxu0
  %v2064 = vpop.f32.mrf.mxu0
  %v2065 = vadd.f32 0.0, %v2064
  %v2066 = vpop.f32.mrf.mxu0
  %2067 = vmatprep.mubr.bf16.mxu0 0
  %2068 = vmatmul.mubr.bf16.gmra.mxu0 %v1304
  %v2069 = vpop.f32.mrf.mxu0
  %v2070 = vadd.f32 0.0, %v2069
  %v2071 = vpop.f32.mrf.mxu0
  %v2072 = vpop.f32.mrf.mxu0
  %v2073 = vadd.f32 0.0, %v2072
  %v2074 = vpop.f32.mrf.mxu0
  %2075 = vmatprep.mubr.bf16.mxu0 0
  %2076 = vmatmul.mubr.bf16.gmra.mxu0 %v1305
  %v2077 = vpop.f32.mrf.mxu0
  %v2078 = vadd.f32 0.0, %v2077
  %v2079 = vpop.f32.mrf.mxu0
  %v2080 = vpop.f32.mrf.mxu0
  %v2081 = vadd.f32 0.0, %v2080
  %v2082 = vpop.f32.mrf.mxu0
  %2083 = vmatprep.mubr.bf16.mxu0 0
  %2084 = vmatmul.mubr.bf16.gmra.mxu0 %v1306
  %v2085 = vpop.f32.mrf.mxu0
  %v2086 = vadd.f32 0.0, %v2085
  %v2087 = vpop.f32.mrf.mxu0
  %v2088 = vpop.f32.mrf.mxu0
  %v2089 = vadd.f32 0.0, %v2088
  %v2090 = vpop.f32.mrf.mxu0
  %2091 = vmatprep.mubr.bf16.mxu0 0
  %2092 = vmatmul.mubr.bf16.gmra.mxu0 %v1307
  %v2093 = vpop.f32.mrf.mxu0
  %v2094 = vadd.f32 0.0, %v2093
  %v2095 = vpop.f32.mrf.mxu0
  %v2096 = vpop.f32.mrf.mxu0
  %v2097 = vadd.f32 0.0, %v2096
  %v2098 = vpop.f32.mrf.mxu0
  %2099 = vmatprep.mubr.bf16.mxu0 0
  %2100 = vmatmul.mubr.bf16.gmra.mxu0 %v1308
  %v2101 = vpop.f32.mrf.mxu0
  %v2102 = vadd.f32 0.0, %v2101
  %v2103 = vpop.f32.mrf.mxu0
  %v2104 = vpop.f32.mrf.mxu0
  %v2105 = vadd.f32 0.0, %v2104
  %v2106 = vpop.f32.mrf.mxu0
  %2107 = vmatprep.mubr.bf16.mxu0 0
  %2108 = vmatmul.mubr.bf16.gmra.mxu0 %v1309
  %v2109 = vpop.f32.mrf.mxu0
  %v2110 = vadd.f32 0.0, %v2109
  %v2111 = vpop.f32.mrf.mxu0
  %v2112 = vpop.f32.mrf.mxu0
  %v2113 = vadd.f32 0.0, %v2112
  %v2114 = vpop.f32.mrf.mxu0
  %2115 = vmatprep.mubr.bf16.mxu0 0
  %2116 = vmatmul.mubr.bf16.gmra.mxu0 %v1310
  %v2117 = vpop.f32.mrf.mxu0
  %v2118 = vadd.f32 0.0, %v2117
  %v2119 = vpop.f32.mrf.mxu0
  %v2120 = vpop.f32.mrf.mxu0
  %v2121 = vadd.f32 0.0, %v2120
  %v2122 = vpop.f32.mrf.mxu0
  %2123 = vmatprep.mubr.bf16.mxu0 0
  %2124 = vmatmul.mubr.bf16.gmra.mxu0 %v1311
  %v2125 = vpop.f32.mrf.mxu0
  %v2126 = vadd.f32 0.0, %v2125
  %v2127 = vpop.f32.mrf.mxu0
  %v2128 = vpop.f32.mrf.mxu0
  %v2129 = vadd.f32 0.0, %v2128
  %v2130 = vpop.f32.mrf.mxu0
  %2131 = vmatprep.mubr.bf16.mxu0 0
  %2132 = vmatmul.mubr.bf16.gmra.mxu0 %v1312
  %v2133 = vpop.f32.mrf.mxu0
  %v2134 = vadd.f32 0.0, %v2133
  %v2135 = vpop.f32.mrf.mxu0
  %v2136 = vpop.f32.mrf.mxu0
  %v2137 = vadd.f32 0.0, %v2136
  %v2138 = vpop.f32.mrf.mxu0
  %2139 = vmatprep.mubr.bf16.mxu0 0
  %2140 = vmatmul.mubr.bf16.gmra.mxu0 %v1313
  %v2141 = vpop.f32.mrf.mxu0
  %v2142 = vadd.f32 0.0, %v2141
  %v2143 = vpop.f32.mrf.mxu0
  %v2144 = vpop.f32.mrf.mxu0
  %v2145 = vadd.f32 0.0, %v2144
  %v2146 = vpop.f32.mrf.mxu0
  %2147 = vmatprep.mubr.bf16.mxu0 0
  %2148 = vmatmul.mubr.bf16.gmra.mxu0 %v1314
  %v2149 = vpop.f32.mrf.mxu0
  %v2150 = vadd.f32 0.0, %v2149
  %v2151 = vpop.f32.mrf.mxu0
  %v2152 = vpop.f32.mrf.mxu0
  %v2153 = vadd.f32 0.0, %v2152
  %v2154 = vpop.f32.mrf.mxu0
  %2155 = vmatprep.mubr.bf16.mxu0 0
  %2156 = vmatmul.mubr.bf16.gmra.mxu0 %v1315
  %v2157 = vpop.f32.mrf.mxu0
  %v2158 = vadd.f32 0.0, %v2157
  %v2159 = vpop.f32.mrf.mxu0
  %v2160 = vpop.f32.mrf.mxu0
  %v2161 = vadd.f32 0.0, %v2160
  %v2162 = vpop.f32.mrf.mxu0
  %2163 = vmatprep.mubr.bf16.mxu0 0
  %2164 = vmatmul.mubr.bf16.gmra.mxu0 %v1316
  %v2165 = vpop.f32.mrf.mxu0
  %v2166 = vadd.f32 0.0, %v2165
  %v2167 = vpop.f32.mrf.mxu0
  %v2168 = vpop.f32.mrf.mxu0
  %v2169 = vadd.f32 0.0, %v2168
  %v2170 = vpop.f32.mrf.mxu0
  %2171 = vmatprep.mubr.bf16.mxu0 0
  %2172 = vmatmul.mubr.bf16.gmra.mxu0 %v1317
  %v2173 = vpop.f32.mrf.mxu0
  %v2174 = vadd.f32 0.0, %v2173
  %v2175 = vpop.f32.mrf.mxu0
  %v2176 = vpop.f32.mrf.mxu0
  %v2177 = vadd.f32 0.0, %v2176
  %v2178 = vpop.f32.mrf.mxu0
  %2179 = vmatprep.mubr.bf16.mxu0 0
  %2180 = vmatmul.mubr.bf16.gmra.mxu0 %v1318
  %v2181 = vpop.f32.mrf.mxu0
  %v2182 = vadd.f32 0.0, %v2181
  %v2183 = vpop.f32.mrf.mxu0
  %v2184 = vpop.f32.mrf.mxu0
  %v2185 = vadd.f32 0.0, %v2184
  %v2186 = vpop.f32.mrf.mxu0
  %2187 = vmatprep.mubr.bf16.mxu0 0
  %2188 = vmatmul.mubr.bf16.gmra.mxu0 %v1319
  %v2189 = vpop.f32.mrf.mxu0
  %v2190 = vadd.f32 0.0, %v2189
  %v2191 = vpop.f32.mrf.mxu0
  %v2192 = vpop.f32.mrf.mxu0
  %v2193 = vadd.f32 0.0, %v2192
  %v2194 = vpop.f32.mrf.mxu0
  %2195 = vmatprep.mubr.bf16.mxu0 0
  %2196 = vmatmul.mubr.bf16.gmra.mxu0 %v1320
  %v2197 = vpop.f32.mrf.mxu0
  %v2198 = vadd.f32 0.0, %v2197
  %v2199 = vpop.f32.mrf.mxu0
  %v2200 = vpop.f32.mrf.mxu0
  %v2201 = vadd.f32 0.0, %v2200
  %v2202 = vpop.f32.mrf.mxu0
  %2203 = vmatprep.mubr.bf16.mxu0 0
  %2204 = vmatmul.mubr.bf16.gmra.mxu0 %v1321
  %v2205 = vpop.f32.mrf.mxu0
  %v2206 = vadd.f32 0.0, %v2205
  %v2207 = vpop.f32.mrf.mxu0
  %v2208 = vpop.f32.mrf.mxu0
  %v2209 = vadd.f32 0.0, %v2208
  %v2210 = vpop.f32.mrf.mxu0
  %2211 = vmatprep.mubr.bf16.mxu0 0
  %2212 = vmatmul.mubr.bf16.gmra.mxu0 %v1322
  %v2213 = vpop.f32.mrf.mxu0
  %v2214 = vadd.f32 0.0, %v2213
  %v2215 = vpop.f32.mrf.mxu0
  %v2216 = vpop.f32.mrf.mxu0
  %v2217 = vadd.f32 0.0, %v2216
  %v2218 = vpop.f32.mrf.mxu0
  %2219 = vmatprep.mubr.bf16.mxu0 0
  %2220 = vmatmul.mubr.bf16.gmra.mxu0 %v1323
  %v2221 = vpop.f32.mrf.mxu0
  %v2222 = vadd.f32 0.0, %v2221
  %v2223 = vpop.f32.mrf.mxu0
  %v2224 = vpop.f32.mrf.mxu0
  %v2225 = vadd.f32 0.0, %v2224
  %v2226 = vpop.f32.mrf.mxu0
  %2227 = vmatprep.mubr.bf16.mxu0 0
  %2228 = vmatmul.mubr.bf16.gmra.mxu0 %v1324
  %v2229 = vpop.f32.mrf.mxu0
  %v2230 = vadd.f32 0.0, %v2229
  %v2231 = vpop.f32.mrf.mxu0
  %v2232 = vpop.f32.mrf.mxu0
  %v2233 = vadd.f32 0.0, %v2232
  %v2234 = vpop.f32.mrf.mxu0
  %2235 = vmatprep.mubr.bf16.mxu0 0
  %2236 = vmatmul.mubr.bf16.gmra.mxu0 %v1325
  %v2237 = vpop.f32.mrf.mxu0
  %v2238 = vadd.f32 0.0, %v2237
  %v2239 = vpop.f32.mrf.mxu0
  %v2240 = vpop.f32.mrf.mxu0
  %v2241 = vadd.f32 0.0, %v2240
  %v2242 = vpop.f32.mrf.mxu0
  %2243 = vmatprep.mubr.bf16.mxu0 0
  %2244 = vmatmul.mubr.bf16.gmra.mxu0 %v1326
  %v2245 = vpop.f32.mrf.mxu0
  %v2246 = vadd.f32 0.0, %v2245
  %v2247 = vpop.f32.mrf.mxu0
  %v2248 = vpop.f32.mrf.mxu0
  %v2249 = vadd.f32 0.0, %v2248
  %v2250 = vpop.f32.mrf.mxu0
  %2251 = vmatprep.mubr.bf16.mxu0 0
  %2252 = vmatmul.mubr.bf16.gmra.mxu0 %v1327
  %v2253 = vpop.f32.mrf.mxu0
  %v2254 = vadd.f32 0.0, %v2253
  %v2255 = vpop.f32.mrf.mxu0
  %v2256 = vpop.f32.mrf.mxu0
  %v2257 = vadd.f32 0.0, %v2256
  %v2258 = vpop.f32.mrf.mxu0
  %2259 = vmatprep.mubr.bf16.mxu0 0
  %2260 = vmatmul.mubr.bf16.gmra.mxu0 %v1328
  %v2261 = vpop.f32.mrf.mxu0
  %v2262 = vadd.f32 0.0, %v2261
  %v2263 = vpop.f32.mrf.mxu0
  %v2264 = vpop.f32.mrf.mxu0
  %v2265 = vadd.f32 0.0, %v2264
  %v2266 = vpop.f32.mrf.mxu0
  %2267 = vmatprep.mubr.bf16.mxu0 0
  %2268 = vmatmul.mubr.bf16.gmra.mxu0 %v1329
  %v2269 = vpop.f32.mrf.mxu0
  %v2270 = vadd.f32 0.0, %v2269
  %v2271 = vpop.f32.mrf.mxu0
  %v2272 = vpop.f32.mrf.mxu0
  %v2273 = vadd.f32 0.0, %v2272
  %v2274 = vpop.f32.mrf.mxu0
  %2275 = vmatprep.mubr.bf16.mxu0 0
  %2276 = vmatmul.mubr.bf16.gmra.mxu0 %v1330
  %v2277 = vpop.f32.mrf.mxu0
  %v2278 = vadd.f32 0.0, %v2277
  %v2279 = vpop.f32.mrf.mxu0
  %v2280 = vpop.f32.mrf.mxu0
  %v2281 = vadd.f32 0.0, %v2280
  %v2282 = vpop.f32.mrf.mxu0
  %2283 = vmatprep.mubr.bf16.mxu0 0
  %2284 = vmatmul.mubr.bf16.gmra.mxu0 %v1331
  %v2285 = vpop.f32.mrf.mxu0
  %v2286 = vadd.f32 0.0, %v2285
  %v2287 = vpop.f32.mrf.mxu0
  %v2288 = vpop.f32.mrf.mxu0
  %v2289 = vadd.f32 0.0, %v2288
  %v2290 = vpop.f32.mrf.mxu0
  %2291 = vmatprep.mubr.bf16.mxu0 0
  %2292 = vmatmul.mubr.bf16.gmra.mxu0 %v1332
  %v2293 = vpop.f32.mrf.mxu0
  %v2294 = vadd.f32 0.0, %v2293
  %v2295 = vpop.f32.mrf.mxu0
  %v2296 = vpop.f32.mrf.mxu0
  %v2297 = vadd.f32 0.0, %v2296
  %v2298 = vpop.f32.mrf.mxu0
  %2299 = vmatprep.mubr.bf16.mxu0 0
  %2300 = vmatmul.mubr.bf16.gmra.mxu0 %v1333
  %v2301 = vpop.f32.mrf.mxu0
  %v2302 = vadd.f32 0.0, %v2301
  %v2303 = vpop.f32.mrf.mxu0
  %v2304 = vpop.f32.mrf.mxu0
  %v2305 = vadd.f32 0.0, %v2304
  %v2306 = vpop.f32.mrf.mxu0
  %2307 = vmatprep.mubr.bf16.mxu0 0
  %2308 = vmatmul.mubr.bf16.gmra.mxu0 %v1334
  %v2309 = vpop.f32.mrf.mxu0
  %v2310 = vadd.f32 0.0, %v2309
  %v2311 = vpop.f32.mrf.mxu0
  %v2312 = vpop.f32.mrf.mxu0
  %v2313 = vadd.f32 0.0, %v2312
  %v2314 = vpop.f32.mrf.mxu0
  %2315 = vmatprep.mubr.bf16.mxu0 0
  %2316 = vmatmul.mubr.bf16.gmra.mxu0 %v1335
  %v2317 = vpop.f32.mrf.mxu0
  %v2318 = vadd.f32 0.0, %v2317
  %v2319 = vpop.f32.mrf.mxu0
  %v2320 = vpop.f32.mrf.mxu0
  %v2321 = vadd.f32 0.0, %v2320
  %v2322 = vpop.f32.mrf.mxu0
  %2323 = vmatprep.mubr.bf16.mxu0 0
  %2324 = vmatmul.mubr.bf16.gmra.mxu0 %v1336
  %v2325 = vpop.f32.mrf.mxu0
  %v2326 = vadd.f32 0.0, %v2325
  %v2327 = vpop.f32.mrf.mxu0
  %v2328 = vpop.f32.mrf.mxu0
  %v2329 = vadd.f32 0.0, %v2328
  %v2330 = vpop.f32.mrf.mxu0
  %2331 = vmatprep.mubr.bf16.mxu0 0
  %2332 = vmatmul.mubr.bf16.gmra.mxu0 %v1337
  %v2333 = vpop.f32.mrf.mxu0
  %v2334 = vadd.f32 0.0, %v2333
  %v2335 = vpop.f32.mrf.mxu0
  %v2336 = vpop.f32.mrf.mxu0
  %v2337 = vadd.f32 0.0, %v2336
  %v2338 = vpop.f32.mrf.mxu0
  %2339 = vmatprep.mubr.bf16.mxu0 0
  %2340 = vmatmul.mubr.bf16.gmra.mxu0 %v1338
  %v2341 = vpop.f32.mrf.mxu0
  %v2342 = vadd.f32 0.0, %v2341
  %v2343 = vpop.f32.mrf.mxu0
  %v2344 = vpop.f32.mrf.mxu0
  %v2345 = vadd.f32 0.0, %v2344
  %v2346 = vpop.f32.mrf.mxu0
  %2347 = vmatprep.mubr.bf16.mxu0 0
  %2348 = vmatmul.mubr.bf16.gmra.mxu0 %v1339
  %v2349 = vpop.f32.mrf.mxu0
  %v2350 = vadd.f32 0.0, %v2349
  %v2351 = vpop.f32.mrf.mxu0
  %v2352 = vpop.f32.mrf.mxu0
  %v2353 = vadd.f32 0.0, %v2352
  %v2354 = vpop.f32.mrf.mxu0
  %2355 = vmatprep.mubr.bf16.mxu0 0
  %2356 = vmatmul.mubr.bf16.gmra.mxu0 %v1340
  %v2357 = vpop.f32.mrf.mxu0
  %v2358 = vadd.f32 0.0, %v2357
  %v2359 = vpop.f32.mrf.mxu0
  %v2360 = vpop.f32.mrf.mxu0
  %v2361 = vadd.f32 0.0, %v2360
  %v2362 = vpop.f32.mrf.mxu0
  %2363 = vmatprep.mubr.bf16.mxu0 0
  %2364 = vmatmul.mubr.bf16.gmra.mxu0 %v1341
  %v2365 = vpop.f32.mrf.mxu0
  %v2366 = vadd.f32 0.0, %v2365
  %v2367 = vpop.f32.mrf.mxu0
  %v2368 = vpop.f32.mrf.mxu0
  %v2369 = vadd.f32 0.0, %v2368
  %v2370 = vpop.f32.mrf.mxu0
  %2371 = vmatprep.mubr.bf16.mxu0 0
  %2372 = vmatmul.mubr.bf16.gmra.mxu0 %v1342
  %v2373 = vpop.f32.mrf.mxu0
  %v2374 = vadd.f32 0.0, %v2373
  %v2375 = vpop.f32.mrf.mxu0
  %v2376 = vpop.f32.mrf.mxu0
  %v2377 = vadd.f32 0.0, %v2376
  %v2378 = vpop.f32.mrf.mxu0
  %2379 = vmatprep.mubr.bf16.mxu0 0
  %2380 = vmatmul.mubr.bf16.gmra.mxu0 %v1343
  %v2381 = vpop.f32.mrf.mxu0
  %v2382 = vadd.f32 0.0, %v2381
  %v2383 = vpop.f32.mrf.mxu0
  %v2384 = vpop.f32.mrf.mxu0
  %v2385 = vadd.f32 0.0, %v2384
  %v2386 = vpop.f32.mrf.mxu0
  %2387 = vmatprep.mubr.bf16.mxu0 0
  %2388 = vmatmul.mubr.bf16.gmra.mxu0 %v1344
  %v2389 = vpop.f32.mrf.mxu0
  %v2390 = vadd.f32 0.0, %v2389
  %v2391 = vpop.f32.mrf.mxu0
  %v2392 = vpop.f32.mrf.mxu0
  %v2393 = vadd.f32 0.0, %v2392
  %v2394 = vpop.f32.mrf.mxu0
  %2395 = vmatprep.mubr.bf16.mxu0 0
  %2396 = vmatmul.mubr.bf16.gmra.mxu0 %v1345
  %v2397 = vpop.f32.mrf.mxu0
  %v2398 = vadd.f32 0.0, %v2397
  %v2399 = vpop.f32.mrf.mxu0
  %v2400 = vpop.f32.mrf.mxu0
  %v2401 = vadd.f32 0.0, %v2400
  %v2402 = vpop.f32.mrf.mxu0
  %2403 = vmatprep.mubr.bf16.mxu0 0
  %2404 = vmatmul.mubr.bf16.gmra.mxu0 %v1346
  %v2405 = vpop.f32.mrf.mxu0
  %v2406 = vadd.f32 0.0, %v2405
  %v2407 = vpop.f32.mrf.mxu0
  %v2408 = vpop.f32.mrf.mxu0
  %v2409 = vadd.f32 0.0, %v2408
  %v2410 = vpop.f32.mrf.mxu0
  %2411 = vmatprep.mubr.bf16.mxu0 0
  %2412 = vmatmul.mubr.bf16.gmra.mxu0 %v1347
  %v2413 = vpop.f32.mrf.mxu0
  %v2414 = vadd.f32 0.0, %v2413
  %v2415 = vpop.f32.mrf.mxu0
  %v2416 = vpop.f32.mrf.mxu0
  %v2417 = vadd.f32 0.0, %v2416
  %v2418 = vpop.f32.mrf.mxu0
  %2419 = vmatprep.mubr.bf16.mxu0 0
  %2420 = vmatmul.mubr.bf16.gmra.mxu0 %v1348
  %v2421 = vpop.f32.mrf.mxu0
  %v2422 = vadd.f32 0.0, %v2421
  %v2423 = vpop.f32.mrf.mxu0
  %v2424 = vpop.f32.mrf.mxu0
  %v2425 = vadd.f32 0.0, %v2424
  %v2426 = vpop.f32.mrf.mxu0
  %2427 = vmatprep.mubr.bf16.mxu0 0
  %2428 = vmatmul.mubr.bf16.gmra.mxu0 %v1349
  %v2429 = vpop.f32.mrf.mxu0
  %v2430 = vadd.f32 0.0, %v2429
  %v2431 = vpop.f32.mrf.mxu0
  %v2432 = vpop.f32.mrf.mxu0
  %v2433 = vadd.f32 0.0, %v2432
  %v2434 = vpop.f32.mrf.mxu0
  %2435 = vmatprep.mubr.bf16.mxu0 0
  %2436 = vmatmul.mubr.bf16.gmra.mxu0 %v1350
  %v2437 = vpop.f32.mrf.mxu0
  %v2438 = vadd.f32 0.0, %v2437
  %v2439 = vpop.f32.mrf.mxu0
  %v2440 = vpop.f32.mrf.mxu0
  %v2441 = vadd.f32 0.0, %v2440
  %v2442 = vpop.f32.mrf.mxu0
  %2443 = vmatprep.mubr.bf16.mxu0 0
  %2444 = vmatmul.mubr.bf16.gmra.mxu0 %v1351
  %v2445 = vpop.f32.mrf.mxu0
  %v2446 = vadd.f32 0.0, %v2445
  %v2447 = vpop.f32.mrf.mxu0
  %v2448 = vpop.f32.mrf.mxu0
  %v2449 = vadd.f32 0.0, %v2448
  %v2450 = vpop.f32.mrf.mxu0
  %2451 = vmatprep.mubr.bf16.mxu0 0
  %2452 = vmatmul.mubr.bf16.gmra.mxu0 %v1352
  %v2453 = vpop.f32.mrf.mxu0
  %v2454 = vadd.f32 0.0, %v2453
  %v2455 = vpop.f32.mrf.mxu0
  %v2456 = vpop.f32.mrf.mxu0
  %v2457 = vadd.f32 0.0, %v2456
  %v2458 = vpop.f32.mrf.mxu0
  %2459 = vmatprep.mubr.bf16.mxu0 0
  %2460 = vmatmul.mubr.bf16.gmra.mxu0 %v1353
  %v2461 = vpop.f32.mrf.mxu0
  %v2462 = vadd.f32 0.0, %v2461
  %v2463 = vpop.f32.mrf.mxu0
  %v2464 = vpop.f32.mrf.mxu0
  %v2465 = vadd.f32 0.0, %v2464
  %v2466 = vpop.f32.mrf.mxu0
  %2467 = vmatprep.mubr.bf16.mxu0 0
  %2468 = vmatmul.mubr.bf16.gmra.mxu0 %v1354
  %v2469 = vpop.f32.mrf.mxu0
  %v2470 = vadd.f32 0.0, %v2469
  %v2471 = vpop.f32.mrf.mxu0
  %v2472 = vpop.f32.mrf.mxu0
  %v2473 = vadd.f32 0.0, %v2472
  %v2474 = vpop.f32.mrf.mxu0
  %2475 = vdwg.mxu0
  %v2476 = vadd.f32 %v1803, %v1966
  %v2477 = vadd.f32 %v1804, %v1969
  %v2478 = vadd.f32 %v1805, %v1974
  %v2479 = vadd.f32 %v1806, %v1977
  %v2480 = vadd.f32 %v1807, %v1982
  %v2481 = vadd.f32 %v1808, %v1985
  %v2482 = vadd.f32 %v1809, %v1990
  %v2483 = vadd.f32 %v1810, %v1993
  %v2484 = vadd.f32 %v1811, %v1998
  %v2485 = vadd.f32 %v1812, %v2001
  %v2486 = vadd.f32 %v1813, %v2006
  %v2487 = vadd.f32 %v1814, %v2009
  %v2488 = vadd.f32 %v1815, %v2014
  %v2489 = vadd.f32 %v1816, %v2017
  %v2490 = vadd.f32 %v1817, %v2022
  %v2491 = vadd.f32 %v1818, %v2025
  %v2492 = vadd.f32 %v1819, %v2030
  %v2493 = vadd.f32 %v1820, %v2033
  %v2494 = vadd.f32 %v1821, %v2038
  %v2495 = vadd.f32 %v1822, %v2041
  %v2496 = vadd.f32 %v1823, %v2046
  %v2497 = vadd.f32 %v1824, %v2049
  %v2498 = vadd.f32 %v1825, %v2054
  %v2499 = vadd.f32 %v1826, %v2057
  %v2500 = vadd.f32 %v1827, %v2062
  %v2501 = vadd.f32 %v1828, %v2065
  %v2502 = vadd.f32 %v1829, %v2070
  %v2503 = vadd.f32 %v1830, %v2073
  %v2504 = vadd.f32 %v1831, %v2078
  %v2505 = vadd.f32 %v1832, %v2081
  %v2506 = vadd.f32 %v1833, %v2086
  %v2507 = vadd.f32 %v1834, %v2089
  %v2508 = vadd.f32 %v1835, %v2094
  %v2509 = vadd.f32 %v1836, %v2097
  %v2510 = vadd.f32 %v1837, %v2102
  %v2511 = vadd.f32 %v1838, %v2105
  %v2512 = vadd.f32 %v1839, %v2110
  %v2513 = vadd.f32 %v1840, %v2113
  %v2514 = vadd.f32 %v1841, %v2118
  %v2515 = vadd.f32 %v1842, %v2121
  %v2516 = vadd.f32 %v1843, %v2126
  %v2517 = vadd.f32 %v1844, %v2129
  %v2518 = vadd.f32 %v1845, %v2134
  %v2519 = vadd.f32 %v1846, %v2137
  %v2520 = vadd.f32 %v1847, %v2142
  %v2521 = vadd.f32 %v1848, %v2145
  %v2522 = vadd.f32 %v1849, %v2150
  %v2523 = vadd.f32 %v1850, %v2153
  %v2524 = vadd.f32 %v1851, %v2158
  %v2525 = vadd.f32 %v1852, %v2161
  %v2526 = vadd.f32 %v1853, %v2166
  %v2527 = vadd.f32 %v1854, %v2169
  %v2528 = vadd.f32 %v1855, %v2174
  %v2529 = vadd.f32 %v1856, %v2177
  %v2530 = vadd.f32 %v1857, %v2182
  %v2531 = vadd.f32 %v1858, %v2185
  %v2532 = vadd.f32 %v1859, %v2190
  %v2533 = vadd.f32 %v1860, %v2193
  %v2534 = vadd.f32 %v1861, %v2198
  %v2535 = vadd.f32 %v1862, %v2201
  %v2536 = vadd.f32 %v1863, %v2206
  %v2537 = vadd.f32 %v1864, %v2209
  %v2538 = vadd.f32 %v1865, %v2214
  %v2539 = vadd.f32 %v1866, %v2217
  %v2540 = vadd.f32 %v1867, %v2222
  %v2541 = vadd.f32 %v1868, %v2225
  %v2542 = vadd.f32 %v1869, %v2230
  %v2543 = vadd.f32 %v1870, %v2233
  %v2544 = vadd.f32 %v1871, %v2238
  %v2545 = vadd.f32 %v1872, %v2241
  %v2546 = vadd.f32 %v1873, %v2246
  %v2547 = vadd.f32 %v1874, %v2249
  %v2548 = vadd.f32 %v1875, %v2254
  %v2549 = vadd.f32 %v1876, %v2257
  %v2550 = vadd.f32 %v1877, %v2262
  %v2551 = vadd.f32 %v1878, %v2265
  %v2552 = vadd.f32 %v1879, %v2270
  %v2553 = vadd.f32 %v1880, %v2273
  %v2554 = vadd.f32 %v1881, %v2278
  %v2555 = vadd.f32 %v1882, %v2281
  %v2556 = vadd.f32 %v1883, %v2286
  %v2557 = vadd.f32 %v1884, %v2289
  %v2558 = vadd.f32 %v1885, %v2294
  %v2559 = vadd.f32 %v1886, %v2297
  %v2560 = vadd.f32 %v1887, %v2302
  %v2561 = vadd.f32 %v1888, %v2305
  %v2562 = vadd.f32 %v1889, %v2310
  %v2563 = vadd.f32 %v1890, %v2313
  %v2564 = vadd.f32 %v1891, %v2318
  %v2565 = vadd.f32 %v1892, %v2321
  %v2566 = vadd.f32 %v1893, %v2326
  %v2567 = vadd.f32 %v1894, %v2329
  %v2568 = vadd.f32 %v1895, %v2334
  %v2569 = vadd.f32 %v1896, %v2337
  %v2570 = vadd.f32 %v1897, %v2342
  %v2571 = vadd.f32 %v1898, %v2345
  %v2572 = vadd.f32 %v1899, %v2350
  %v2573 = vadd.f32 %v1900, %v2353
  %v2574 = vadd.f32 %v1901, %v2358
  %v2575 = vadd.f32 %v1902, %v2361
  %v2576 = vadd.f32 %v1903, %v2366
  %v2577 = vadd.f32 %v1904, %v2369
  %v2578 = vadd.f32 %v1905, %v2374
  %v2579 = vadd.f32 %v1906, %v2377
  %v2580 = vadd.f32 %v1907, %v2382
  %v2581 = vadd.f32 %v1908, %v2385
  %v2582 = vadd.f32 %v1909, %v2390
  %v2583 = vadd.f32 %v1910, %v2393
  %v2584 = vadd.f32 %v1911, %v2398
  %v2585 = vadd.f32 %v1912, %v2401
  %v2586 = vadd.f32 %v1913, %v2406
  %v2587 = vadd.f32 %v1914, %v2409
  %v2588 = vadd.f32 %v1915, %v2414
  %v2589 = vadd.f32 %v1916, %v2417
  %v2590 = vadd.f32 %v1917, %v2422
  %v2591 = vadd.f32 %v1918, %v2425
  %v2592 = vadd.f32 %v1919, %v2430
  %v2593 = vadd.f32 %v1920, %v2433
  %v2594 = vadd.f32 %v1921, %v2438
  %v2595 = vadd.f32 %v1922, %v2441
  %v2596 = vadd.f32 %v1923, %v2446
  %v2597 = vadd.f32 %v1924, %v2449
  %v2598 = vadd.f32 %v1925, %v2454
  %v2599 = vadd.f32 %v1926, %v2457
  %v2600 = vadd.f32 %v1927, %v2462
  %v2601 = vadd.f32 %v1928, %v2465
  %v2602 = vadd.f32 %v1929, %v2470
  %v2603 = vadd.f32 %v1930, %v2473
  %2604 = vst [vmem:[#allocation2] sm:$0xff] %v2476
  %2605 = vst [vmem:[#allocation2 + $0x8] sm:$0xff] %v2477
  %2606 = vst [vmem:[#allocation2 + $0x10] sm:$0xff] %v2478
  %2607 = vst [vmem:[#allocation2 + $0x18] sm:$0xff] %v2479
  %2608 = vst [vmem:[#allocation2 + $0x20] sm:$0xff] %v2480
  %2609 = vst [vmem:[#allocation2 + $0x28] sm:$0xff] %v2481
  %2610 = vst [vmem:[#allocation2 + $0x30] sm:$0xff] %v2482
  %2611 = vst [vmem:[#allocation2 + $0x38] sm:$0xff] %v2483
  %2612 = vst [vmem:[#allocation2 + $0x40] sm:$0xff] %v2484
  %2613 = vst [vmem:[#allocation2 + $0x48] sm:$0xff] %v2485
  %2614 = vst [vmem:[#allocation2 + $0x50] sm:$0xff] %v2486
  %2615 = vst [vmem:[#allocation2 + $0x58] sm:$0xff] %v2487
  %2616 = vst [vmem:[#allocation2 + $0x60] sm:$0xff] %v2488
  %2617 = vst [vmem:[#allocation2 + $0x68] sm:$0xff] %v2489
  %2618 = vst [vmem:[#allocation2 + $0x70] sm:$0xff] %v2490
  %2619 = vst [vmem:[#allocation2 + $0x78] sm:$0xff] %v2491
  %2620 = vst [vmem:[#allocation2 + $0x80] sm:$0xff] %v2492
  %2621 = vst [vmem:[#allocation2 + $0x88] sm:$0xff] %v2493
  %2622 = vst [vmem:[#allocation2 + $0x90] sm:$0xff] %v2494
  %2623 = vst [vmem:[#allocation2 + $0x98] sm:$0xff] %v2495
  %2624 = vst [vmem:[#allocation2 + $0xa0] sm:$0xff] %v2496
  %2625 = vst [vmem:[#allocation2 + $0xa8] sm:$0xff] %v2497
  %2626 = vst [vmem:[#allocation2 + $0xb0] sm:$0xff] %v2498
  %2627 = vst [vmem:[#allocation2 + $0xb8] sm:$0xff] %v2499
  %2628 = vst [vmem:[#allocation2 + $0xc0] sm:$0xff] %v2500
  %2629 = vst [vmem:[#allocation2 + $0xc8] sm:$0xff] %v2501
  %2630 = vst [vmem:[#allocation2 + $0xd0] sm:$0xff] %v2502
  %2631 = vst [vmem:[#allocation2 + $0xd8] sm:$0xff] %v2503
  %2632 = vst [vmem:[#allocation2 + $0xe0] sm:$0xff] %v2504
  %2633 = vst [vmem:[#allocation2 + $0xe8] sm:$0xff] %v2505
  %2634 = vst [vmem:[#allocation2 + $0xf0] sm:$0xff] %v2506
  %2635 = vst [vmem:[#allocation2 + $0xf8] sm:$0xff] %v2507
  %2636 = vst [vmem:[#allocation2 + $0x100] sm:$0xff] %v2508
  %2637 = vst [vmem:[#allocation2 + $0x108] sm:$0xff] %v2509
  %2638 = vst [vmem:[#allocation2 + $0x110] sm:$0xff] %v2510
  %2639 = vst [vmem:[#allocation2 + $0x118] sm:$0xff] %v2511
  %2640 = vst [vmem:[#allocation2 + $0x120] sm:$0xff] %v2512
  %2641 = vst [vmem:[#allocation2 + $0x128] sm:$0xff] %v2513
  %2642 = vst [vmem:[#allocation2 + $0x130] sm:$0xff] %v2514
  %2643 = vst [vmem:[#allocation2 + $0x138] sm:$0xff] %v2515
  %2644 = vst [vmem:[#allocation2 + $0x140] sm:$0xff] %v2516
  %2645 = vst [vmem:[#allocation2 + $0x148] sm:$0xff] %v2517
  %2646 = vst [vmem:[#allocation2 + $0x150] sm:$0xff] %v2518
  %2647 = vst [vmem:[#allocation2 + $0x158] sm:$0xff] %v2519
  %2648 = vst [vmem:[#allocation2 + $0x160] sm:$0xff] %v2520
  %2649 = vst [vmem:[#allocation2 + $0x168] sm:$0xff] %v2521
  %2650 = vst [vmem:[#allocation2 + $0x170] sm:$0xff] %v2522
  %2651 = vst [vmem:[#allocation2 + $0x178] sm:$0xff] %v2523
  %2652 = vst [vmem:[#allocation2 + $0x180] sm:$0xff] %v2524
  %2653 = vst [vmem:[#allocation2 + $0x188] sm:$0xff] %v2525
  %2654 = vst [vmem:[#allocation2 + $0x190] sm:$0xff] %v2526
  %2655 = vst [vmem:[#allocation2 + $0x198] sm:$0xff] %v2527
  %2656 = vst [vmem:[#allocation2 + $0x1a0] sm:$0xff] %v2528
  %2657 = vst [vmem:[#allocation2 + $0x1a8] sm:$0xff] %v2529
  %2658 = vst [vmem:[#allocation2 + $0x1b0] sm:$0xff] %v2530
  %2659 = vst [vmem:[#allocation2 + $0x1b8] sm:$0xff] %v2531
  %2660 = vst [vmem:[#allocation2 + $0x1c0] sm:$0xff] %v2532
  %2661 = vst [vmem:[#allocation2 + $0x1c8] sm:$0xff] %v2533
  %2662 = vst [vmem:[#allocation2 + $0x1d0] sm:$0xff] %v2534
  %2663 = vst [vmem:[#allocation2 + $0x1d8] sm:$0xff] %v2535
  %2664 = vst [vmem:[#allocation2 + $0x1e0] sm:$0xff] %v2536
  %2665 = vst [vmem:[#allocation2 + $0x1e8] sm:$0xff] %v2537
  %2666 = vst [vmem:[#allocation2 + $0x1f0] sm:$0xff] %v2538
  %2667 = vst [vmem:[#allocation2 + $0x1f8] sm:$0xff] %v2539
  %2668 = vst [vmem:[#allocation2 + $0x200] sm:$0xff] %v2540
  %2669 = vst [vmem:[#allocation2 + $0x208] sm:$0xff] %v2541
  %2670 = vst [vmem:[#allocation2 + $0x210] sm:$0xff] %v2542
  %2671 = vst [vmem:[#allocation2 + $0x218] sm:$0xff] %v2543
  %2672 = vst [vmem:[#allocation2 + $0x220] sm:$0xff] %v2544
  %2673 = vst [vmem:[#allocation2 + $0x228] sm:$0xff] %v2545
  %2674 = vst [vmem:[#allocation2 + $0x230] sm:$0xff] %v2546
  %2675 = vst [vmem:[#allocation2 + $0x238] sm:$0xff] %v2547
  %2676 = vst [vmem:[#allocation2 + $0x240] sm:$0xff] %v2548
  %2677 = vst [vmem:[#allocation2 + $0x248] sm:$0xff] %v2549
  %2678 = vst [vmem:[#allocation2 + $0x250] sm:$0xff] %v2550
  %2679 = vst [vmem:[#allocation2 + $0x258] sm:$0xff] %v2551
  %2680 = vst [vmem:[#allocation2 + $0x260] sm:$0xff] %v2552
  %2681 = vst [vmem:[#allocation2 + $0x268] sm:$0xff] %v2553
  %2682 = vst [vmem:[#allocation2 + $0x270] sm:$0xff] %v2554
  %2683 = vst [vmem:[#allocation2 + $0x278] sm:$0xff] %v2555
  %2684 = vst [vmem:[#allocation2 + $0x280] sm:$0xff] %v2556
  %2685 = vst [vmem:[#allocation2 + $0x288] sm:$0xff] %v2557
  %2686 = vst [vmem:[#allocation2 + $0x290] sm:$0xff] %v2558
  %2687 = vst [vmem:[#allocation2 + $0x298] sm:$0xff] %v2559
  %2688 = vst [vmem:[#allocation2 + $0x2a0] sm:$0xff] %v2560
  %2689 = vst [vmem:[#allocation2 + $0x2a8] sm:$0xff] %v2561
  %2690 = vst [vmem:[#allocation2 + $0x2b0] sm:$0xff] %v2562
  %2691 = vst [vmem:[#allocation2 + $0x2b8] sm:$0xff] %v2563
  %2692 = vst [vmem:[#allocation2 + $0x2c0] sm:$0xff] %v2564
  %2693 = vst [vmem:[#allocation2 + $0x2c8] sm:$0xff] %v2565
  %2694 = vst [vmem:[#allocation2 + $0x2d0] sm:$0xff] %v2566
  %2695 = vst [vmem:[#allocation2 + $0x2d8] sm:$0xff] %v2567
  %2696 = vst [vmem:[#allocation2 + $0x2e0] sm:$0xff] %v2568
  %2697 = vst [vmem:[#allocation2 + $0x2e8] sm:$0xff] %v2569
  %2698 = vst [vmem:[#allocation2 + $0x2f0] sm:$0xff] %v2570
  %2699 = vst [vmem:[#allocation2 + $0x2f8] sm:$0xff] %v2571
  %2700 = vst [vmem:[#allocation2 + $0x300] sm:$0xff] %v2572
  %2701 = vst [vmem:[#allocation2 + $0x308] sm:$0xff] %v2573
  %2702 = vst [vmem:[#allocation2 + $0x310] sm:$0xff] %v2574
  %2703 = vst [vmem:[#allocation2 + $0x318] sm:$0xff] %v2575
  %2704 = vst [vmem:[#allocation2 + $0x320] sm:$0xff] %v2576
  %2705 = vst [vmem:[#allocation2 + $0x328] sm:$0xff] %v2577
  %2706 = vst [vmem:[#allocation2 + $0x330] sm:$0xff] %v2578
  %2707 = vst [vmem:[#allocation2 + $0x338] sm:$0xff] %v2579
  %2708 = vst [vmem:[#allocation2 + $0x340] sm:$0xff] %v2580
  %2709 = vst [vmem:[#allocation2 + $0x348] sm:$0xff] %v2581
  %2710 = vst [vmem:[#allocation2 + $0x350] sm:$0xff] %v2582
  %2711 = vst [vmem:[#allocation2 + $0x358] sm:$0xff] %v2583
  %2712 = vst [vmem:[#allocation2 + $0x360] sm:$0xff] %v2584
  %2713 = vst [vmem:[#allocation2 + $0x368] sm:$0xff] %v2585
  %2714 = vst [vmem:[#allocation2 + $0x370] sm:$0xff] %v2586
  %2715 = vst [vmem:[#allocation2 + $0x378] sm:$0xff] %v2587
  %2716 = vst [vmem:[#allocation2 + $0x380] sm:$0xff] %v2588
  %2717 = vst [vmem:[#allocation2 + $0x388] sm:$0xff] %v2589
  %2718 = vst [vmem:[#allocation2 + $0x390] sm:$0xff] %v2590
  %2719 = vst [vmem:[#allocation2 + $0x398] sm:$0xff] %v2591
  %2720 = vst [vmem:[#allocation2 + $0x3a0] sm:$0xff] %v2592
  %2721 = vst [vmem:[#allocation2 + $0x3a8] sm:$0xff] %v2593
  %2722 = vst [vmem:[#allocation2 + $0x3b0] sm:$0xff] %v2594
  %2723 = vst [vmem:[#allocation2 + $0x3b8] sm:$0xff] %v2595
  %2724 = vst [vmem:[#allocation2 + $0x3c0] sm:$0xff] %v2596
  %2725 = vst [vmem:[#allocation2 + $0x3c8] sm:$0xff] %v2597
  %2726 = vst [vmem:[#allocation2 + $0x3d0] sm:$0xff] %v2598
  %2727 = vst [vmem:[#allocation2 + $0x3d8] sm:$0xff] %v2599
  %2728 = vst [vmem:[#allocation2 + $0x3e0] sm:$0xff] %v2600
  %2729 = vst [vmem:[#allocation2 + $0x3e8] sm:$0xff] %v2601
  %2730 = vst [vmem:[#allocation2 + $0x3f0] sm:$0xff] %v2602
  %2731 = vst [vmem:[#allocation2 + $0x3f8] sm:$0xff] %v2603
  %v2732 = vld [vmem:[#allocation3] sm:$0xff]
  %v2733 = vld [vmem:[#allocation3 + $0x8] sm:$0xff]
  %v2734 = vld [vmem:[#allocation3 + $0x10] sm:$0xff]
  %v2735 = vld [vmem:[#allocation3 + $0x18] sm:$0xff]
  %v2736 = vld [vmem:[#allocation3 + $0x20] sm:$0xff]
  %v2737 = vld [vmem:[#allocation3 + $0x28] sm:$0xff]
  %v2738 = vld [vmem:[#allocation3 + $0x30] sm:$0xff]
  %v2739 = vld [vmem:[#allocation3 + $0x38] sm:$0xff]
  %v2740 = vld [vmem:[#allocation3 + $0x40] sm:$0xff]
  %v2741 = vld [vmem:[#allocation3 + $0x48] sm:$0xff]
  %v2742 = vld [vmem:[#allocation3 + $0x50] sm:$0xff]
  %v2743 = vld [vmem:[#allocation3 + $0x58] sm:$0xff]
  %v2744 = vld [vmem:[#allocation3 + $0x60] sm:$0xff]
  %v2745 = vld [vmem:[#allocation3 + $0x68] sm:$0xff]
  %v2746 = vld [vmem:[#allocation3 + $0x70] sm:$0xff]
  %v2747 = vld [vmem:[#allocation3 + $0x78] sm:$0xff]
  %v2748 = vld [vmem:[#allocation3 + $0x80] sm:$0xff]
  %v2749 = vld [vmem:[#allocation3 + $0x88] sm:$0xff]
  %v2750 = vld [vmem:[#allocation3 + $0x90] sm:$0xff]
  %v2751 = vld [vmem:[#allocation3 + $0x98] sm:$0xff]
  %v2752 = vld [vmem:[#allocation3 + $0xa0] sm:$0xff]
  %v2753 = vld [vmem:[#allocation3 + $0xa8] sm:$0xff]
  %v2754 = vld [vmem:[#allocation3 + $0xb0] sm:$0xff]
  %v2755 = vld [vmem:[#allocation3 + $0xb8] sm:$0xff]
  %v2756 = vld [vmem:[#allocation3 + $0xc0] sm:$0xff]
  %v2757 = vld [vmem:[#allocation3 + $0xc8] sm:$0xff]
  %v2758 = vld [vmem:[#allocation3 + $0xd0] sm:$0xff]
  %v2759 = vld [vmem:[#allocation3 + $0xd8] sm:$0xff]
  %v2760 = vld [vmem:[#allocation3 + $0xe0] sm:$0xff]
  %v2761 = vld [vmem:[#allocation3 + $0xe8] sm:$0xff]
  %v2762 = vld [vmem:[#allocation3 + $0xf0] sm:$0xff]
  %v2763 = vld [vmem:[#allocation3 + $0xf8] sm:$0xff]
  %v2764 = vld [vmem:[#allocation3 + $0x100] sm:$0xff]
  %v2765 = vld [vmem:[#allocation3 + $0x108] sm:$0xff]
  %v2766 = vld [vmem:[#allocation3 + $0x110] sm:$0xff]
  %v2767 = vld [vmem:[#allocation3 + $0x118] sm:$0xff]
  %v2768 = vld [vmem:[#allocation3 + $0x120] sm:$0xff]
  %v2769 = vld [vmem:[#allocation3 + $0x128] sm:$0xff]
  %v2770 = vld [vmem:[#allocation3 + $0x130] sm:$0xff]
  %v2771 = vld [vmem:[#allocation3 + $0x138] sm:$0xff]
  %v2772 = vld [vmem:[#allocation3 + $0x140] sm:$0xff]
  %v2773 = vld [vmem:[#allocation3 + $0x148] sm:$0xff]
  %v2774 = vld [vmem:[#allocation3 + $0x150] sm:$0xff]
  %v2775 = vld [vmem:[#allocation3 + $0x158] sm:$0xff]
  %v2776 = vld [vmem:[#allocation3 + $0x160] sm:$0xff]
  %v2777 = vld [vmem:[#allocation3 + $0x168] sm:$0xff]
  %v2778 = vld [vmem:[#allocation3 + $0x170] sm:$0xff]
  %v2779 = vld [vmem:[#allocation3 + $0x178] sm:$0xff]
  %v2780 = vld [vmem:[#allocation3 + $0x180] sm:$0xff]
  %v2781 = vld [vmem:[#allocation3 + $0x188] sm:$0xff]
  %v2782 = vld [vmem:[#allocation3 + $0x190] sm:$0xff]
  %v2783 = vld [vmem:[#allocation3 + $0x198] sm:$0xff]
  %v2784 = vld [vmem:[#allocation3 + $0x1a0] sm:$0xff]
  %v2785 = vld [vmem:[#allocation3 + $0x1a8] sm:$0xff]
  %v2786 = vld [vmem:[#allocation3 + $0x1b0] sm:$0xff]
  %v2787 = vld [vmem:[#allocation3 + $0x1b8] sm:$0xff]
  %v2788 = vld [vmem:[#allocation3 + $0x1c0] sm:$0xff]
  %v2789 = vld [vmem:[#allocation3 + $0x1c8] sm:$0xff]
  %v2790 = vld [vmem:[#allocation3 + $0x1d0] sm:$0xff]
  %v2791 = vld [vmem:[#allocation3 + $0x1d8] sm:$0xff]
  %v2792 = vld [vmem:[#allocation3 + $0x1e0] sm:$0xff]
  %v2793 = vld [vmem:[#allocation3 + $0x1e8] sm:$0xff]
  %v2794 = vld [vmem:[#allocation3 + $0x1f0] sm:$0xff]
  %v2795 = vld [vmem:[#allocation3 + $0x1f8] sm:$0xff]
  %v2796 = vld [vmem:[#allocation3 + $0x200] sm:$0xff]
  %v2797 = vld [vmem:[#allocation3 + $0x208] sm:$0xff]
  %v2798 = vld [vmem:[#allocation3 + $0x210] sm:$0xff]
  %v2799 = vld [vmem:[#allocation3 + $0x218] sm:$0xff]
  %v2800 = vld [vmem:[#allocation3 + $0x220] sm:$0xff]
  %v2801 = vld [vmem:[#allocation3 + $0x228] sm:$0xff]
  %v2802 = vld [vmem:[#allocation3 + $0x230] sm:$0xff]
  %v2803 = vld [vmem:[#allocation3 + $0x238] sm:$0xff]
  %v2804 = vld [vmem:[#allocation3 + $0x240] sm:$0xff]
  %v2805 = vld [vmem:[#allocation3 + $0x248] sm:$0xff]
  %v2806 = vld [vmem:[#allocation3 + $0x250] sm:$0xff]
  %v2807 = vld [vmem:[#allocation3 + $0x258] sm:$0xff]
  %v2808 = vld [vmem:[#allocation3 + $0x260] sm:$0xff]
  %v2809 = vld [vmem:[#allocation3 + $0x268] sm:$0xff]
  %v2810 = vld [vmem:[#allocation3 + $0x270] sm:$0xff]
  %v2811 = vld [vmem:[#allocation3 + $0x278] sm:$0xff]
  %v2812 = vld [vmem:[#allocation3 + $0x280] sm:$0xff]
  %v2813 = vld [vmem:[#allocation3 + $0x288] sm:$0xff]
  %v2814 = vld [vmem:[#allocation3 + $0x290] sm:$0xff]
  %v2815 = vld [vmem:[#allocation3 + $0x298] sm:$0xff]
  %v2816 = vld [vmem:[#allocation3 + $0x2a0] sm:$0xff]
  %v2817 = vld [vmem:[#allocation3 + $0x2a8] sm:$0xff]
  %v2818 = vld [vmem:[#allocation3 + $0x2b0] sm:$0xff]
  %v2819 = vld [vmem:[#allocation3 + $0x2b8] sm:$0xff]
  %v2820 = vld [vmem:[#allocation3 + $0x2c0] sm:$0xff]
  %v2821 = vld [vmem:[#allocation3 + $0x2c8] sm:$0xff]
  %v2822 = vld [vmem:[#allocation3 + $0x2d0] sm:$0xff]
  %v2823 = vld [vmem:[#allocation3 + $0x2d8] sm:$0xff]
  %v2824 = vld [vmem:[#allocation3 + $0x2e0] sm:$0xff]
  %v2825 = vld [vmem:[#allocation3 + $0x2e8] sm:$0xff]
  %v2826 = vld [vmem:[#allocation3 + $0x2f0] sm:$0xff]
  %v2827 = vld [vmem:[#allocation3 + $0x2f8] sm:$0xff]
  %v2828 = vld [vmem:[#allocation3 + $0x300] sm:$0xff]
  %v2829 = vld [vmem:[#allocation3 + $0x308] sm:$0xff]
  %v2830 = vld [vmem:[#allocation3 + $0x310] sm:$0xff]
  %v2831 = vld [vmem:[#allocation3 + $0x318] sm:$0xff]
  %v2832 = vld [vmem:[#allocation3 + $0x320] sm:$0xff]
  %v2833 = vld [vmem:[#allocation3 + $0x328] sm:$0xff]
  %v2834 = vld [vmem:[#allocation3 + $0x330] sm:$0xff]
  %v2835 = vld [vmem:[#allocation3 + $0x338] sm:$0xff]
  %v2836 = vld [vmem:[#allocation3 + $0x340] sm:$0xff]
  %v2837 = vld [vmem:[#allocation3 + $0x348] sm:$0xff]
  %v2838 = vld [vmem:[#allocation3 + $0x350] sm:$0xff]
  %v2839 = vld [vmem:[#allocation3 + $0x358] sm:$0xff]
  %v2840 = vld [vmem:[#allocation3 + $0x360] sm:$0xff]
  %v2841 = vld [vmem:[#allocation3 + $0x368] sm:$0xff]
  %v2842 = vld [vmem:[#allocation3 + $0x370] sm:$0xff]
  %v2843 = vld [vmem:[#allocation3 + $0x378] sm:$0xff]
  %v2844 = vld [vmem:[#allocation3 + $0x380] sm:$0xff]
  %v2845 = vld [vmem:[#allocation3 + $0x388] sm:$0xff]
  %v2846 = vld [vmem:[#allocation3 + $0x390] sm:$0xff]
  %v2847 = vld [vmem:[#allocation3 + $0x398] sm:$0xff]
  %v2848 = vld [vmem:[#allocation3 + $0x3a0] sm:$0xff]
  %v2849 = vld [vmem:[#allocation3 + $0x3a8] sm:$0xff]
  %v2850 = vld [vmem:[#allocation3 + $0x3b0] sm:$0xff]
  %v2851 = vld [vmem:[#allocation3 + $0x3b8] sm:$0xff]
  %v2852 = vld [vmem:[#allocation3 + $0x3c0] sm:$0xff]
  %v2853 = vld [vmem:[#allocation3 + $0x3c8] sm:$0xff]
  %v2854 = vld [vmem:[#allocation3 + $0x3d0] sm:$0xff]
  %v2855 = vld [vmem:[#allocation3 + $0x3d8] sm:$0xff]
  %v2856 = vld [vmem:[#allocation3 + $0x3e0] sm:$0xff]
  %v2857 = vld [vmem:[#allocation3 + $0x3e8] sm:$0xff]
  %v2858 = vld [vmem:[#allocation3 + $0x3f0] sm:$0xff]
  %v2859 = vld [vmem:[#allocation3 + $0x3f8] sm:$0xff]
  %2860 = vmatprep.subr.bf16.mxu0 0
  %2861 = vmatpush1.bf16.msra.mxu0 1065369472
  %2862 = vmatprep.subr.bf16.mxu0 0
  %2863 = vmatpush1.bf16.msra.mxu0 1065369472
  %2864 = vmatprep.subr.bf16.mxu0 0
  %2865 = vmatpush1.bf16.msra.mxu0 1065369472
  %2866 = vmatprep.subr.bf16.mxu0 0
  %2867 = vmatpush1.bf16.msra.mxu0 1065369472
  %2868 = vmatprep.subr.bf16.mxu0 0
  %2869 = vmatpush1.bf16.msra.mxu0 1065369472
  %2870 = vmatprep.subr.bf16.mxu0 0
  %2871 = vmatpush1.bf16.msra.mxu0 1065369472
  %2872 = vmatprep.subr.bf16.mxu0 0
  %2873 = vmatpush1.bf16.msra.mxu0 1065369472
  %2874 = vmatprep.subr.bf16.mxu0 0
  %2875 = vmatpush1.bf16.msra.mxu0 1065369472
  %2876 = vmatprep.subr.bf16.mxu0 0
  %2877 = vmatpush2.bf16.msra.mxu0 0
  %2878 = vmatprep.subr.bf16.mxu0 0
  %2879 = vmatpush2.bf16.msra.mxu0 0
  %2880 = vmatprep.subr.bf16.mxu0 0
  %2881 = vmatpush2.bf16.msra.mxu0 0
  %2882 = vmatprep.subr.bf16.mxu0 0
  %2883 = vmatpush2.bf16.msra.mxu0 0
  %2884 = vmatprep.subr.bf16.mxu0 0
  %2885 = vmatpush2.bf16.msra.mxu0 0
  %2886 = vmatprep.subr.bf16.mxu0 0
  %2887 = vmatpush2.bf16.msra.mxu0 0
  %2888 = vmatprep.subr.bf16.mxu0 0
  %2889 = vmatpush2.bf16.msra.mxu0 0
  %2890 = vmatprep.subr.bf16.mxu0 0
  %2891 = vmatpush2.bf16.msra.mxu0 0
  %2892 = vmatprep.mubr.bf16.mxu0 0
  %2893 = vmatmul.mubr.bf16.gmra.mxu0 %v1739
  %v2894 = vpop.f32.mrf.mxu0
  %v2895 = vadd.f32 0.0, %v2894
  %v2896 = vpop.f32.mrf.mxu0
  %v2897 = vpop.f32.mrf.mxu0
  %v2898 = vadd.f32 0.0, %v2897
  %v2899 = vpop.f32.mrf.mxu0
  %2900 = vmatprep.mubr.bf16.mxu0 0
  %2901 = vmatmul.mubr.bf16.gmra.mxu0 %v1740
  %v2902 = vpop.f32.mrf.mxu0
  %v2903 = vadd.f32 0.0, %v2902
  %v2904 = vpop.f32.mrf.mxu0
  %v2905 = vpop.f32.mrf.mxu0
  %v2906 = vadd.f32 0.0, %v2905
  %v2907 = vpop.f32.mrf.mxu0
  %2908 = vmatprep.mubr.bf16.mxu0 0
  %2909 = vmatmul.mubr.bf16.gmra.mxu0 %v1741
  %v2910 = vpop.f32.mrf.mxu0
  %v2911 = vadd.f32 0.0, %v2910
  %v2912 = vpop.f32.mrf.mxu0
  %v2913 = vpop.f32.mrf.mxu0
  %v2914 = vadd.f32 0.0, %v2913
  %v2915 = vpop.f32.mrf.mxu0
  %2916 = vmatprep.mubr.bf16.mxu0 0
  %2917 = vmatmul.mubr.bf16.gmra.mxu0 %v1742
  %v2918 = vpop.f32.mrf.mxu0
  %v2919 = vadd.f32 0.0, %v2918
  %v2920 = vpop.f32.mrf.mxu0
  %v2921 = vpop.f32.mrf.mxu0
  %v2922 = vadd.f32 0.0, %v2921
  %v2923 = vpop.f32.mrf.mxu0
  %2924 = vmatprep.mubr.bf16.mxu0 0
  %2925 = vmatmul.mubr.bf16.gmra.mxu0 %v1743
  %v2926 = vpop.f32.mrf.mxu0
  %v2927 = vadd.f32 0.0, %v2926
  %v2928 = vpop.f32.mrf.mxu0
  %v2929 = vpop.f32.mrf.mxu0
  %v2930 = vadd.f32 0.0, %v2929
  %v2931 = vpop.f32.mrf.mxu0
  %2932 = vmatprep.mubr.bf16.mxu0 0
  %2933 = vmatmul.mubr.bf16.gmra.mxu0 %v1744
  %v2934 = vpop.f32.mrf.mxu0
  %v2935 = vadd.f32 0.0, %v2934
  %v2936 = vpop.f32.mrf.mxu0
  %v2937 = vpop.f32.mrf.mxu0
  %v2938 = vadd.f32 0.0, %v2937
  %v2939 = vpop.f32.mrf.mxu0
  %2940 = vmatprep.mubr.bf16.mxu0 0
  %2941 = vmatmul.mubr.bf16.gmra.mxu0 %v1745
  %v2942 = vpop.f32.mrf.mxu0
  %v2943 = vadd.f32 0.0, %v2942
  %v2944 = vpop.f32.mrf.mxu0
  %v2945 = vpop.f32.mrf.mxu0
  %v2946 = vadd.f32 0.0, %v2945
  %v2947 = vpop.f32.mrf.mxu0
  %2948 = vmatprep.mubr.bf16.mxu0 0
  %2949 = vmatmul.mubr.bf16.gmra.mxu0 %v1746
  %v2950 = vpop.f32.mrf.mxu0
  %v2951 = vadd.f32 0.0, %v2950
  %v2952 = vpop.f32.mrf.mxu0
  %v2953 = vpop.f32.mrf.mxu0
  %v2954 = vadd.f32 0.0, %v2953
  %v2955 = vpop.f32.mrf.mxu0
  %2956 = vmatprep.mubr.bf16.mxu0 0
  %2957 = vmatmul.mubr.bf16.gmra.mxu0 %v1747
  %v2958 = vpop.f32.mrf.mxu0
  %v2959 = vadd.f32 0.0, %v2958
  %v2960 = vpop.f32.mrf.mxu0
  %v2961 = vpop.f32.mrf.mxu0
  %v2962 = vadd.f32 0.0, %v2961
  %v2963 = vpop.f32.mrf.mxu0
  %2964 = vmatprep.mubr.bf16.mxu0 0
  %2965 = vmatmul.mubr.bf16.gmra.mxu0 %v1748
  %v2966 = vpop.f32.mrf.mxu0
  %v2967 = vadd.f32 0.0, %v2966
  %v2968 = vpop.f32.mrf.mxu0
  %v2969 = vpop.f32.mrf.mxu0
  %v2970 = vadd.f32 0.0, %v2969
  %v2971 = vpop.f32.mrf.mxu0
  %2972 = vmatprep.mubr.bf16.mxu0 0
  %2973 = vmatmul.mubr.bf16.gmra.mxu0 %v1749
  %v2974 = vpop.f32.mrf.mxu0
  %v2975 = vadd.f32 0.0, %v2974
  %v2976 = vpop.f32.mrf.mxu0
  %v2977 = vpop.f32.mrf.mxu0
  %v2978 = vadd.f32 0.0, %v2977
  %v2979 = vpop.f32.mrf.mxu0
  %2980 = vmatprep.mubr.bf16.mxu0 0
  %2981 = vmatmul.mubr.bf16.gmra.mxu0 %v1750
  %v2982 = vpop.f32.mrf.mxu0
  %v2983 = vadd.f32 0.0, %v2982
  %v2984 = vpop.f32.mrf.mxu0
  %v2985 = vpop.f32.mrf.mxu0
  %v2986 = vadd.f32 0.0, %v2985
  %v2987 = vpop.f32.mrf.mxu0
  %2988 = vmatprep.mubr.bf16.mxu0 0
  %2989 = vmatmul.mubr.bf16.gmra.mxu0 %v1751
  %v2990 = vpop.f32.mrf.mxu0
  %v2991 = vadd.f32 0.0, %v2990
  %v2992 = vpop.f32.mrf.mxu0
  %v2993 = vpop.f32.mrf.mxu0
  %v2994 = vadd.f32 0.0, %v2993
  %v2995 = vpop.f32.mrf.mxu0
  %2996 = vmatprep.mubr.bf16.mxu0 0
  %2997 = vmatmul.mubr.bf16.gmra.mxu0 %v1752
  %v2998 = vpop.f32.mrf.mxu0
  %v2999 = vadd.f32 0.0, %v2998
  %v3000 = vpop.f32.mrf.mxu0
  %v3001 = vpop.f32.mrf.mxu0
  %v3002 = vadd.f32 0.0, %v3001
  %v3003 = vpop.f32.mrf.mxu0
  %3004 = vmatprep.mubr.bf16.mxu0 0
  %3005 = vmatmul.mubr.bf16.gmra.mxu0 %v1753
  %v3006 = vpop.f32.mrf.mxu0
  %v3007 = vadd.f32 0.0, %v3006
  %v3008 = vpop.f32.mrf.mxu0
  %v3009 = vpop.f32.mrf.mxu0
  %v3010 = vadd.f32 0.0, %v3009
  %v3011 = vpop.f32.mrf.mxu0
  %3012 = vmatprep.mubr.bf16.mxu0 0
  %3013 = vmatmul.mubr.bf16.gmra.mxu0 %v1754
  %v3014 = vpop.f32.mrf.mxu0
  %v3015 = vadd.f32 0.0, %v3014
  %v3016 = vpop.f32.mrf.mxu0
  %v3017 = vpop.f32.mrf.mxu0
  %v3018 = vadd.f32 0.0, %v3017
  %v3019 = vpop.f32.mrf.mxu0
  %3020 = vmatprep.mubr.bf16.mxu0 0
  %3021 = vmatmul.mubr.bf16.gmra.mxu0 %v1755
  %v3022 = vpop.f32.mrf.mxu0
  %v3023 = vadd.f32 0.0, %v3022
  %v3024 = vpop.f32.mrf.mxu0
  %v3025 = vpop.f32.mrf.mxu0
  %v3026 = vadd.f32 0.0, %v3025
  %v3027 = vpop.f32.mrf.mxu0
  %3028 = vmatprep.mubr.bf16.mxu0 0
  %3029 = vmatmul.mubr.bf16.gmra.mxu0 %v1756
  %v3030 = vpop.f32.mrf.mxu0
  %v3031 = vadd.f32 0.0, %v3030
  %v3032 = vpop.f32.mrf.mxu0
  %v3033 = vpop.f32.mrf.mxu0
  %v3034 = vadd.f32 0.0, %v3033
  %v3035 = vpop.f32.mrf.mxu0
  %3036 = vmatprep.mubr.bf16.mxu0 0
  %3037 = vmatmul.mubr.bf16.gmra.mxu0 %v1757
  %v3038 = vpop.f32.mrf.mxu0
  %v3039 = vadd.f32 0.0, %v3038
  %v3040 = vpop.f32.mrf.mxu0
  %v3041 = vpop.f32.mrf.mxu0
  %v3042 = vadd.f32 0.0, %v3041
  %v3043 = vpop.f32.mrf.mxu0
  %3044 = vmatprep.mubr.bf16.mxu0 0
  %3045 = vmatmul.mubr.bf16.gmra.mxu0 %v1758
  %v3046 = vpop.f32.mrf.mxu0
  %v3047 = vadd.f32 0.0, %v3046
  %v3048 = vpop.f32.mrf.mxu0
  %v3049 = vpop.f32.mrf.mxu0
  %v3050 = vadd.f32 0.0, %v3049
  %v3051 = vpop.f32.mrf.mxu0
  %3052 = vmatprep.mubr.bf16.mxu0 0
  %3053 = vmatmul.mubr.bf16.gmra.mxu0 %v1759
  %v3054 = vpop.f32.mrf.mxu0
  %v3055 = vadd.f32 0.0, %v3054
  %v3056 = vpop.f32.mrf.mxu0
  %v3057 = vpop.f32.mrf.mxu0
  %v3058 = vadd.f32 0.0, %v3057
  %v3059 = vpop.f32.mrf.mxu0
  %3060 = vmatprep.mubr.bf16.mxu0 0
  %3061 = vmatmul.mubr.bf16.gmra.mxu0 %v1760
  %v3062 = vpop.f32.mrf.mxu0
  %v3063 = vadd.f32 0.0, %v3062
  %v3064 = vpop.f32.mrf.mxu0
  %v3065 = vpop.f32.mrf.mxu0
  %v3066 = vadd.f32 0.0, %v3065
  %v3067 = vpop.f32.mrf.mxu0
  %3068 = vmatprep.mubr.bf16.mxu0 0
  %3069 = vmatmul.mubr.bf16.gmra.mxu0 %v1761
  %v3070 = vpop.f32.mrf.mxu0
  %v3071 = vadd.f32 0.0, %v3070
  %v3072 = vpop.f32.mrf.mxu0
  %v3073 = vpop.f32.mrf.mxu0
  %v3074 = vadd.f32 0.0, %v3073
  %v3075 = vpop.f32.mrf.mxu0
  %3076 = vmatprep.mubr.bf16.mxu0 0
  %3077 = vmatmul.mubr.bf16.gmra.mxu0 %v1762
  %v3078 = vpop.f32.mrf.mxu0
  %v3079 = vadd.f32 0.0, %v3078
  %v3080 = vpop.f32.mrf.mxu0
  %v3081 = vpop.f32.mrf.mxu0
  %v3082 = vadd.f32 0.0, %v3081
  %v3083 = vpop.f32.mrf.mxu0
  %3084 = vmatprep.mubr.bf16.mxu0 0
  %3085 = vmatmul.mubr.bf16.gmra.mxu0 %v1763
  %v3086 = vpop.f32.mrf.mxu0
  %v3087 = vadd.f32 0.0, %v3086
  %v3088 = vpop.f32.mrf.mxu0
  %v3089 = vpop.f32.mrf.mxu0
  %v3090 = vadd.f32 0.0, %v3089
  %v3091 = vpop.f32.mrf.mxu0
  %3092 = vmatprep.mubr.bf16.mxu0 0
  %3093 = vmatmul.mubr.bf16.gmra.mxu0 %v1764
  %v3094 = vpop.f32.mrf.mxu0
  %v3095 = vadd.f32 0.0, %v3094
  %v3096 = vpop.f32.mrf.mxu0
  %v3097 = vpop.f32.mrf.mxu0
  %v3098 = vadd.f32 0.0, %v3097
  %v3099 = vpop.f32.mrf.mxu0
  %3100 = vmatprep.mubr.bf16.mxu0 0
  %3101 = vmatmul.mubr.bf16.gmra.mxu0 %v1765
  %v3102 = vpop.f32.mrf.mxu0
  %v3103 = vadd.f32 0.0, %v3102
  %v3104 = vpop.f32.mrf.mxu0
  %v3105 = vpop.f32.mrf.mxu0
  %v3106 = vadd.f32 0.0, %v3105
  %v3107 = vpop.f32.mrf.mxu0
  %3108 = vmatprep.mubr.bf16.mxu0 0
  %3109 = vmatmul.mubr.bf16.gmra.mxu0 %v1766
  %v3110 = vpop.f32.mrf.mxu0
  %v3111 = vadd.f32 0.0, %v3110
  %v3112 = vpop.f32.mrf.mxu0
  %v3113 = vpop.f32.mrf.mxu0
  %v3114 = vadd.f32 0.0, %v3113
  %v3115 = vpop.f32.mrf.mxu0
  %3116 = vmatprep.mubr.bf16.mxu0 0
  %3117 = vmatmul.mubr.bf16.gmra.mxu0 %v1767
  %v3118 = vpop.f32.mrf.mxu0
  %v3119 = vadd.f32 0.0, %v3118
  %v3120 = vpop.f32.mrf.mxu0
  %v3121 = vpop.f32.mrf.mxu0
  %v3122 = vadd.f32 0.0, %v3121
  %v3123 = vpop.f32.mrf.mxu0
  %3124 = vmatprep.mubr.bf16.mxu0 0
  %3125 = vmatmul.mubr.bf16.gmra.mxu0 %v1768
  %v3126 = vpop.f32.mrf.mxu0
  %v3127 = vadd.f32 0.0, %v3126
  %v3128 = vpop.f32.mrf.mxu0
  %v3129 = vpop.f32.mrf.mxu0
  %v3130 = vadd.f32 0.0, %v3129
  %v3131 = vpop.f32.mrf.mxu0
  %3132 = vmatprep.mubr.bf16.mxu0 0
  %3133 = vmatmul.mubr.bf16.gmra.mxu0 %v1769
  %v3134 = vpop.f32.mrf.mxu0
  %v3135 = vadd.f32 0.0, %v3134
  %v3136 = vpop.f32.mrf.mxu0
  %v3137 = vpop.f32.mrf.mxu0
  %v3138 = vadd.f32 0.0, %v3137
  %v3139 = vpop.f32.mrf.mxu0
  %3140 = vmatprep.mubr.bf16.mxu0 0
  %3141 = vmatmul.mubr.bf16.gmra.mxu0 %v1770
  %v3142 = vpop.f32.mrf.mxu0
  %v3143 = vadd.f32 0.0, %v3142
  %v3144 = vpop.f32.mrf.mxu0
  %v3145 = vpop.f32.mrf.mxu0
  %v3146 = vadd.f32 0.0, %v3145
  %v3147 = vpop.f32.mrf.mxu0
  %3148 = vmatprep.mubr.bf16.mxu0 0
  %3149 = vmatmul.mubr.bf16.gmra.mxu0 %v1771
  %v3150 = vpop.f32.mrf.mxu0
  %v3151 = vadd.f32 0.0, %v3150
  %v3152 = vpop.f32.mrf.mxu0
  %v3153 = vpop.f32.mrf.mxu0
  %v3154 = vadd.f32 0.0, %v3153
  %v3155 = vpop.f32.mrf.mxu0
  %3156 = vmatprep.mubr.bf16.mxu0 0
  %3157 = vmatmul.mubr.bf16.gmra.mxu0 %v1772
  %v3158 = vpop.f32.mrf.mxu0
  %v3159 = vadd.f32 0.0, %v3158
  %v3160 = vpop.f32.mrf.mxu0
  %v3161 = vpop.f32.mrf.mxu0
  %v3162 = vadd.f32 0.0, %v3161
  %v3163 = vpop.f32.mrf.mxu0
  %3164 = vmatprep.mubr.bf16.mxu0 0
  %3165 = vmatmul.mubr.bf16.gmra.mxu0 %v1773
  %v3166 = vpop.f32.mrf.mxu0
  %v3167 = vadd.f32 0.0, %v3166
  %v3168 = vpop.f32.mrf.mxu0
  %v3169 = vpop.f32.mrf.mxu0
  %v3170 = vadd.f32 0.0, %v3169
  %v3171 = vpop.f32.mrf.mxu0
  %3172 = vmatprep.mubr.bf16.mxu0 0
  %3173 = vmatmul.mubr.bf16.gmra.mxu0 %v1774
  %v3174 = vpop.f32.mrf.mxu0
  %v3175 = vadd.f32 0.0, %v3174
  %v3176 = vpop.f32.mrf.mxu0
  %v3177 = vpop.f32.mrf.mxu0
  %v3178 = vadd.f32 0.0, %v3177
  %v3179 = vpop.f32.mrf.mxu0
  %3180 = vmatprep.mubr.bf16.mxu0 0
  %3181 = vmatmul.mubr.bf16.gmra.mxu0 %v1775
  %v3182 = vpop.f32.mrf.mxu0
  %v3183 = vadd.f32 0.0, %v3182
  %v3184 = vpop.f32.mrf.mxu0
  %v3185 = vpop.f32.mrf.mxu0
  %v3186 = vadd.f32 0.0, %v3185
  %v3187 = vpop.f32.mrf.mxu0
  %3188 = vmatprep.mubr.bf16.mxu0 0
  %3189 = vmatmul.mubr.bf16.gmra.mxu0 %v1776
  %v3190 = vpop.f32.mrf.mxu0
  %v3191 = vadd.f32 0.0, %v3190
  %v3192 = vpop.f32.mrf.mxu0
  %v3193 = vpop.f32.mrf.mxu0
  %v3194 = vadd.f32 0.0, %v3193
  %v3195 = vpop.f32.mrf.mxu0
  %3196 = vmatprep.mubr.bf16.mxu0 0
  %3197 = vmatmul.mubr.bf16.gmra.mxu0 %v1777
  %v3198 = vpop.f32.mrf.mxu0
  %v3199 = vadd.f32 0.0, %v3198
  %v3200 = vpop.f32.mrf.mxu0
  %v3201 = vpop.f32.mrf.mxu0
  %v3202 = vadd.f32 0.0, %v3201
  %v3203 = vpop.f32.mrf.mxu0
  %3204 = vmatprep.mubr.bf16.mxu0 0
  %3205 = vmatmul.mubr.bf16.gmra.mxu0 %v1778
  %v3206 = vpop.f32.mrf.mxu0
  %v3207 = vadd.f32 0.0, %v3206
  %v3208 = vpop.f32.mrf.mxu0
  %v3209 = vpop.f32.mrf.mxu0
  %v3210 = vadd.f32 0.0, %v3209
  %v3211 = vpop.f32.mrf.mxu0
  %3212 = vmatprep.mubr.bf16.mxu0 0
  %3213 = vmatmul.mubr.bf16.gmra.mxu0 %v1779
  %v3214 = vpop.f32.mrf.mxu0
  %v3215 = vadd.f32 0.0, %v3214
  %v3216 = vpop.f32.mrf.mxu0
  %v3217 = vpop.f32.mrf.mxu0
  %v3218 = vadd.f32 0.0, %v3217
  %v3219 = vpop.f32.mrf.mxu0
  %3220 = vmatprep.mubr.bf16.mxu0 0
  %3221 = vmatmul.mubr.bf16.gmra.mxu0 %v1780
  %v3222 = vpop.f32.mrf.mxu0
  %v3223 = vadd.f32 0.0, %v3222
  %v3224 = vpop.f32.mrf.mxu0
  %v3225 = vpop.f32.mrf.mxu0
  %v3226 = vadd.f32 0.0, %v3225
  %v3227 = vpop.f32.mrf.mxu0
  %3228 = vmatprep.mubr.bf16.mxu0 0
  %3229 = vmatmul.mubr.bf16.gmra.mxu0 %v1781
  %v3230 = vpop.f32.mrf.mxu0
  %v3231 = vadd.f32 0.0, %v3230
  %v3232 = vpop.f32.mrf.mxu0
  %v3233 = vpop.f32.mrf.mxu0
  %v3234 = vadd.f32 0.0, %v3233
  %v3235 = vpop.f32.mrf.mxu0
  %3236 = vmatprep.mubr.bf16.mxu0 0
  %3237 = vmatmul.mubr.bf16.gmra.mxu0 %v1782
  %v3238 = vpop.f32.mrf.mxu0
  %v3239 = vadd.f32 0.0, %v3238
  %v3240 = vpop.f32.mrf.mxu0
  %v3241 = vpop.f32.mrf.mxu0
  %v3242 = vadd.f32 0.0, %v3241
  %v3243 = vpop.f32.mrf.mxu0
  %3244 = vmatprep.mubr.bf16.mxu0 0
  %3245 = vmatmul.mubr.bf16.gmra.mxu0 %v1783
  %v3246 = vpop.f32.mrf.mxu0
  %v3247 = vadd.f32 0.0, %v3246
  %v3248 = vpop.f32.mrf.mxu0
  %v3249 = vpop.f32.mrf.mxu0
  %v3250 = vadd.f32 0.0, %v3249
  %v3251 = vpop.f32.mrf.mxu0
  %3252 = vmatprep.mubr.bf16.mxu0 0
  %3253 = vmatmul.mubr.bf16.gmra.mxu0 %v1784
  %v3254 = vpop.f32.mrf.mxu0
  %v3255 = vadd.f32 0.0, %v3254
  %v3256 = vpop.f32.mrf.mxu0
  %v3257 = vpop.f32.mrf.mxu0
  %v3258 = vadd.f32 0.0, %v3257
  %v3259 = vpop.f32.mrf.mxu0
  %3260 = vmatprep.mubr.bf16.mxu0 0
  %3261 = vmatmul.mubr.bf16.gmra.mxu0 %v1785
  %v3262 = vpop.f32.mrf.mxu0
  %v3263 = vadd.f32 0.0, %v3262
  %v3264 = vpop.f32.mrf.mxu0
  %v3265 = vpop.f32.mrf.mxu0
  %v3266 = vadd.f32 0.0, %v3265
  %v3267 = vpop.f32.mrf.mxu0
  %3268 = vmatprep.mubr.bf16.mxu0 0
  %3269 = vmatmul.mubr.bf16.gmra.mxu0 %v1786
  %v3270 = vpop.f32.mrf.mxu0
  %v3271 = vadd.f32 0.0, %v3270
  %v3272 = vpop.f32.mrf.mxu0
  %v3273 = vpop.f32.mrf.mxu0
  %v3274 = vadd.f32 0.0, %v3273
  %v3275 = vpop.f32.mrf.mxu0
  %3276 = vmatprep.mubr.bf16.mxu0 0
  %3277 = vmatmul.mubr.bf16.gmra.mxu0 %v1787
  %v3278 = vpop.f32.mrf.mxu0
  %v3279 = vadd.f32 0.0, %v3278
  %v3280 = vpop.f32.mrf.mxu0
  %v3281 = vpop.f32.mrf.mxu0
  %v3282 = vadd.f32 0.0, %v3281
  %v3283 = vpop.f32.mrf.mxu0
  %3284 = vmatprep.mubr.bf16.mxu0 0
  %3285 = vmatmul.mubr.bf16.gmra.mxu0 %v1788
  %v3286 = vpop.f32.mrf.mxu0
  %v3287 = vadd.f32 0.0, %v3286
  %v3288 = vpop.f32.mrf.mxu0
  %v3289 = vpop.f32.mrf.mxu0
  %v3290 = vadd.f32 0.0, %v3289
  %v3291 = vpop.f32.mrf.mxu0
  %3292 = vmatprep.mubr.bf16.mxu0 0
  %3293 = vmatmul.mubr.bf16.gmra.mxu0 %v1789
  %v3294 = vpop.f32.mrf.mxu0
  %v3295 = vadd.f32 0.0, %v3294
  %v3296 = vpop.f32.mrf.mxu0
  %v3297 = vpop.f32.mrf.mxu0
  %v3298 = vadd.f32 0.0, %v3297
  %v3299 = vpop.f32.mrf.mxu0
  %3300 = vmatprep.mubr.bf16.mxu0 0
  %3301 = vmatmul.mubr.bf16.gmra.mxu0 %v1790
  %v3302 = vpop.f32.mrf.mxu0
  %v3303 = vadd.f32 0.0, %v3302
  %v3304 = vpop.f32.mrf.mxu0
  %v3305 = vpop.f32.mrf.mxu0
  %v3306 = vadd.f32 0.0, %v3305
  %v3307 = vpop.f32.mrf.mxu0
  %3308 = vmatprep.mubr.bf16.mxu0 0
  %3309 = vmatmul.mubr.bf16.gmra.mxu0 %v1791
  %v3310 = vpop.f32.mrf.mxu0
  %v3311 = vadd.f32 0.0, %v3310
  %v3312 = vpop.f32.mrf.mxu0
  %v3313 = vpop.f32.mrf.mxu0
  %v3314 = vadd.f32 0.0, %v3313
  %v3315 = vpop.f32.mrf.mxu0
  %3316 = vmatprep.mubr.bf16.mxu0 0
  %3317 = vmatmul.mubr.bf16.gmra.mxu0 %v1792
  %v3318 = vpop.f32.mrf.mxu0
  %v3319 = vadd.f32 0.0, %v3318
  %v3320 = vpop.f32.mrf.mxu0
  %v3321 = vpop.f32.mrf.mxu0
  %v3322 = vadd.f32 0.0, %v3321
  %v3323 = vpop.f32.mrf.mxu0
  %3324 = vmatprep.mubr.bf16.mxu0 0
  %3325 = vmatmul.mubr.bf16.gmra.mxu0 %v1793
  %v3326 = vpop.f32.mrf.mxu0
  %v3327 = vadd.f32 0.0, %v3326
  %v3328 = vpop.f32.mrf.mxu0
  %v3329 = vpop.f32.mrf.mxu0
  %v3330 = vadd.f32 0.0, %v3329
  %v3331 = vpop.f32.mrf.mxu0
  %3332 = vmatprep.mubr.bf16.mxu0 0
  %3333 = vmatmul.mubr.bf16.gmra.mxu0 %v1794
  %v3334 = vpop.f32.mrf.mxu0
  %v3335 = vadd.f32 0.0, %v3334
  %v3336 = vpop.f32.mrf.mxu0
  %v3337 = vpop.f32.mrf.mxu0
  %v3338 = vadd.f32 0.0, %v3337
  %v3339 = vpop.f32.mrf.mxu0
  %3340 = vmatprep.mubr.bf16.mxu0 0
  %3341 = vmatmul.mubr.bf16.gmra.mxu0 %v1795
  %v3342 = vpop.f32.mrf.mxu0
  %v3343 = vadd.f32 0.0, %v3342
  %v3344 = vpop.f32.mrf.mxu0
  %v3345 = vpop.f32.mrf.mxu0
  %v3346 = vadd.f32 0.0, %v3345
  %v3347 = vpop.f32.mrf.mxu0
  %3348 = vmatprep.mubr.bf16.mxu0 0
  %3349 = vmatmul.mubr.bf16.gmra.mxu0 %v1796
  %v3350 = vpop.f32.mrf.mxu0
  %v3351 = vadd.f32 0.0, %v3350
  %v3352 = vpop.f32.mrf.mxu0
  %v3353 = vpop.f32.mrf.mxu0
  %v3354 = vadd.f32 0.0, %v3353
  %v3355 = vpop.f32.mrf.mxu0
  %3356 = vmatprep.mubr.bf16.mxu0 0
  %3357 = vmatmul.mubr.bf16.gmra.mxu0 %v1797
  %v3358 = vpop.f32.mrf.mxu0
  %v3359 = vadd.f32 0.0, %v3358
  %v3360 = vpop.f32.mrf.mxu0
  %v3361 = vpop.f32.mrf.mxu0
  %v3362 = vadd.f32 0.0, %v3361
  %v3363 = vpop.f32.mrf.mxu0
  %3364 = vmatprep.mubr.bf16.mxu0 0
  %3365 = vmatmul.mubr.bf16.gmra.mxu0 %v1798
  %v3366 = vpop.f32.mrf.mxu0
  %v3367 = vadd.f32 0.0, %v3366
  %v3368 = vpop.f32.mrf.mxu0
  %v3369 = vpop.f32.mrf.mxu0
  %v3370 = vadd.f32 0.0, %v3369
  %v3371 = vpop.f32.mrf.mxu0
  %3372 = vmatprep.mubr.bf16.mxu0 0
  %3373 = vmatmul.mubr.bf16.gmra.mxu0 %v1799
  %v3374 = vpop.f32.mrf.mxu0
  %v3375 = vadd.f32 0.0, %v3374
  %v3376 = vpop.f32.mrf.mxu0
  %v3377 = vpop.f32.mrf.mxu0
  %v3378 = vadd.f32 0.0, %v3377
  %v3379 = vpop.f32.mrf.mxu0
  %3380 = vmatprep.mubr.bf16.mxu0 0
  %3381 = vmatmul.mubr.bf16.gmra.mxu0 %v1800
  %v3382 = vpop.f32.mrf.mxu0
  %v3383 = vadd.f32 0.0, %v3382
  %v3384 = vpop.f32.mrf.mxu0
  %v3385 = vpop.f32.mrf.mxu0
  %v3386 = vadd.f32 0.0, %v3385
  %v3387 = vpop.f32.mrf.mxu0
  %3388 = vmatprep.mubr.bf16.mxu0 0
  %3389 = vmatmul.mubr.bf16.gmra.mxu0 %v1801
  %v3390 = vpop.f32.mrf.mxu0
  %v3391 = vadd.f32 0.0, %v3390
  %v3392 = vpop.f32.mrf.mxu0
  %v3393 = vpop.f32.mrf.mxu0
  %v3394 = vadd.f32 0.0, %v3393
  %v3395 = vpop.f32.mrf.mxu0
  %3396 = vmatprep.mubr.bf16.mxu0 0
  %3397 = vmatmul.mubr.bf16.gmra.mxu0 %v1802
  %v3398 = vpop.f32.mrf.mxu0
  %v3399 = vadd.f32 0.0, %v3398
  %v3400 = vpop.f32.mrf.mxu0
  %v3401 = vpop.f32.mrf.mxu0
  %v3402 = vadd.f32 0.0, %v3401
  %v3403 = vpop.f32.mrf.mxu0
  %3404 = vdwg.mxu0
  %v3405 = vadd.f32 %v2732, %v2895
  %v3406 = vadd.f32 %v2733, %v2898
  %v3407 = vadd.f32 %v2734, %v2903
  %v3408 = vadd.f32 %v2735, %v2906
  %v3409 = vadd.f32 %v2736, %v2911
  %v3410 = vadd.f32 %v2737, %v2914
  %v3411 = vadd.f32 %v2738, %v2919
  %v3412 = vadd.f32 %v2739, %v2922
  %v3413 = vadd.f32 %v2740, %v2927
  %v3414 = vadd.f32 %v2741, %v2930
  %v3415 = vadd.f32 %v2742, %v2935
  %v3416 = vadd.f32 %v2743, %v2938
  %v3417 = vadd.f32 %v2744, %v2943
  %v3418 = vadd.f32 %v2745, %v2946
  %v3419 = vadd.f32 %v2746, %v2951
  %v3420 = vadd.f32 %v2747, %v2954
  %v3421 = vadd.f32 %v2748, %v2959
  %v3422 = vadd.f32 %v2749, %v2962
  %v3423 = vadd.f32 %v2750, %v2967
  %v3424 = vadd.f32 %v2751, %v2970
  %v3425 = vadd.f32 %v2752, %v2975
  %v3426 = vadd.f32 %v2753, %v2978
  %v3427 = vadd.f32 %v2754, %v2983
  %v3428 = vadd.f32 %v2755, %v2986
  %v3429 = vadd.f32 %v2756, %v2991
  %v3430 = vadd.f32 %v2757, %v2994
  %v3431 = vadd.f32 %v2758, %v2999
  %v3432 = vadd.f32 %v2759, %v3002
  %v3433 = vadd.f32 %v2760, %v3007
  %v3434 = vadd.f32 %v2761, %v3010
  %v3435 = vadd.f32 %v2762, %v3015
  %v3436 = vadd.f32 %v2763, %v3018
  %v3437 = vadd.f32 %v2764, %v3023
  %v3438 = vadd.f32 %v2765, %v3026
  %v3439 = vadd.f32 %v2766, %v3031
  %v3440 = vadd.f32 %v2767, %v3034
  %v3441 = vadd.f32 %v2768, %v3039
  %v3442 = vadd.f32 %v2769, %v3042
  %v3443 = vadd.f32 %v2770, %v3047
  %v3444 = vadd.f32 %v2771, %v3050
  %v3445 = vadd.f32 %v2772, %v3055
  %v3446 = vadd.f32 %v2773, %v3058
  %v3447 = vadd.f32 %v2774, %v3063
  %v3448 = vadd.f32 %v2775, %v3066
  %v3449 = vadd.f32 %v2776, %v3071
  %v3450 = vadd.f32 %v2777, %v3074
  %v3451 = vadd.f32 %v2778, %v3079
  %v3452 = vadd.f32 %v2779, %v3082
  %v3453 = vadd.f32 %v2780, %v3087
  %v3454 = vadd.f32 %v2781, %v3090
  %v3455 = vadd.f32 %v2782, %v3095
  %v3456 = vadd.f32 %v2783, %v3098
  %v3457 = vadd.f32 %v2784, %v3103
  %v3458 = vadd.f32 %v2785, %v3106
  %v3459 = vadd.f32 %v2786, %v3111
  %v3460 = vadd.f32 %v2787, %v3114
  %v3461 = vadd.f32 %v2788, %v3119
  %v3462 = vadd.f32 %v2789, %v3122
  %v3463 = vadd.f32 %v2790, %v3127
  %v3464 = vadd.f32 %v2791, %v3130
  %v3465 = vadd.f32 %v2792, %v3135
  %v3466 = vadd.f32 %v2793, %v3138
  %v3467 = vadd.f32 %v2794, %v3143
  %v3468 = vadd.f32 %v2795, %v3146
  %v3469 = vadd.f32 %v2796, %v3151
  %v3470 = vadd.f32 %v2797, %v3154
  %v3471 = vadd.f32 %v2798, %v3159
  %v3472 = vadd.f32 %v2799, %v3162
  %v3473 = vadd.f32 %v2800, %v3167
  %v3474 = vadd.f32 %v2801, %v3170
  %v3475 = vadd.f32 %v2802, %v3175
  %v3476 = vadd.f32 %v2803, %v3178
  %v3477 = vadd.f32 %v2804, %v3183
  %v3478 = vadd.f32 %v2805, %v3186
  %v3479 = vadd.f32 %v2806, %v3191
  %v3480 = vadd.f32 %v2807, %v3194
  %v3481 = vadd.f32 %v2808, %v3199
  %v3482 = vadd.f32 %v2809, %v3202
  %v3483 = vadd.f32 %v2810, %v3207
  %v3484 = vadd.f32 %v2811, %v3210
  %v3485 = vadd.f32 %v2812, %v3215
  %v3486 = vadd.f32 %v2813, %v3218
  %v3487 = vadd.f32 %v2814, %v3223
  %v3488 = vadd.f32 %v2815, %v3226
  %v3489 = vadd.f32 %v2816, %v3231
  %v3490 = vadd.f32 %v2817, %v3234
  %v3491 = vadd.f32 %v2818, %v3239
  %v3492 = vadd.f32 %v2819, %v3242
  %v3493 = vadd.f32 %v2820, %v3247
  %v3494 = vadd.f32 %v2821, %v3250
  %v3495 = vadd.f32 %v2822, %v3255
  %v3496 = vadd.f32 %v2823, %v3258
  %v3497 = vadd.f32 %v2824, %v3263
  %v3498 = vadd.f32 %v2825, %v3266
  %v3499 = vadd.f32 %v2826, %v3271
  %v3500 = vadd.f32 %v2827, %v3274
  %v3501 = vadd.f32 %v2828, %v3279
  %v3502 = vadd.f32 %v2829, %v3282
  %v3503 = vadd.f32 %v2830, %v3287
  %v3504 = vadd.f32 %v2831, %v3290
  %v3505 = vadd.f32 %v2832, %v3295
  %v3506 = vadd.f32 %v2833, %v3298
  %v3507 = vadd.f32 %v2834, %v3303
  %v3508 = vadd.f32 %v2835, %v3306
  %v3509 = vadd.f32 %v2836, %v3311
  %v3510 = vadd.f32 %v2837, %v3314
  %v3511 = vadd.f32 %v2838, %v3319
  %v3512 = vadd.f32 %v2839, %v3322
  %v3513 = vadd.f32 %v2840, %v3327
  %v3514 = vadd.f32 %v2841, %v3330
  %v3515 = vadd.f32 %v2842, %v3335
  %v3516 = vadd.f32 %v2843, %v3338
  %v3517 = vadd.f32 %v2844, %v3343
  %v3518 = vadd.f32 %v2845, %v3346
  %v3519 = vadd.f32 %v2846, %v3351
  %v3520 = vadd.f32 %v2847, %v3354
  %v3521 = vadd.f32 %v2848, %v3359
  %v3522 = vadd.f32 %v2849, %v3362
  %v3523 = vadd.f32 %v2850, %v3367
  %v3524 = vadd.f32 %v2851, %v3370
  %v3525 = vadd.f32 %v2852, %v3375
  %v3526 = vadd.f32 %v2853, %v3378
  %v3527 = vadd.f32 %v2854, %v3383
  %v3528 = vadd.f32 %v2855, %v3386
  %v3529 = vadd.f32 %v2856, %v3391
  %v3530 = vadd.f32 %v2857, %v3394
  %v3531 = vadd.f32 %v2858, %v3399
  %v3532 = vadd.f32 %v2859, %v3402
  %3533 = vst [vmem:[#allocation3] sm:$0xff] %v3405
  %3534 = vst [vmem:[#allocation3 + $0x8] sm:$0xff] %v3406
  %3535 = vst [vmem:[#allocation3 + $0x10] sm:$0xff] %v3407
  %3536 = vst [vmem:[#allocation3 + $0x18] sm:$0xff] %v3408
  %3537 = vst [vmem:[#allocation3 + $0x20] sm:$0xff] %v3409
  %3538 = vst [vmem:[#allocation3 + $0x28] sm:$0xff] %v3410
  %3539 = vst [vmem:[#allocation3 + $0x30] sm:$0xff] %v3411
  %3540 = vst [vmem:[#allocation3 + $0x38] sm:$0xff] %v3412
  %3541 = vst [vmem:[#allocation3 + $0x40] sm:$0xff] %v3413
  %3542 = vst [vmem:[#allocation3 + $0x48] sm:$0xff] %v3414
  %3543 = vst [vmem:[#allocation3 + $0x50] sm:$0xff] %v3415
  %3544 = vst [vmem:[#allocation3 + $0x58] sm:$0xff] %v3416
  %3545 = vst [vmem:[#allocation3 + $0x60] sm:$0xff] %v3417
  %3546 = vst [vmem:[#allocation3 + $0x68] sm:$0xff] %v3418
  %3547 = vst [vmem:[#allocation3 + $0x70] sm:$0xff] %v3419
  %3548 = vst [vmem:[#allocation3 + $0x78] sm:$0xff] %v3420
  %3549 = vst [vmem:[#allocation3 + $0x80] sm:$0xff] %v3421
  %3550 = vst [vmem:[#allocation3 + $0x88] sm:$0xff] %v3422
  %3551 = vst [vmem:[#allocation3 + $0x90] sm:$0xff] %v3423
  %3552 = vst [vmem:[#allocation3 + $0x98] sm:$0xff] %v3424
  %3553 = vst [vmem:[#allocation3 + $0xa0] sm:$0xff] %v3425
  %3554 = vst [vmem:[#allocation3 + $0xa8] sm:$0xff] %v3426
  %3555 = vst [vmem:[#allocation3 + $0xb0] sm:$0xff] %v3427
  %3556 = vst [vmem:[#allocation3 + $0xb8] sm:$0xff] %v3428
  %3557 = vst [vmem:[#allocation3 + $0xc0] sm:$0xff] %v3429
  %3558 = vst [vmem:[#allocation3 + $0xc8] sm:$0xff] %v3430
  %3559 = vst [vmem:[#allocation3 + $0xd0] sm:$0xff] %v3431
  %3560 = vst [vmem:[#allocation3 + $0xd8] sm:$0xff] %v3432
  %3561 = vst [vmem:[#allocation3 + $0xe0] sm:$0xff] %v3433
  %3562 = vst [vmem:[#allocation3 + $0xe8] sm:$0xff] %v3434
  %3563 = vst [vmem:[#allocation3 + $0xf0] sm:$0xff] %v3435
  %3564 = vst [vmem:[#allocation3 + $0xf8] sm:$0xff] %v3436
  %3565 = vst [vmem:[#allocation3 + $0x100] sm:$0xff] %v3437
  %3566 = vst [vmem:[#allocation3 + $0x108] sm:$0xff] %v3438
  %3567 = vst [vmem:[#allocation3 + $0x110] sm:$0xff] %v3439
  %3568 = vst [vmem:[#allocation3 + $0x118] sm:$0xff] %v3440
  %3569 = vst [vmem:[#allocation3 + $0x120] sm:$0xff] %v3441
  %3570 = vst [vmem:[#allocation3 + $0x128] sm:$0xff] %v3442
  %3571 = vst [vmem:[#allocation3 + $0x130] sm:$0xff] %v3443
  %3572 = vst [vmem:[#allocation3 + $0x138] sm:$0xff] %v3444
  %3573 = vst [vmem:[#allocation3 + $0x140] sm:$0xff] %v3445
  %3574 = vst [vmem:[#allocation3 + $0x148] sm:$0xff] %v3446
  %3575 = vst [vmem:[#allocation3 + $0x150] sm:$0xff] %v3447
  %3576 = vst [vmem:[#allocation3 + $0x158] sm:$0xff] %v3448
  %3577 = vst [vmem:[#allocation3 + $0x160] sm:$0xff] %v3449
  %3578 = vst [vmem:[#allocation3 + $0x168] sm:$0xff] %v3450
  %3579 = vst [vmem:[#allocation3 + $0x170] sm:$0xff] %v3451
  %3580 = vst [vmem:[#allocation3 + $0x178] sm:$0xff] %v3452
  %3581 = vst [vmem:[#allocation3 + $0x180] sm:$0xff] %v3453
  %3582 = vst [vmem:[#allocation3 + $0x188] sm:$0xff] %v3454
  %3583 = vst [vmem:[#allocation3 + $0x190] sm:$0xff] %v3455
  %3584 = vst [vmem:[#allocation3 + $0x198] sm:$0xff] %v3456
  %3585 = vst [vmem:[#allocation3 + $0x1a0] sm:$0xff] %v3457
  %3586 = vst [vmem:[#allocation3 + $0x1a8] sm:$0xff] %v3458
  %3587 = vst [vmem:[#allocation3 + $0x1b0] sm:$0xff] %v3459
  %3588 = vst [vmem:[#allocation3 + $0x1b8] sm:$0xff] %v3460
  %3589 = vst [vmem:[#allocation3 + $0x1c0] sm:$0xff] %v3461
  %3590 = vst [vmem:[#allocation3 + $0x1c8] sm:$0xff] %v3462
  %3591 = vst [vmem:[#allocation3 + $0x1d0] sm:$0xff] %v3463
  %3592 = vst [vmem:[#allocation3 + $0x1d8] sm:$0xff] %v3464
  %3593 = vst [vmem:[#allocation3 + $0x1e0] sm:$0xff] %v3465
  %3594 = vst [vmem:[#allocation3 + $0x1e8] sm:$0xff] %v3466
  %3595 = vst [vmem:[#allocation3 + $0x1f0] sm:$0xff] %v3467
  %3596 = vst [vmem:[#allocation3 + $0x1f8] sm:$0xff] %v3468
  %3597 = vst [vmem:[#allocation3 + $0x200] sm:$0xff] %v3469
  %3598 = vst [vmem:[#allocation3 + $0x208] sm:$0xff] %v3470
  %3599 = vst [vmem:[#allocation3 + $0x210] sm:$0xff] %v3471
  %3600 = vst [vmem:[#allocation3 + $0x218] sm:$0xff] %v3472
  %3601 = vst [vmem:[#allocation3 + $0x220] sm:$0xff] %v3473
  %3602 = vst [vmem:[#allocation3 + $0x228] sm:$0xff] %v3474
  %3603 = vst [vmem:[#allocation3 + $0x230] sm:$0xff] %v3475
  %3604 = vst [vmem:[#allocation3 + $0x238] sm:$0xff] %v3476
  %3605 = vst [vmem:[#allocation3 + $0x240] sm:$0xff] %v3477
  %3606 = vst [vmem:[#allocation3 + $0x248] sm:$0xff] %v3478
  %3607 = vst [vmem:[#allocation3 + $0x250] sm:$0xff] %v3479
  %3608 = vst [vmem:[#allocation3 + $0x258] sm:$0xff] %v3480
  %3609 = vst [vmem:[#allocation3 + $0x260] sm:$0xff] %v3481
  %3610 = vst [vmem:[#allocation3 + $0x268] sm:$0xff] %v3482
  %3611 = vst [vmem:[#allocation3 + $0x270] sm:$0xff] %v3483
  %3612 = vst [vmem:[#allocation3 + $0x278] sm:$0xff] %v3484
  %3613 = vst [vmem:[#allocation3 + $0x280] sm:$0xff] %v3485
  %3614 = vst [vmem:[#allocation3 + $0x288] sm:$0xff] %v3486
  %3615 = vst [vmem:[#allocation3 + $0x290] sm:$0xff] %v3487
  %3616 = vst [vmem:[#allocation3 + $0x298] sm:$0xff] %v3488
  %3617 = vst [vmem:[#allocation3 + $0x2a0] sm:$0xff] %v3489
  %3618 = vst [vmem:[#allocation3 + $0x2a8] sm:$0xff] %v3490
  %3619 = vst [vmem:[#allocation3 + $0x2b0] sm:$0xff] %v3491
  %3620 = vst [vmem:[#allocation3 + $0x2b8] sm:$0xff] %v3492
  %3621 = vst [vmem:[#allocation3 + $0x2c0] sm:$0xff] %v3493
  %3622 = vst [vmem:[#allocation3 + $0x2c8] sm:$0xff] %v3494
  %3623 = vst [vmem:[#allocation3 + $0x2d0] sm:$0xff] %v3495
  %3624 = vst [vmem:[#allocation3 + $0x2d8] sm:$0xff] %v3496
  %3625 = vst [vmem:[#allocation3 + $0x2e0] sm:$0xff] %v3497
  %3626 = vst [vmem:[#allocation3 + $0x2e8] sm:$0xff] %v3498
  %3627 = vst [vmem:[#allocation3 + $0x2f0] sm:$0xff] %v3499
  %3628 = vst [vmem:[#allocation3 + $0x2f8] sm:$0xff] %v3500
  %3629 = vst [vmem:[#allocation3 + $0x300] sm:$0xff] %v3501
  %3630 = vst [vmem:[#allocation3 + $0x308] sm:$0xff] %v3502
  %3631 = vst [vmem:[#allocation3 + $0x310] sm:$0xff] %v3503
  %3632 = vst [vmem:[#allocation3 + $0x318] sm:$0xff] %v3504
  %3633 = vst [vmem:[#allocation3 + $0x320] sm:$0xff] %v3505
  %3634 = vst [vmem:[#allocation3 + $0x328] sm:$0xff] %v3506
  %3635 = vst [vmem:[#allocation3 + $0x330] sm:$0xff] %v3507
  %3636 = vst [vmem:[#allocation3 + $0x338] sm:$0xff] %v3508
  %3637 = vst [vmem:[#allocation3 + $0x340] sm:$0xff] %v3509
  %3638 = vst [vmem:[#allocation3 + $0x348] sm:$0xff] %v3510
  %3639 = vst [vmem:[#allocation3 + $0x350] sm:$0xff] %v3511
  %3640 = vst [vmem:[#allocation3 + $0x358] sm:$0xff] %v3512
  %3641 = vst [vmem:[#allocation3 + $0x360] sm:$0xff] %v3513
  %3642 = vst [vmem:[#allocation3 + $0x368] sm:$0xff] %v3514
  %3643 = vst [vmem:[#allocation3 + $0x370] sm:$0xff] %v3515
  %3644 = vst [vmem:[#allocation3 + $0x378] sm:$0xff] %v3516
  %3645 = vst [vmem:[#allocation3 + $0x380] sm:$0xff] %v3517
  %3646 = vst [vmem:[#allocation3 + $0x388] sm:$0xff] %v3518
  %3647 = vst [vmem:[#allocation3 + $0x390] sm:$0xff] %v3519
  %3648 = vst [vmem:[#allocation3 + $0x398] sm:$0xff] %v3520
  %3649 = vst [vmem:[#allocation3 + $0x3a0] sm:$0xff] %v3521
  %3650 = vst [vmem:[#allocation3 + $0x3a8] sm:$0xff] %v3522
  %3651 = vst [vmem:[#allocation3 + $0x3b0] sm:$0xff] %v3523
  %3652 = vst [vmem:[#allocation3 + $0x3b8] sm:$0xff] %v3524
  %3653 = vst [vmem:[#allocation3 + $0x3c0] sm:$0xff] %v3525
  %3654 = vst [vmem:[#allocation3 + $0x3c8] sm:$0xff] %v3526
  %3655 = vst [vmem:[#allocation3 + $0x3d0] sm:$0xff] %v3527
  %3656 = vst [vmem:[#allocation3 + $0x3d8] sm:$0xff] %v3528
  %3657 = vst [vmem:[#allocation3 + $0x3e0] sm:$0xff] %v3529
  %3658 = vst [vmem:[#allocation3 + $0x3e8] sm:$0xff] %v3530
  %3659 = vst [vmem:[#allocation3 + $0x3f0] sm:$0xff] %v3531
  %3660 = vst [vmem:[#allocation3 + $0x3f8] sm:$0xff] %v3532
  // Predicated region
  $region22: #{outlier_detector_forward.1} parent=0 // pred_check
    %p3661 = pneg %p19
  $region23: #{outlier_detector_forward.1} parent=0 // pred_check_branch
    %3663 = sbr.rel (%p3661) target = $region25
  $region24: #{outlier_detector_forward.1} parent=0 // pred_region
    %v3664 = vld [vmem:[#allocation2] sm:$0xff]
    %v3665 = vld [vmem:[#allocation2 + $0x8] sm:$0xff]
    %v3666 = vld [vmem:[#allocation2 + $0x10] sm:$0xff]
    %v3667 = vld [vmem:[#allocation2 + $0x18] sm:$0xff]
    %v3668 = vld [vmem:[#allocation2 + $0x20] sm:$0xff]
    %v3669 = vld [vmem:[#allocation2 + $0x28] sm:$0xff]
    %v3670 = vld [vmem:[#allocation2 + $0x30] sm:$0xff]
    %v3671 = vld [vmem:[#allocation2 + $0x38] sm:$0xff]
    %v3672 = vld [vmem:[#allocation2 + $0x40] sm:$0xff]
    %v3673 = vld [vmem:[#allocation2 + $0x48] sm:$0xff]
    %v3674 = vld [vmem:[#allocation2 + $0x50] sm:$0xff]
    %v3675 = vld [vmem:[#allocation2 + $0x58] sm:$0xff]
    %v3676 = vld [vmem:[#allocation2 + $0x60] sm:$0xff]
    %v3677 = vld [vmem:[#allocation2 + $0x68] sm:$0xff]
    %v3678 = vld [vmem:[#allocation2 + $0x70] sm:$0xff]
    %v3679 = vld [vmem:[#allocation2 + $0x78] sm:$0xff]
    %v3680 = vld [vmem:[#allocation2 + $0x80] sm:$0xff]
    %v3681 = vld [vmem:[#allocation2 + $0x88] sm:$0xff]
    %v3682 = vld [vmem:[#allocation2 + $0x90] sm:$0xff]
    %v3683 = vld [vmem:[#allocation2 + $0x98] sm:$0xff]
    %v3684 = vld [vmem:[#allocation2 + $0xa0] sm:$0xff]
    %v3685 = vld [vmem:[#allocation2 + $0xa8] sm:$0xff]
    %v3686 = vld [vmem:[#allocation2 + $0xb0] sm:$0xff]
    %v3687 = vld [vmem:[#allocation2 + $0xb8] sm:$0xff]
    %v3688 = vld [vmem:[#allocation2 + $0xc0] sm:$0xff]
    %v3689 = vld [vmem:[#allocation2 + $0xc8] sm:$0xff]
    %v3690 = vld [vmem:[#allocation2 + $0xd0] sm:$0xff]
    %v3691 = vld [vmem:[#allocation2 + $0xd8] sm:$0xff]
    %v3692 = vld [vmem:[#allocation2 + $0xe0] sm:$0xff]
    %v3693 = vld [vmem:[#allocation2 + $0xe8] sm:$0xff]
    %v3694 = vld [vmem:[#allocation2 + $0xf0] sm:$0xff]
    %v3695 = vld [vmem:[#allocation2 + $0xf8] sm:$0xff]
    %v3696 = vld [vmem:[#allocation2 + $0x100] sm:$0xff]
    %v3697 = vld [vmem:[#allocation2 + $0x108] sm:$0xff]
    %v3698 = vld [vmem:[#allocation2 + $0x110] sm:$0xff]
    %v3699 = vld [vmem:[#allocation2 + $0x118] sm:$0xff]
    %v3700 = vld [vmem:[#allocation2 + $0x120] sm:$0xff]
    %v3701 = vld [vmem:[#allocation2 + $0x128] sm:$0xff]
    %v3702 = vld [vmem:[#allocation2 + $0x130] sm:$0xff]
    %v3703 = vld [vmem:[#allocation2 + $0x138] sm:$0xff]
    %v3704 = vld [vmem:[#allocation2 + $0x140] sm:$0xff]
    %v3705 = vld [vmem:[#allocation2 + $0x148] sm:$0xff]
    %v3706 = vld [vmem:[#allocation2 + $0x150] sm:$0xff]
    %v3707 = vld [vmem:[#allocation2 + $0x158] sm:$0xff]
    %v3708 = vld [vmem:[#allocation2 + $0x160] sm:$0xff]
    %v3709 = vld [vmem:[#allocation2 + $0x168] sm:$0xff]
    %v3710 = vld [vmem:[#allocation2 + $0x170] sm:$0xff]
    %v3711 = vld [vmem:[#allocation2 + $0x178] sm:$0xff]
    %v3712 = vld [vmem:[#allocation2 + $0x180] sm:$0xff]
    %v3713 = vld [vmem:[#allocation2 + $0x188] sm:$0xff]
    %v3714 = vld [vmem:[#allocation2 + $0x190] sm:$0xff]
    %v3715 = vld [vmem:[#allocation2 + $0x198] sm:$0xff]
    %v3716 = vld [vmem:[#allocation2 + $0x1a0] sm:$0xff]
    %v3717 = vld [vmem:[#allocation2 + $0x1a8] sm:$0xff]
    %v3718 = vld [vmem:[#allocation2 + $0x1b0] sm:$0xff]
    %v3719 = vld [vmem:[#allocation2 + $0x1b8] sm:$0xff]
    %v3720 = vld [vmem:[#allocation2 + $0x1c0] sm:$0xff]
    %v3721 = vld [vmem:[#allocation2 + $0x1c8] sm:$0xff]
    %v3722 = vld [vmem:[#allocation2 + $0x1d0] sm:$0xff]
    %v3723 = vld [vmem:[#allocation2 + $0x1d8] sm:$0xff]
    %v3724 = vld [vmem:[#allocation2 + $0x1e0] sm:$0xff]
    %v3725 = vld [vmem:[#allocation2 + $0x1e8] sm:$0xff]
    %v3726 = vld [vmem:[#allocation2 + $0x1f0] sm:$0xff]
    %v3727 = vld [vmem:[#allocation2 + $0x1f8] sm:$0xff]
    %v3728 = vld [vmem:[#allocation2 + $0x200] sm:$0xff]
    %v3729 = vld [vmem:[#allocation2 + $0x208] sm:$0xff]
    %v3730 = vld [vmem:[#allocation2 + $0x210] sm:$0xff]
    %v3731 = vld [vmem:[#allocation2 + $0x218] sm:$0xff]
    %v3732 = vld [vmem:[#allocation2 + $0x220] sm:$0xff]
    %v3733 = vld [vmem:[#allocation2 + $0x228] sm:$0xff]
    %v3734 = vld [vmem:[#allocation2 + $0x230] sm:$0xff]
    %v3735 = vld [vmem:[#allocation2 + $0x238] sm:$0xff]
    %v3736 = vld [vmem:[#allocation2 + $0x240] sm:$0xff]
    %v3737 = vld [vmem:[#allocation2 + $0x248] sm:$0xff]
    %v3738 = vld [vmem:[#allocation2 + $0x250] sm:$0xff]
    %v3739 = vld [vmem:[#allocation2 + $0x258] sm:$0xff]
    %v3740 = vld [vmem:[#allocation2 + $0x260] sm:$0xff]
    %v3741 = vld [vmem:[#allocation2 + $0x268] sm:$0xff]
    %v3742 = vld [vmem:[#allocation2 + $0x270] sm:$0xff]
    %v3743 = vld [vmem:[#allocation2 + $0x278] sm:$0xff]
    %v3744 = vld [vmem:[#allocation2 + $0x280] sm:$0xff]
    %v3745 = vld [vmem:[#allocation2 + $0x288] sm:$0xff]
    %v3746 = vld [vmem:[#allocation2 + $0x290] sm:$0xff]
    %v3747 = vld [vmem:[#allocation2 + $0x298] sm:$0xff]
    %v3748 = vld [vmem:[#allocation2 + $0x2a0] sm:$0xff]
    %v3749 = vld [vmem:[#allocation2 + $0x2a8] sm:$0xff]
    %v3750 = vld [vmem:[#allocation2 + $0x2b0] sm:$0xff]
    %v3751 = vld [vmem:[#allocation2 + $0x2b8] sm:$0xff]
    %v3752 = vld [vmem:[#allocation2 + $0x2c0] sm:$0xff]
    %v3753 = vld [vmem:[#allocation2 + $0x2c8] sm:$0xff]
    %v3754 = vld [vmem:[#allocation2 + $0x2d0] sm:$0xff]
    %v3755 = vld [vmem:[#allocation2 + $0x2d8] sm:$0xff]
    %v3756 = vld [vmem:[#allocation2 + $0x2e0] sm:$0xff]
    %v3757 = vld [vmem:[#allocation2 + $0x2e8] sm:$0xff]
    %v3758 = vld [vmem:[#allocation2 + $0x2f0] sm:$0xff]
    %v3759 = vld [vmem:[#allocation2 + $0x2f8] sm:$0xff]
    %v3760 = vld [vmem:[#allocation2 + $0x300] sm:$0xff]
    %v3761 = vld [vmem:[#allocation2 + $0x308] sm:$0xff]
    %v3762 = vld [vmem:[#allocation2 + $0x310] sm:$0xff]
    %v3763 = vld [vmem:[#allocation2 + $0x318] sm:$0xff]
    %v3764 = vld [vmem:[#allocation2 + $0x320] sm:$0xff]
    %v3765 = vld [vmem:[#allocation2 + $0x328] sm:$0xff]
    %v3766 = vld [vmem:[#allocation2 + $0x330] sm:$0xff]
    %v3767 = vld [vmem:[#allocation2 + $0x338] sm:$0xff]
    %v3768 = vld [vmem:[#allocation2 + $0x340] sm:$0xff]
    %v3769 = vld [vmem:[#allocation2 + $0x348] sm:$0xff]
    %v3770 = vld [vmem:[#allocation2 + $0x350] sm:$0xff]
    %v3771 = vld [vmem:[#allocation2 + $0x358] sm:$0xff]
    %v3772 = vld [vmem:[#allocation2 + $0x360] sm:$0xff]
    %v3773 = vld [vmem:[#allocation2 + $0x368] sm:$0xff]
    %v3774 = vld [vmem:[#allocation2 + $0x370] sm:$0xff]
    %v3775 = vld [vmem:[#allocation2 + $0x378] sm:$0xff]
    %v3776 = vld [vmem:[#allocation2 + $0x380] sm:$0xff]
    %v3777 = vld [vmem:[#allocation2 + $0x388] sm:$0xff]
    %v3778 = vld [vmem:[#allocation2 + $0x390] sm:$0xff]
    %v3779 = vld [vmem:[#allocation2 + $0x398] sm:$0xff]
    %v3780 = vld [vmem:[#allocation2 + $0x3a0] sm:$0xff]
    %v3781 = vld [vmem:[#allocation2 + $0x3a8] sm:$0xff]
    %v3782 = vld [vmem:[#allocation2 + $0x3b0] sm:$0xff]
    %v3783 = vld [vmem:[#allocation2 + $0x3b8] sm:$0xff]
    %v3784 = vld [vmem:[#allocation2 + $0x3c0] sm:$0xff]
    %v3785 = vld [vmem:[#allocation2 + $0x3c8] sm:$0xff]
    %v3786 = vld [vmem:[#allocation2 + $0x3d0] sm:$0xff]
    %v3787 = vld [vmem:[#allocation2 + $0x3d8] sm:$0xff]
    %v3788 = vld [vmem:[#allocation2 + $0x3e0] sm:$0xff]
    %v3789 = vld [vmem:[#allocation2 + $0x3e8] sm:$0xff]
    %v3790 = vld [vmem:[#allocation2 + $0x3f0] sm:$0xff]
    %v3791 = vld [vmem:[#allocation2 + $0x3f8] sm:$0xff]
    %v3792 = vld [vmem:[#allocation3] sm:$0xff]
    %v3793 = vld [vmem:[#allocation3 + $0x8] sm:$0xff]
    %v3794 = vld [vmem:[#allocation3 + $0x10] sm:$0xff]
    %v3795 = vld [vmem:[#allocation3 + $0x18] sm:$0xff]
    %v3796 = vld [vmem:[#allocation3 + $0x20] sm:$0xff]
    %v3797 = vld [vmem:[#allocation3 + $0x28] sm:$0xff]
    %v3798 = vld [vmem:[#allocation3 + $0x30] sm:$0xff]
    %v3799 = vld [vmem:[#allocation3 + $0x38] sm:$0xff]
    %v3800 = vld [vmem:[#allocation3 + $0x40] sm:$0xff]
    %v3801 = vld [vmem:[#allocation3 + $0x48] sm:$0xff]
    %v3802 = vld [vmem:[#allocation3 + $0x50] sm:$0xff]
    %v3803 = vld [vmem:[#allocation3 + $0x58] sm:$0xff]
    %v3804 = vld [vmem:[#allocation3 + $0x60] sm:$0xff]
    %v3805 = vld [vmem:[#allocation3 + $0x68] sm:$0xff]
    %v3806 = vld [vmem:[#allocation3 + $0x70] sm:$0xff]
    %v3807 = vld [vmem:[#allocation3 + $0x78] sm:$0xff]
    %v3808 = vld [vmem:[#allocation3 + $0x80] sm:$0xff]
    %v3809 = vld [vmem:[#allocation3 + $0x88] sm:$0xff]
    %v3810 = vld [vmem:[#allocation3 + $0x90] sm:$0xff]
    %v3811 = vld [vmem:[#allocation3 + $0x98] sm:$0xff]
    %v3812 = vld [vmem:[#allocation3 + $0xa0] sm:$0xff]
    %v3813 = vld [vmem:[#allocation3 + $0xa8] sm:$0xff]
    %v3814 = vld [vmem:[#allocation3 + $0xb0] sm:$0xff]
    %v3815 = vld [vmem:[#allocation3 + $0xb8] sm:$0xff]
    %v3816 = vld [vmem:[#allocation3 + $0xc0] sm:$0xff]
    %v3817 = vld [vmem:[#allocation3 + $0xc8] sm:$0xff]
    %v3818 = vld [vmem:[#allocation3 + $0xd0] sm:$0xff]
    %v3819 = vld [vmem:[#allocation3 + $0xd8] sm:$0xff]
    %v3820 = vld [vmem:[#allocation3 + $0xe0] sm:$0xff]
    %v3821 = vld [vmem:[#allocation3 + $0xe8] sm:$0xff]
    %v3822 = vld [vmem:[#allocation3 + $0xf0] sm:$0xff]
    %v3823 = vld [vmem:[#allocation3 + $0xf8] sm:$0xff]
    %v3824 = vld [vmem:[#allocation3 + $0x100] sm:$0xff]
    %v3825 = vld [vmem:[#allocation3 + $0x108] sm:$0xff]
    %v3826 = vld [vmem:[#allocation3 + $0x110] sm:$0xff]
    %v3827 = vld [vmem:[#allocation3 + $0x118] sm:$0xff]
    %v3828 = vld [vmem:[#allocation3 + $0x120] sm:$0xff]
    %v3829 = vld [vmem:[#allocation3 + $0x128] sm:$0xff]
    %v3830 = vld [vmem:[#allocation3 + $0x130] sm:$0xff]
    %v3831 = vld [vmem:[#allocation3 + $0x138] sm:$0xff]
    %v3832 = vld [vmem:[#allocation3 + $0x140] sm:$0xff]
    %v3833 = vld [vmem:[#allocation3 + $0x148] sm:$0xff]
    %v3834 = vld [vmem:[#allocation3 + $0x150] sm:$0xff]
    %v3835 = vld [vmem:[#allocation3 + $0x158] sm:$0xff]
    %v3836 = vld [vmem:[#allocation3 + $0x160] sm:$0xff]
    %v3837 = vld [vmem:[#allocation3 + $0x168] sm:$0xff]
    %v3838 = vld [vmem:[#allocation3 + $0x170] sm:$0xff]
    %v3839 = vld [vmem:[#allocation3 + $0x178] sm:$0xff]
    %v3840 = vld [vmem:[#allocation3 + $0x180] sm:$0xff]
    %v3841 = vld [vmem:[#allocation3 + $0x188] sm:$0xff]
    %v3842 = vld [vmem:[#allocation3 + $0x190] sm:$0xff]
    %v3843 = vld [vmem:[#allocation3 + $0x198] sm:$0xff]
    %v3844 = vld [vmem:[#allocation3 + $0x1a0] sm:$0xff]
    %v3845 = vld [vmem:[#allocation3 + $0x1a8] sm:$0xff]
    %v3846 = vld [vmem:[#allocation3 + $0x1b0] sm:$0xff]
    %v3847 = vld [vmem:[#allocation3 + $0x1b8] sm:$0xff]
    %v3848 = vld [vmem:[#allocation3 + $0x1c0] sm:$0xff]
    %v3849 = vld [vmem:[#allocation3 + $0x1c8] sm:$0xff]
    %v3850 = vld [vmem:[#allocation3 + $0x1d0] sm:$0xff]
    %v3851 = vld [vmem:[#allocation3 + $0x1d8] sm:$0xff]
    %v3852 = vld [vmem:[#allocation3 + $0x1e0] sm:$0xff]
    %v3853 = vld [vmem:[#allocation3 + $0x1e8] sm:$0xff]
    %v3854 = vld [vmem:[#allocation3 + $0x1f0] sm:$0xff]
    %v3855 = vld [vmem:[#allocation3 + $0x1f8] sm:$0xff]
    %v3856 = vld [vmem:[#allocation3 + $0x200] sm:$0xff]
    %v3857 = vld [vmem:[#allocation3 + $0x208] sm:$0xff]
    %v3858 = vld [vmem:[#allocation3 + $0x210] sm:$0xff]
    %v3859 = vld [vmem:[#allocation3 + $0x218] sm:$0xff]
    %v3860 = vld [vmem:[#allocation3 + $0x220] sm:$0xff]
    %v3861 = vld [vmem:[#allocation3 + $0x228] sm:$0xff]
    %v3862 = vld [vmem:[#allocation3 + $0x230] sm:$0xff]
    %v3863 = vld [vmem:[#allocation3 + $0x238] sm:$0xff]
    %v3864 = vld [vmem:[#allocation3 + $0x240] sm:$0xff]
    %v3865 = vld [vmem:[#allocation3 + $0x248] sm:$0xff]
    %v3866 = vld [vmem:[#allocation3 + $0x250] sm:$0xff]
    %v3867 = vld [vmem:[#allocation3 + $0x258] sm:$0xff]
    %v3868 = vld [vmem:[#allocation3 + $0x260] sm:$0xff]
    %v3869 = vld [vmem:[#allocation3 + $0x268] sm:$0xff]
    %v3870 = vld [vmem:[#allocation3 + $0x270] sm:$0xff]
    %v3871 = vld [vmem:[#allocation3 + $0x278] sm:$0xff]
    %v3872 = vld [vmem:[#allocation3 + $0x280] sm:$0xff]
    %v3873 = vld [vmem:[#allocation3 + $0x288] sm:$0xff]
    %v3874 = vld [vmem:[#allocation3 + $0x290] sm:$0xff]
    %v3875 = vld [vmem:[#allocation3 + $0x298] sm:$0xff]
    %v3876 = vld [vmem:[#allocation3 + $0x2a0] sm:$0xff]
    %v3877 = vld [vmem:[#allocation3 + $0x2a8] sm:$0xff]
    %v3878 = vld [vmem:[#allocation3 + $0x2b0] sm:$0xff]
    %v3879 = vld [vmem:[#allocation3 + $0x2b8] sm:$0xff]
    %v3880 = vld [vmem:[#allocation3 + $0x2c0] sm:$0xff]
    %v3881 = vld [vmem:[#allocation3 + $0x2c8] sm:$0xff]
    %v3882 = vld [vmem:[#allocation3 + $0x2d0] sm:$0xff]
    %v3883 = vld [vmem:[#allocation3 + $0x2d8] sm:$0xff]
    %v3884 = vld [vmem:[#allocation3 + $0x2e0] sm:$0xff]
    %v3885 = vld [vmem:[#allocation3 + $0x2e8] sm:$0xff]
    %v3886 = vld [vmem:[#allocation3 + $0x2f0] sm:$0xff]
    %v3887 = vld [vmem:[#allocation3 + $0x2f8] sm:$0xff]
    %v3888 = vld [vmem:[#allocation3 + $0x300] sm:$0xff]
    %v3889 = vld [vmem:[#allocation3 + $0x308] sm:$0xff]
    %v3890 = vld [vmem:[#allocation3 + $0x310] sm:$0xff]
    %v3891 = vld [vmem:[#allocation3 + $0x318] sm:$0xff]
    %v3892 = vld [vmem:[#allocation3 + $0x320] sm:$0xff]
    %v3893 = vld [vmem:[#allocation3 + $0x328] sm:$0xff]
    %v3894 = vld [vmem:[#allocation3 + $0x330] sm:$0xff]
    %v3895 = vld [vmem:[#allocation3 + $0x338] sm:$0xff]
    %v3896 = vld [vmem:[#allocation3 + $0x340] sm:$0xff]
    %v3897 = vld [vmem:[#allocation3 + $0x348] sm:$0xff]
    %v3898 = vld [vmem:[#allocation3 + $0x350] sm:$0xff]
    %v3899 = vld [vmem:[#allocation3 + $0x358] sm:$0xff]
    %v3900 = vld [vmem:[#allocation3 + $0x360] sm:$0xff]
    %v3901 = vld [vmem:[#allocation3 + $0x368] sm:$0xff]
    %v3902 = vld [vmem:[#allocation3 + $0x370] sm:$0xff]
    %v3903 = vld [vmem:[#allocation3 + $0x378] sm:$0xff]
    %v3904 = vld [vmem:[#allocation3 + $0x380] sm:$0xff]
    %v3905 = vld [vmem:[#allocation3 + $0x388] sm:$0xff]
    %v3906 = vld [vmem:[#allocation3 + $0x390] sm:$0xff]
    %v3907 = vld [vmem:[#allocation3 + $0x398] sm:$0xff]
    %v3908 = vld [vmem:[#allocation3 + $0x3a0] sm:$0xff]
    %v3909 = vld [vmem:[#allocation3 + $0x3a8] sm:$0xff]
    %v3910 = vld [vmem:[#allocation3 + $0x3b0] sm:$0xff]
    %v3911 = vld [vmem:[#allocation3 + $0x3b8] sm:$0xff]
    %v3912 = vld [vmem:[#allocation3 + $0x3c0] sm:$0xff]
    %v3913 = vld [vmem:[#allocation3 + $0x3c8] sm:$0xff]
    %v3914 = vld [vmem:[#allocation3 + $0x3d0] sm:$0xff]
    %v3915 = vld [vmem:[#allocation3 + $0x3d8] sm:$0xff]
    %v3916 = vld [vmem:[#allocation3 + $0x3e0] sm:$0xff]
    %v3917 = vld [vmem:[#allocation3 + $0x3e8] sm:$0xff]
    %v3918 = vld [vmem:[#allocation3 + $0x3f0] sm:$0xff]
    %v3919 = vld [vmem:[#allocation3 + $0x3f8] sm:$0xff]
    %3920 = vxpose.xlu0.b32.start [1/16] %v3664, 128
    %3921 = vxpose.xlu0.b32.cont [2/16] %v3665, 128
    %3922 = vxpose.xlu0.b32.cont [3/16] %v3666, 128
    %3923 = vxpose.xlu0.b32.cont [4/16] %v3667, 128
    %3924 = vxpose.xlu0.b32.cont [5/16] %v3668, 128
    %3925 = vxpose.xlu0.b32.cont [6/16] %v3669, 128
    %3926 = vxpose.xlu0.b32.cont [7/16] %v3670, 128
    %3927 = vxpose.xlu0.b32.cont [8/16] %v3671, 128
    %3928 = vxpose.xlu0.b32.cont [9/16] %v3672, 128
    %3929 = vxpose.xlu0.b32.cont [10/16] %v3673, 128
    %3930 = vxpose.xlu0.b32.cont [11/16] %v3674, 128
    %3931 = vxpose.xlu0.b32.cont [12/16] %v3675, 128
    %3932 = vxpose.xlu0.b32.cont [13/16] %v3676, 128
    %3933 = vxpose.xlu0.b32.cont [14/16] %v3677, 128
    %3934 = vxpose.xlu0.b32.cont [15/16] %v3678, 128
    %3935 = vxpose.xlu0.b32.end [16/16] %v3679, 128
    %v3936 = vpop.trf.xlu0
    %v3937 = vpop.trf.xlu0
    %v3938 = vpop.trf.xlu0
    %v3939 = vpop.trf.xlu0
    %v3940 = vpop.trf.xlu0
    %v3941 = vpop.trf.xlu0
    %v3942 = vpop.trf.xlu0
    %v3943 = vpop.trf.xlu0
    %v3944 = vpop.trf.xlu0
    %v3945 = vpop.trf.xlu0
    %v3946 = vpop.trf.xlu0
    %v3947 = vpop.trf.xlu0
    %v3948 = vpop.trf.xlu0
    %v3949 = vpop.trf.xlu0
    %v3950 = vpop.trf.xlu0
    %v3951 = vpop.trf.xlu0
    %3952 = vxpose.xlu0.b32.start [1/16] %v3680, 128
    %3953 = vxpose.xlu0.b32.cont [2/16] %v3681, 128
    %3954 = vxpose.xlu0.b32.cont [3/16] %v3682, 128
    %3955 = vxpose.xlu0.b32.cont [4/16] %v3683, 128
    %3956 = vxpose.xlu0.b32.cont [5/16] %v3684, 128
    %3957 = vxpose.xlu0.b32.cont [6/16] %v3685, 128
    %3958 = vxpose.xlu0.b32.cont [7/16] %v3686, 128
    %3959 = vxpose.xlu0.b32.cont [8/16] %v3687, 128
    %3960 = vxpose.xlu0.b32.cont [9/16] %v3688, 128
    %3961 = vxpose.xlu0.b32.cont [10/16] %v3689, 128
    %3962 = vxpose.xlu0.b32.cont [11/16] %v3690, 128
    %3963 = vxpose.xlu0.b32.cont [12/16] %v3691, 128
    %3964 = vxpose.xlu0.b32.cont [13/16] %v3692, 128
    %3965 = vxpose.xlu0.b32.cont [14/16] %v3693, 128
    %3966 = vxpose.xlu0.b32.cont [15/16] %v3694, 128
    %3967 = vxpose.xlu0.b32.end [16/16] %v3695, 128
    %v3968 = vpop.trf.xlu0
    %v3969 = vpop.trf.xlu0
    %v3970 = vpop.trf.xlu0
    %v3971 = vpop.trf.xlu0
    %v3972 = vpop.trf.xlu0
    %v3973 = vpop.trf.xlu0
    %v3974 = vpop.trf.xlu0
    %v3975 = vpop.trf.xlu0
    %v3976 = vpop.trf.xlu0
    %v3977 = vpop.trf.xlu0
    %v3978 = vpop.trf.xlu0
    %v3979 = vpop.trf.xlu0
    %v3980 = vpop.trf.xlu0
    %v3981 = vpop.trf.xlu0
    %v3982 = vpop.trf.xlu0
    %v3983 = vpop.trf.xlu0
    %3984 = vxpose.xlu0.b32.start [1/16] %v3696, 128
    %3985 = vxpose.xlu0.b32.cont [2/16] %v3697, 128
    %3986 = vxpose.xlu0.b32.cont [3/16] %v3698, 128
    %3987 = vxpose.xlu0.b32.cont [4/16] %v3699, 128
    %3988 = vxpose.xlu0.b32.cont [5/16] %v3700, 128
    %3989 = vxpose.xlu0.b32.cont [6/16] %v3701, 128
    %3990 = vxpose.xlu0.b32.cont [7/16] %v3702, 128
    %3991 = vxpose.xlu0.b32.cont [8/16] %v3703, 128
    %3992 = vxpose.xlu0.b32.cont [9/16] %v3704, 128
    %3993 = vxpose.xlu0.b32.cont [10/16] %v3705, 128
    %3994 = vxpose.xlu0.b32.cont [11/16] %v3706, 128
    %3995 = vxpose.xlu0.b32.cont [12/16] %v3707, 128
    %3996 = vxpose.xlu0.b32.cont [13/16] %v3708, 128
    %3997 = vxpose.xlu0.b32.cont [14/16] %v3709, 128
    %3998 = vxpose.xlu0.b32.cont [15/16] %v3710, 128
    %3999 = vxpose.xlu0.b32.end [16/16] %v3711, 128
    %v4000 = vpop.trf.xlu0
    %v4001 = vpop.trf.xlu0
    %v4002 = vpop.trf.xlu0
    %v4003 = vpop.trf.xlu0
    %v4004 = vpop.trf.xlu0
    %v4005 = vpop.trf.xlu0
    %v4006 = vpop.trf.xlu0
    %v4007 = vpop.trf.xlu0
    %v4008 = vpop.trf.xlu0
    %v4009 = vpop.trf.xlu0
    %v4010 = vpop.trf.xlu0
    %v4011 = vpop.trf.xlu0
    %v4012 = vpop.trf.xlu0
    %v4013 = vpop.trf.xlu0
    %v4014 = vpop.trf.xlu0
    %v4015 = vpop.trf.xlu0
    %4016 = vxpose.xlu0.b32.start [1/16] %v3712, 128
    %4017 = vxpose.xlu0.b32.cont [2/16] %v3713, 128
    %4018 = vxpose.xlu0.b32.cont [3/16] %v3714, 128
    %4019 = vxpose.xlu0.b32.cont [4/16] %v3715, 128
    %4020 = vxpose.xlu0.b32.cont [5/16] %v3716, 128
    %4021 = vxpose.xlu0.b32.cont [6/16] %v3717, 128
    %4022 = vxpose.xlu0.b32.cont [7/16] %v3718, 128
    %4023 = vxpose.xlu0.b32.cont [8/16] %v3719, 128
    %4024 = vxpose.xlu0.b32.cont [9/16] %v3720, 128
    %4025 = vxpose.xlu0.b32.cont [10/16] %v3721, 128
    %4026 = vxpose.xlu0.b32.cont [11/16] %v3722, 128
    %4027 = vxpose.xlu0.b32.cont [12/16] %v3723, 128
    %4028 = vxpose.xlu0.b32.cont [13/16] %v3724, 128
    %4029 = vxpose.xlu0.b32.cont [14/16] %v3725, 128
    %4030 = vxpose.xlu0.b32.cont [15/16] %v3726, 128
    %4031 = vxpose.xlu0.b32.end [16/16] %v3727, 128
    %v4032 = vpop.trf.xlu0
    %v4033 = vpop.trf.xlu0
    %v4034 = vpop.trf.xlu0
    %v4035 = vpop.trf.xlu0
    %v4036 = vpop.trf.xlu0
    %v4037 = vpop.trf.xlu0
    %v4038 = vpop.trf.xlu0
    %v4039 = vpop.trf.xlu0
    %v4040 = vpop.trf.xlu0
    %v4041 = vpop.trf.xlu0
    %v4042 = vpop.trf.xlu0
    %v4043 = vpop.trf.xlu0
    %v4044 = vpop.trf.xlu0
    %v4045 = vpop.trf.xlu0
    %v4046 = vpop.trf.xlu0
    %v4047 = vpop.trf.xlu0
    %4048 = vxpose.xlu0.b32.start [1/16] %v3728, 128
    %4049 = vxpose.xlu0.b32.cont [2/16] %v3729, 128
    %4050 = vxpose.xlu0.b32.cont [3/16] %v3730, 128
    %4051 = vxpose.xlu0.b32.cont [4/16] %v3731, 128
    %4052 = vxpose.xlu0.b32.cont [5/16] %v3732, 128
    %4053 = vxpose.xlu0.b32.cont [6/16] %v3733, 128
    %4054 = vxpose.xlu0.b32.cont [7/16] %v3734, 128
    %4055 = vxpose.xlu0.b32.cont [8/16] %v3735, 128
    %4056 = vxpose.xlu0.b32.cont [9/16] %v3736, 128
    %4057 = vxpose.xlu0.b32.cont [10/16] %v3737, 128
    %4058 = vxpose.xlu0.b32.cont [11/16] %v3738, 128
    %4059 = vxpose.xlu0.b32.cont [12/16] %v3739, 128
    %4060 = vxpose.xlu0.b32.cont [13/16] %v3740, 128
    %4061 = vxpose.xlu0.b32.cont [14/16] %v3741, 128
    %4062 = vxpose.xlu0.b32.cont [15/16] %v3742, 128
    %4063 = vxpose.xlu0.b32.end [16/16] %v3743, 128
    %v4064 = vpop.trf.xlu0
    %v4065 = vpop.trf.xlu0
    %v4066 = vpop.trf.xlu0
    %v4067 = vpop.trf.xlu0
    %v4068 = vpop.trf.xlu0
    %v4069 = vpop.trf.xlu0
    %v4070 = vpop.trf.xlu0
    %v4071 = vpop.trf.xlu0
    %v4072 = vpop.trf.xlu0
    %v4073 = vpop.trf.xlu0
    %v4074 = vpop.trf.xlu0
    %v4075 = vpop.trf.xlu0
    %v4076 = vpop.trf.xlu0
    %v4077 = vpop.trf.xlu0
    %v4078 = vpop.trf.xlu0
    %v4079 = vpop.trf.xlu0
    %4080 = vxpose.xlu0.b32.start [1/16] %v3744, 128
    %4081 = vxpose.xlu0.b32.cont [2/16] %v3745, 128
    %4082 = vxpose.xlu0.b32.cont [3/16] %v3746, 128
    %4083 = vxpose.xlu0.b32.cont [4/16] %v3747, 128
    %4084 = vxpose.xlu0.b32.cont [5/16] %v3748, 128
    %4085 = vxpose.xlu0.b32.cont [6/16] %v3749, 128
    %4086 = vxpose.xlu0.b32.cont [7/16] %v3750, 128
    %4087 = vxpose.xlu0.b32.cont [8/16] %v3751, 128
    %4088 = vxpose.xlu0.b32.cont [9/16] %v3752, 128
    %4089 = vxpose.xlu0.b32.cont [10/16] %v3753, 128
    %4090 = vxpose.xlu0.b32.cont [11/16] %v3754, 128
    %4091 = vxpose.xlu0.b32.cont [12/16] %v3755, 128
    %4092 = vxpose.xlu0.b32.cont [13/16] %v3756, 128
    %4093 = vxpose.xlu0.b32.cont [14/16] %v3757, 128
    %4094 = vxpose.xlu0.b32.cont [15/16] %v3758, 128
    %4095 = vxpose.xlu0.b32.end [16/16] %v3759, 128
    %v4096 = vpop.trf.xlu0
    %v4097 = vpop.trf.xlu0
    %v4098 = vpop.trf.xlu0
    %v4099 = vpop.trf.xlu0
    %v4100 = vpop.trf.xlu0
    %v4101 = vpop.trf.xlu0
    %v4102 = vpop.trf.xlu0
    %v4103 = vpop.trf.xlu0
    %v4104 = vpop.trf.xlu0
    %v4105 = vpop.trf.xlu0
    %v4106 = vpop.trf.xlu0
    %v4107 = vpop.trf.xlu0
    %v4108 = vpop.trf.xlu0
    %v4109 = vpop.trf.xlu0
    %v4110 = vpop.trf.xlu0
    %v4111 = vpop.trf.xlu0
    %4112 = vxpose.xlu0.b32.start [1/16] %v3760, 128
    %4113 = vxpose.xlu0.b32.cont [2/16] %v3761, 128
    %4114 = vxpose.xlu0.b32.cont [3/16] %v3762, 128
    %4115 = vxpose.xlu0.b32.cont [4/16] %v3763, 128
    %4116 = vxpose.xlu0.b32.cont [5/16] %v3764, 128
    %4117 = vxpose.xlu0.b32.cont [6/16] %v3765, 128
    %4118 = vxpose.xlu0.b32.cont [7/16] %v3766, 128
    %4119 = vxpose.xlu0.b32.cont [8/16] %v3767, 128
    %4120 = vxpose.xlu0.b32.cont [9/16] %v3768, 128
    %4121 = vxpose.xlu0.b32.cont [10/16] %v3769, 128
    %4122 = vxpose.xlu0.b32.cont [11/16] %v3770, 128
    %4123 = vxpose.xlu0.b32.cont [12/16] %v3771, 128
    %4124 = vxpose.xlu0.b32.cont [13/16] %v3772, 128
    %4125 = vxpose.xlu0.b32.cont [14/16] %v3773, 128
    %4126 = vxpose.xlu0.b32.cont [15/16] %v3774, 128
    %4127 = vxpose.xlu0.b32.end [16/16] %v3775, 128
    %v4128 = vpop.trf.xlu0
    %v4129 = vpop.trf.xlu0
    %v4130 = vpop.trf.xlu0
    %v4131 = vpop.trf.xlu0
    %v4132 = vpop.trf.xlu0
    %v4133 = vpop.trf.xlu0
    %v4134 = vpop.trf.xlu0
    %v4135 = vpop.trf.xlu0
    %v4136 = vpop.trf.xlu0
    %v4137 = vpop.trf.xlu0
    %v4138 = vpop.trf.xlu0
    %v4139 = vpop.trf.xlu0
    %v4140 = vpop.trf.xlu0
    %v4141 = vpop.trf.xlu0
    %v4142 = vpop.trf.xlu0
    %v4143 = vpop.trf.xlu0
    %4144 = vxpose.xlu0.b32.start [1/16] %v3776, 128
    %4145 = vxpose.xlu0.b32.cont [2/16] %v3777, 128
    %4146 = vxpose.xlu0.b32.cont [3/16] %v3778, 128
    %4147 = vxpose.xlu0.b32.cont [4/16] %v3779, 128
    %4148 = vxpose.xlu0.b32.cont [5/16] %v3780, 128
    %4149 = vxpose.xlu0.b32.cont [6/16] %v3781, 128
    %4150 = vxpose.xlu0.b32.cont [7/16] %v3782, 128
    %4151 = vxpose.xlu0.b32.cont [8/16] %v3783, 128
    %4152 = vxpose.xlu0.b32.cont [9/16] %v3784, 128
    %4153 = vxpose.xlu0.b32.cont [10/16] %v3785, 128
    %4154 = vxpose.xlu0.b32.cont [11/16] %v3786, 128
    %4155 = vxpose.xlu0.b32.cont [12/16] %v3787, 128
    %4156 = vxpose.xlu0.b32.cont [13/16] %v3788, 128
    %4157 = vxpose.xlu0.b32.cont [14/16] %v3789, 128
    %4158 = vxpose.xlu0.b32.cont [15/16] %v3790, 128
    %4159 = vxpose.xlu0.b32.end [16/16] %v3791, 128
    %v4160 = vpop.trf.xlu0
    %v4161 = vpop.trf.xlu0
    %v4162 = vpop.trf.xlu0
    %v4163 = vpop.trf.xlu0
    %v4164 = vpop.trf.xlu0
    %v4165 = vpop.trf.xlu0
    %v4166 = vpop.trf.xlu0
    %v4167 = vpop.trf.xlu0
    %v4168 = vpop.trf.xlu0
    %v4169 = vpop.trf.xlu0
    %v4170 = vpop.trf.xlu0
    %v4171 = vpop.trf.xlu0
    %v4172 = vpop.trf.xlu0
    %v4173 = vpop.trf.xlu0
    %v4174 = vpop.trf.xlu0
    %v4175 = vpop.trf.xlu0
    %4176 = vxpose.xlu0.b32.start [1/16] %v3792, 128
    %4177 = vxpose.xlu0.b32.cont [2/16] %v3793, 128
    %4178 = vxpose.xlu0.b32.cont [3/16] %v3794, 128
    %4179 = vxpose.xlu0.b32.cont [4/16] %v3795, 128
    %4180 = vxpose.xlu0.b32.cont [5/16] %v3796, 128
    %4181 = vxpose.xlu0.b32.cont [6/16] %v3797, 128
    %4182 = vxpose.xlu0.b32.cont [7/16] %v3798, 128
    %4183 = vxpose.xlu0.b32.cont [8/16] %v3799, 128
    %4184 = vxpose.xlu0.b32.cont [9/16] %v3800, 128
    %4185 = vxpose.xlu0.b32.cont [10/16] %v3801, 128
    %4186 = vxpose.xlu0.b32.cont [11/16] %v3802, 128
    %4187 = vxpose.xlu0.b32.cont [12/16] %v3803, 128
    %4188 = vxpose.xlu0.b32.cont [13/16] %v3804, 128
    %4189 = vxpose.xlu0.b32.cont [14/16] %v3805, 128
    %4190 = vxpose.xlu0.b32.cont [15/16] %v3806, 128
    %4191 = vxpose.xlu0.b32.end [16/16] %v3807, 128
    %v4192 = vpop.trf.xlu0
    %v4193 = vpop.trf.xlu0
    %v4194 = vpop.trf.xlu0
    %v4195 = vpop.trf.xlu0
    %v4196 = vpop.trf.xlu0
    %v4197 = vpop.trf.xlu0
    %v4198 = vpop.trf.xlu0
    %v4199 = vpop.trf.xlu0
    %v4200 = vpop.trf.xlu0
    %v4201 = vpop.trf.xlu0
    %v4202 = vpop.trf.xlu0
    %v4203 = vpop.trf.xlu0
    %v4204 = vpop.trf.xlu0
    %v4205 = vpop.trf.xlu0
    %v4206 = vpop.trf.xlu0
    %v4207 = vpop.trf.xlu0
    %4208 = vxpose.xlu0.b32.start [1/16] %v3808, 128
    %4209 = vxpose.xlu0.b32.cont [2/16] %v3809, 128
    %4210 = vxpose.xlu0.b32.cont [3/16] %v3810, 128
    %4211 = vxpose.xlu0.b32.cont [4/16] %v3811, 128
    %4212 = vxpose.xlu0.b32.cont [5/16] %v3812, 128
    %4213 = vxpose.xlu0.b32.cont [6/16] %v3813, 128
    %4214 = vxpose.xlu0.b32.cont [7/16] %v3814, 128
    %4215 = vxpose.xlu0.b32.cont [8/16] %v3815, 128
    %4216 = vxpose.xlu0.b32.cont [9/16] %v3816, 128
    %4217 = vxpose.xlu0.b32.cont [10/16] %v3817, 128
    %4218 = vxpose.xlu0.b32.cont [11/16] %v3818, 128
    %4219 = vxpose.xlu0.b32.cont [12/16] %v3819, 128
    %4220 = vxpose.xlu0.b32.cont [13/16] %v3820, 128
    %4221 = vxpose.xlu0.b32.cont [14/16] %v3821, 128
    %4222 = vxpose.xlu0.b32.cont [15/16] %v3822, 128
    %4223 = vxpose.xlu0.b32.end [16/16] %v3823, 128
    %v4224 = vpop.trf.xlu0
    %v4225 = vpop.trf.xlu0
    %v4226 = vpop.trf.xlu0
    %v4227 = vpop.trf.xlu0
    %v4228 = vpop.trf.xlu0
    %v4229 = vpop.trf.xlu0
    %v4230 = vpop.trf.xlu0
    %v4231 = vpop.trf.xlu0
    %v4232 = vpop.trf.xlu0
    %v4233 = vpop.trf.xlu0
    %v4234 = vpop.trf.xlu0
    %v4235 = vpop.trf.xlu0
    %v4236 = vpop.trf.xlu0
    %v4237 = vpop.trf.xlu0
    %v4238 = vpop.trf.xlu0
    %v4239 = vpop.trf.xlu0
    %4240 = vxpose.xlu0.b32.start [1/16] %v3824, 128
    %4241 = vxpose.xlu0.b32.cont [2/16] %v3825, 128
    %4242 = vxpose.xlu0.b32.cont [3/16] %v3826, 128
    %4243 = vxpose.xlu0.b32.cont [4/16] %v3827, 128
    %4244 = vxpose.xlu0.b32.cont [5/16] %v3828, 128
    %4245 = vxpose.xlu0.b32.cont [6/16] %v3829, 128
    %4246 = vxpose.xlu0.b32.cont [7/16] %v3830, 128
    %4247 = vxpose.xlu0.b32.cont [8/16] %v3831, 128
    %4248 = vxpose.xlu0.b32.cont [9/16] %v3832, 128
    %4249 = vxpose.xlu0.b32.cont [10/16] %v3833, 128
    %4250 = vxpose.xlu0.b32.cont [11/16] %v3834, 128
    %4251 = vxpose.xlu0.b32.cont [12/16] %v3835, 128
    %4252 = vxpose.xlu0.b32.cont [13/16] %v3836, 128
    %4253 = vxpose.xlu0.b32.cont [14/16] %v3837, 128
    %4254 = vxpose.xlu0.b32.cont [15/16] %v3838, 128
    %4255 = vxpose.xlu0.b32.end [16/16] %v3839, 128
    %v4256 = vpop.trf.xlu0
    %v4257 = vpop.trf.xlu0
    %v4258 = vpop.trf.xlu0
    %v4259 = vpop.trf.xlu0
    %v4260 = vpop.trf.xlu0
    %v4261 = vpop.trf.xlu0
    %v4262 = vpop.trf.xlu0
    %v4263 = vpop.trf.xlu0
    %v4264 = vpop.trf.xlu0
    %v4265 = vpop.trf.xlu0
    %v4266 = vpop.trf.xlu0
    %v4267 = vpop.trf.xlu0
    %v4268 = vpop.trf.xlu0
    %v4269 = vpop.trf.xlu0
    %v4270 = vpop.trf.xlu0
    %v4271 = vpop.trf.xlu0
    %4272 = vxpose.xlu0.b32.start [1/16] %v3840, 128
    %4273 = vxpose.xlu0.b32.cont [2/16] %v3841, 128
    %4274 = vxpose.xlu0.b32.cont [3/16] %v3842, 128
    %4275 = vxpose.xlu0.b32.cont [4/16] %v3843, 128
    %4276 = vxpose.xlu0.b32.cont [5/16] %v3844, 128
    %4277 = vxpose.xlu0.b32.cont [6/16] %v3845, 128
    %4278 = vxpose.xlu0.b32.cont [7/16] %v3846, 128
    %4279 = vxpose.xlu0.b32.cont [8/16] %v3847, 128
    %4280 = vxpose.xlu0.b32.cont [9/16] %v3848, 128
    %4281 = vxpose.xlu0.b32.cont [10/16] %v3849, 128
    %4282 = vxpose.xlu0.b32.cont [11/16] %v3850, 128
    %4283 = vxpose.xlu0.b32.cont [12/16] %v3851, 128
    %4284 = vxpose.xlu0.b32.cont [13/16] %v3852, 128
    %4285 = vxpose.xlu0.b32.cont [14/16] %v3853, 128
    %4286 = vxpose.xlu0.b32.cont [15/16] %v3854, 128
    %4287 = vxpose.xlu0.b32.end [16/16] %v3855, 128
    %v4288 = vpop.trf.xlu0
    %v4289 = vpop.trf.xlu0
    %v4290 = vpop.trf.xlu0
    %v4291 = vpop.trf.xlu0
    %v4292 = vpop.trf.xlu0
    %v4293 = vpop.trf.xlu0
    %v4294 = vpop.trf.xlu0
    %v4295 = vpop.trf.xlu0
    %v4296 = vpop.trf.xlu0
    %v4297 = vpop.trf.xlu0
    %v4298 = vpop.trf.xlu0
    %v4299 = vpop.trf.xlu0
    %v4300 = vpop.trf.xlu0
    %v4301 = vpop.trf.xlu0
    %v4302 = vpop.trf.xlu0
    %v4303 = vpop.trf.xlu0
    %4304 = vxpose.xlu0.b32.start [1/16] %v3856, 128
    %4305 = vxpose.xlu0.b32.cont [2/16] %v3857, 128
    %4306 = vxpose.xlu0.b32.cont [3/16] %v3858, 128
    %4307 = vxpose.xlu0.b32.cont [4/16] %v3859, 128
    %4308 = vxpose.xlu0.b32.cont [5/16] %v3860, 128
    %4309 = vxpose.xlu0.b32.cont [6/16] %v3861, 128
    %4310 = vxpose.xlu0.b32.cont [7/16] %v3862, 128
    %4311 = vxpose.xlu0.b32.cont [8/16] %v3863, 128
    %4312 = vxpose.xlu0.b32.cont [9/16] %v3864, 128
    %4313 = vxpose.xlu0.b32.cont [10/16] %v3865, 128
    %4314 = vxpose.xlu0.b32.cont [11/16] %v3866, 128
    %4315 = vxpose.xlu0.b32.cont [12/16] %v3867, 128
    %4316 = vxpose.xlu0.b32.cont [13/16] %v3868, 128
    %4317 = vxpose.xlu0.b32.cont [14/16] %v3869, 128
    %4318 = vxpose.xlu0.b32.cont [15/16] %v3870, 128
    %4319 = vxpose.xlu0.b32.end [16/16] %v3871, 128
    %v4320 = vpop.trf.xlu0
    %v4321 = vpop.trf.xlu0
    %v4322 = vpop.trf.xlu0
    %v4323 = vpop.trf.xlu0
    %v4324 = vpop.trf.xlu0
    %v4325 = vpop.trf.xlu0
    %v4326 = vpop.trf.xlu0
    %v4327 = vpop.trf.xlu0
    %v4328 = vpop.trf.xlu0
    %v4329 = vpop.trf.xlu0
    %v4330 = vpop.trf.xlu0
    %v4331 = vpop.trf.xlu0
    %v4332 = vpop.trf.xlu0
    %v4333 = vpop.trf.xlu0
    %v4334 = vpop.trf.xlu0
    %v4335 = vpop.trf.xlu0
    %4336 = vxpose.xlu0.b32.start [1/16] %v3872, 128
    %4337 = vxpose.xlu0.b32.cont [2/16] %v3873, 128
    %4338 = vxpose.xlu0.b32.cont [3/16] %v3874, 128
    %4339 = vxpose.xlu0.b32.cont [4/16] %v3875, 128
    %4340 = vxpose.xlu0.b32.cont [5/16] %v3876, 128
    %4341 = vxpose.xlu0.b32.cont [6/16] %v3877, 128
    %4342 = vxpose.xlu0.b32.cont [7/16] %v3878, 128
    %4343 = vxpose.xlu0.b32.cont [8/16] %v3879, 128
    %4344 = vxpose.xlu0.b32.cont [9/16] %v3880, 128
    %4345 = vxpose.xlu0.b32.cont [10/16] %v3881, 128
    %4346 = vxpose.xlu0.b32.cont [11/16] %v3882, 128
    %4347 = vxpose.xlu0.b32.cont [12/16] %v3883, 128
    %4348 = vxpose.xlu0.b32.cont [13/16] %v3884, 128
    %4349 = vxpose.xlu0.b32.cont [14/16] %v3885, 128
    %4350 = vxpose.xlu0.b32.cont [15/16] %v3886, 128
    %4351 = vxpose.xlu0.b32.end [16/16] %v3887, 128
    %v4352 = vpop.trf.xlu0
    %v4353 = vpop.trf.xlu0
    %v4354 = vpop.trf.xlu0
    %v4355 = vpop.trf.xlu0
    %v4356 = vpop.trf.xlu0
    %v4357 = vpop.trf.xlu0
    %v4358 = vpop.trf.xlu0
    %v4359 = vpop.trf.xlu0
    %v4360 = vpop.trf.xlu0
    %v4361 = vpop.trf.xlu0
    %v4362 = vpop.trf.xlu0
    %v4363 = vpop.trf.xlu0
    %v4364 = vpop.trf.xlu0
    %v4365 = vpop.trf.xlu0
    %v4366 = vpop.trf.xlu0
    %v4367 = vpop.trf.xlu0
    %4368 = vxpose.xlu0.b32.start [1/16] %v3888, 128
    %4369 = vxpose.xlu0.b32.cont [2/16] %v3889, 128
    %4370 = vxpose.xlu0.b32.cont [3/16] %v3890, 128
    %4371 = vxpose.xlu0.b32.cont [4/16] %v3891, 128
    %4372 = vxpose.xlu0.b32.cont [5/16] %v3892, 128
    %4373 = vxpose.xlu0.b32.cont [6/16] %v3893, 128
    %4374 = vxpose.xlu0.b32.cont [7/16] %v3894, 128
    %4375 = vxpose.xlu0.b32.cont [8/16] %v3895, 128
    %4376 = vxpose.xlu0.b32.cont [9/16] %v3896, 128
    %4377 = vxpose.xlu0.b32.cont [10/16] %v3897, 128
    %4378 = vxpose.xlu0.b32.cont [11/16] %v3898, 128
    %4379 = vxpose.xlu0.b32.cont [12/16] %v3899, 128
    %4380 = vxpose.xlu0.b32.cont [13/16] %v3900, 128
    %4381 = vxpose.xlu0.b32.cont [14/16] %v3901, 128
    %4382 = vxpose.xlu0.b32.cont [15/16] %v3902, 128
    %4383 = vxpose.xlu0.b32.end [16/16] %v3903, 128
    %v4384 = vpop.trf.xlu0
    %v4385 = vpop.trf.xlu0
    %v4386 = vpop.trf.xlu0
    %v4387 = vpop.trf.xlu0
    %v4388 = vpop.trf.xlu0
    %v4389 = vpop.trf.xlu0
    %v4390 = vpop.trf.xlu0
    %v4391 = vpop.trf.xlu0
    %v4392 = vpop.trf.xlu0
    %v4393 = vpop.trf.xlu0
    %v4394 = vpop.trf.xlu0
    %v4395 = vpop.trf.xlu0
    %v4396 = vpop.trf.xlu0
    %v4397 = vpop.trf.xlu0
    %v4398 = vpop.trf.xlu0
    %v4399 = vpop.trf.xlu0
    %4400 = vxpose.xlu0.b32.start [1/16] %v3904, 128
    %4401 = vxpose.xlu0.b32.cont [2/16] %v3905, 128
    %4402 = vxpose.xlu0.b32.cont [3/16] %v3906, 128
    %4403 = vxpose.xlu0.b32.cont [4/16] %v3907, 128
    %4404 = vxpose.xlu0.b32.cont [5/16] %v3908, 128
    %4405 = vxpose.xlu0.b32.cont [6/16] %v3909, 128
    %4406 = vxpose.xlu0.b32.cont [7/16] %v3910, 128
    %4407 = vxpose.xlu0.b32.cont [8/16] %v3911, 128
    %4408 = vxpose.xlu0.b32.cont [9/16] %v3912, 128
    %4409 = vxpose.xlu0.b32.cont [10/16] %v3913, 128
    %4410 = vxpose.xlu0.b32.cont [11/16] %v3914, 128
    %4411 = vxpose.xlu0.b32.cont [12/16] %v3915, 128
    %4412 = vxpose.xlu0.b32.cont [13/16] %v3916, 128
    %4413 = vxpose.xlu0.b32.cont [14/16] %v3917, 128
    %4414 = vxpose.xlu0.b32.cont [15/16] %v3918, 128
    %4415 = vxpose.xlu0.b32.end [16/16] %v3919, 128
    %v4416 = vpop.trf.xlu0
    %v4417 = vpop.trf.xlu0
    %v4418 = vpop.trf.xlu0
    %v4419 = vpop.trf.xlu0
    %v4420 = vpop.trf.xlu0
    %v4421 = vpop.trf.xlu0
    %v4422 = vpop.trf.xlu0
    %v4423 = vpop.trf.xlu0
    %v4424 = vpop.trf.xlu0
    %v4425 = vpop.trf.xlu0
    %v4426 = vpop.trf.xlu0
    %v4427 = vpop.trf.xlu0
    %v4428 = vpop.trf.xlu0
    %v4429 = vpop.trf.xlu0
    %v4430 = vpop.trf.xlu0
    %v4431 = vpop.trf.xlu0
    %v4432 = vlog2.pop %v3936
    %v4433 = vmul.f32 %v4432, 0.6931472
    %v4434 = vlog2.pop %v3968
    %v4435 = vmul.f32 %v4434, 0.6931472
    %v4436 = vlog2.pop %v4000
    %v4437 = vmul.f32 %v4436, 0.6931472
    %v4438 = vlog2.pop %v4032
    %v4439 = vmul.f32 %v4438, 0.6931472
    %v4440 = vlog2.pop %v4064
    %v4441 = vmul.f32 %v4440, 0.6931472
    %v4442 = vlog2.pop %v4096
    %v4443 = vmul.f32 %v4442, 0.6931472
    %v4444 = vlog2.pop %v4128
    %v4445 = vmul.f32 %v4444, 0.6931472
    %v4446 = vlog2.pop %v4160
    %v4447 = vmul.f32 %v4446, 0.6931472
    %v4448 = vsub.f32 4.158883, %v4433
    %v4449 = vsub.f32 4.158883, %v4435
    %v4450 = vsub.f32 4.158883, %v4437
    %v4451 = vsub.f32 4.158883, %v4439
    %v4452 = vsub.f32 4.158883, %v4441
    %v4453 = vsub.f32 4.158883, %v4443
    %v4454 = vsub.f32 4.158883, %v4445
    %v4455 = vsub.f32 4.158883, %v4447
    %v4456 = vlog2.pop %v4192
    %v4457 = vmul.f32 %v4456, 0.6931472
    %v4458 = vlog2.pop %v4224
    %v4459 = vmul.f32 %v4458, 0.6931472
    %v4460 = vlog2.pop %v4256
    %v4461 = vmul.f32 %v4460, 0.6931472
    %v4462 = vlog2.pop %v4288
    %v4463 = vmul.f32 %v4462, 0.6931472
    %v4464 = vlog2.pop %v4320
    %v4465 = vmul.f32 %v4464, 0.6931472
    %v4466 = vlog2.pop %v4352
    %v4467 = vmul.f32 %v4466, 0.6931472
    %v4468 = vlog2.pop %v4384
    %v4469 = vmul.f32 %v4468, 0.6931472
    %v4470 = vlog2.pop %v4416
    %v4471 = vmul.f32 %v4470, 0.6931472
    %v4472 = vsub.f32 4.158883, %v4457
    %v4473 = vsub.f32 4.158883, %v4459
    %v4474 = vsub.f32 4.158883, %v4461
    %v4475 = vsub.f32 4.158883, %v4463
    %v4476 = vsub.f32 4.158883, %v4465
    %v4477 = vsub.f32 4.158883, %v4467
    %v4478 = vsub.f32 4.158883, %v4469
    %v4479 = vsub.f32 4.158883, %v4471
    %v4480 = vld [vmem:[%s0] sm:$0xff]
    %v4482 = vcombine.high %v4480, %v4480
    %v4484 = vunpack.c.l.s4 1966171168
    %v4485 = vunpack.c.0.s8 %v4484
    %v4486 = vlaneseq
    %v4487 = vshrl.u32 %v4486, 7
    %v4488 = vsub.s32 %v4485, %v4487
    %v4489 = vrot.slane %v4480, %v4488
    %v4491 = vunpack.c.l.s4 1966171168
    %v4492 = vunpack.c.0.s8 %v4491
    %v4493 = vlaneseq
    %v4494 = vshrl.u32 %v4493, 7
    %v4495 = vsub.s32 %v4492, %v4494
    %v4496 = vrot.slane %v4482, %v4495
    %v4497 = vcombine.high %v4489, %v4489
    %v4498 = vcombine.high %v4496, %v4496
    %v4500 = vunpack.c.l.s4 1966171168
    %v4501 = vunpack.c.0.s8 %v4500
    %v4502 = vlaneseq
    %v4503 = vshrl.u32 %v4502, 7
    %v4504 = vsub.s32 %v4501, %v4503
    %v4505 = vrot.slane %v4489, %v4504
    %v4507 = vunpack.c.l.s4 1966171168
    %v4508 = vunpack.c.0.s8 %v4507
    %v4509 = vlaneseq
    %v4510 = vshrl.u32 %v4509, 7
    %v4511 = vsub.s32 %v4508, %v4510
    %v4512 = vrot.slane %v4496, %v4511
    %v4514 = vunpack.c.l.s4 1966171168
    %v4515 = vunpack.c.0.s8 %v4514
    %v4516 = vlaneseq
    %v4517 = vshrl.u32 %v4516, 7
    %v4518 = vsub.s32 %v4515, %v4517
    %v4519 = vrot.slane %v4497, %v4518
    %v4521 = vunpack.c.l.s4 1966171168
    %v4522 = vunpack.c.0.s8 %v4521
    %v4523 = vlaneseq
    %v4524 = vshrl.u32 %v4523, 7
    %v4525 = vsub.s32 %v4522, %v4524
    %v4526 = vrot.slane %v4498, %v4525
    %v4527 = vcombine.high %v4505, %v4505
    %v4528 = vcombine.high %v4512, %v4512
    %v4529 = vcombine.high %v4519, %v4519
    %v4530 = vcombine.high %v4526, %v4526
    %v4539 = vld [vmem:[%s1] sm:$0xff]
    %v4541 = vcombine.high %v4539, %v4539
    %v4543 = vunpack.c.l.s4 1966171168
    %v4544 = vunpack.c.0.s8 %v4543
    %v4545 = vlaneseq
    %v4546 = vshrl.u32 %v4545, 7
    %v4547 = vsub.s32 %v4544, %v4546
    %v4548 = vrot.slane %v4539, %v4547
    %v4550 = vunpack.c.l.s4 1966171168
    %v4551 = vunpack.c.0.s8 %v4550
    %v4552 = vlaneseq
    %v4553 = vshrl.u32 %v4552, 7
    %v4554 = vsub.s32 %v4551, %v4553
    %v4555 = vrot.slane %v4541, %v4554
    %v4556 = vcombine.high %v4548, %v4548
    %v4557 = vcombine.high %v4555, %v4555
    %v4559 = vunpack.c.l.s4 1966171168
    %v4560 = vunpack.c.0.s8 %v4559
    %v4561 = vlaneseq
    %v4562 = vshrl.u32 %v4561, 7
    %v4563 = vsub.s32 %v4560, %v4562
    %v4564 = vrot.slane %v4548, %v4563
    %v4566 = vunpack.c.l.s4 1966171168
    %v4567 = vunpack.c.0.s8 %v4566
    %v4568 = vlaneseq
    %v4569 = vshrl.u32 %v4568, 7
    %v4570 = vsub.s32 %v4567, %v4569
    %v4571 = vrot.slane %v4555, %v4570
    %v4573 = vunpack.c.l.s4 1966171168
    %v4574 = vunpack.c.0.s8 %v4573
    %v4575 = vlaneseq
    %v4576 = vshrl.u32 %v4575, 7
    %v4577 = vsub.s32 %v4574, %v4576
    %v4578 = vrot.slane %v4556, %v4577
    %v4580 = vunpack.c.l.s4 1966171168
    %v4581 = vunpack.c.0.s8 %v4580
    %v4582 = vlaneseq
    %v4583 = vshrl.u32 %v4582, 7
    %v4584 = vsub.s32 %v4581, %v4583
    %v4585 = vrot.slane %v4557, %v4584
    %v4586 = vcombine.high %v4564, %v4564
    %v4587 = vcombine.high %v4571, %v4571
    %v4588 = vcombine.high %v4578, %v4578
    %v4589 = vcombine.high %v4585, %v4585
    %v4598 = vmul.f32 %v4505, %v4448
    %v4599 = vmul.f32 %v4519, %v4449
    %v4600 = vmul.f32 %v4527, %v4450
    %v4601 = vmul.f32 %v4529, %v4451
    %v4602 = vmul.f32 %v4512, %v4452
    %v4603 = vmul.f32 %v4526, %v4453
    %v4604 = vmul.f32 %v4528, %v4454
    %v4605 = vmul.f32 %v4530, %v4455
    %v4606 = vmul.f32 %v4564, %v4472
    %v4607 = vmul.f32 %v4578, %v4473
    %v4608 = vmul.f32 %v4586, %v4474
    %v4609 = vmul.f32 %v4588, %v4475
    %v4610 = vmul.f32 %v4571, %v4476
    %v4611 = vmul.f32 %v4585, %v4477
    %v4612 = vmul.f32 %v4587, %v4478
    %v4613 = vmul.f32 %v4589, %v4479
    %v4614 = vadd.f32 %v4598, %v4606
    %v4615 = vadd.f32 %v4599, %v4607
    %v4616 = vadd.f32 %v4600, %v4608
    %v4617 = vadd.f32 %v4601, %v4609
    %v4618 = vadd.f32 %v4602, %v4610
    %v4619 = vadd.f32 %v4603, %v4611
    %v4620 = vadd.f32 %v4604, %v4612
    %v4621 = vadd.f32 %v4605, %v4613
    %v4622 = vmax.f32 %v4448, %v4472
    %v4623 = vmax.f32 %v4449, %v4473
    %v4624 = vmax.f32 %v4450, %v4474
    %v4625 = vmax.f32 %v4451, %v4475
    %v4626 = vmax.f32 %v4452, %v4476
    %v4627 = vmax.f32 %v4453, %v4477
    %v4628 = vmax.f32 %v4454, %v4478
    %v4629 = vmax.f32 %v4455, %v4479
    %v4630 = vmax.f32 %v4622, %v4614
    %v4631 = vmax.f32 %v4623, %v4615
    %v4632 = vmax.f32 %v4624, %v4616
    %v4633 = vmax.f32 %v4625, %v4617
    %v4634 = vmax.f32 %v4626, %v4618
    %v4635 = vmax.f32 %v4627, %v4619
    %v4636 = vmax.f32 %v4628, %v4620
    %v4637 = vmax.f32 %v4629, %v4621
    %vm4638 = vcmask 1040384
    %v4639 = vsel %vm4638, %v4630, 0.0
    %v4640 = vsel %vm4638, %v4631, 0.0
    %v4641 = vadd.f32 %v4639, %v4640
    %v4642 = vsel %vm4638, %v4632, 0.0
    %v4643 = vadd.f32 %v4641, %v4642
    %v4644 = vsel %vm4638, %v4633, 0.0
    %v4645 = vadd.f32 %v4643, %v4644
    %v4646 = vsel %vm4638, %v4634, 0.0
    %v4647 = vadd.f32 %v4645, %v4646
    %v4648 = vsel %vm4638, %v4635, 0.0
    %v4649 = vadd.f32 %v4647, %v4648
    %v4650 = vsel %vm4638, %v4636, 0.0
    %v4651 = vadd.f32 %v4649, %v4650
    %v4652 = vsel %vm4638, %v4637, 0.0
    %v4653 = vadd.f32 %v4651, %v4652
    %4654 = vst [vmem:[%s4] sm:$0x1] %v4653
  $region25: #{outlier_detector_forward.1} parent=0 // pred_fallthru
    _
  // Predicated region
  $region26: #{outlier_detector_forward.1} parent=0 // pred_check
    _
  $region27: #{outlier_detector_forward.1} parent=0 // pred_check_branch
    %4656 = sbr.rel (0) target = $region29
  $region28: #{outlier_detector_forward.1} parent=0 // pred_region
    _
  $region29: #{outlier_detector_forward.1} parent=0 // pred_fallthru
    _
  // Predicated region
  $region30: #{outlier_detector_forward.1} parent=0 // pred_check
    _
  $region31: #{outlier_detector_forward.1} parent=0 // pred_check_branch
    %4658 = sbr.rel (0) target = $region33
  $region32: #{outlier_detector_forward.1} parent=0 // pred_region
    _
  $region33: #{outlier_detector_forward.1} parent=0 // pred_fallthru
    _

</llo_original>
